<compile_context>
chip_gen: v6e
topology: v6e:2x2x1
jax: 0.10.0
libtpu: 0.0.40
codegen_flags: <defaults>
</compile_context>

<pallas_src>
import functools
import math

import jax
import jax.numpy as jnp
from jax import lax
from jax.experimental import pallas as pl
from jax.experimental.pallas import tpu as pltpu

LN_EPS = 1e-6          # nn.LayerNorm(..., eps=1e-06) in the reference module
NEG_INF = -1e30

PARAM_ORDER = [
    "ln1_g", "ln1_b",
    "wqT", "wkT", "wvT", "bq", "bk", "bv",
    "woT", "bo",
    "ln2_g", "ln2_b",
    "w1T", "b1", "w2T", "b2",
]


def _layer_norm(v, g, b):
    mu = jnp.mean(v, axis=-1, keepdims=True)
    var = jnp.mean((v - mu) ** 2, axis=-1, keepdims=True)
    return (v - mu) * lax.rsqrt(var + LN_EPS) * g + b


# --------------------------- kernel ---------------------------------------

def encoder_layer_kernel(x_ref, mask_ref,
                         ln1g_ref, ln1b_ref,
                         wq_ref, wk_ref, wv_ref, bq_ref, bk_ref, bv_ref,
                         wo_ref, bo_ref,
                         ln2g_ref, ln2b_ref,
                         w1_ref, b1_ref, w2_ref, b2_ref,
                         lng_ref, lnb_ref,
                         xo_ref, aw_ref,
                         y_sc, k_sc, v_sc, *maybe_cat,
                         nhead, head_dim, tq, apply_last_norm, use_concat):
    """One pre-LN encoder layer.  grid = (batch, query_tile)."""
    qi = pl.program_id(1)
    q_start = pl.multiple_of(qi * tq, tq)
    S = x_ref.shape[1]
    H = x_ref.shape[2]

    # ---- LN + K/V for the whole sequence: computed once per batch element ----
    @pl.when(qi == 0)
    def _():
        x_full = x_ref[0].astype(jnp.float32)                       # (S, H)
        y = _layer_norm(x_full, ln1g_ref[...], ln1b_ref[...])
        y_bf = y.astype(jnp.bfloat16)
        y_sc[...] = y_bf
        k_sc[...] = (jnp.dot(y_bf, wk_ref[...],
                             preferred_element_type=jnp.float32)
                     + bk_ref[...]).astype(jnp.bfloat16)
        v_sc[...] = (jnp.dot(y_bf, wv_ref[...],
                             preferred_element_type=jnp.float32)
                     + bv_ref[...]).astype(jnp.bfloat16)

    # ---- query projection for this tile only --------------------------------
    y_q = y_sc[pl.ds(q_start, tq), :]                               # (tq, H) bf16
    q_f32 = jnp.dot(y_q, wq_ref[...],
                    preferred_element_type=jnp.float32) + bq_ref[...]
    scale = 1.0 / math.sqrt(head_dim)
    q_bf = (q_f32 * scale).astype(jnp.bfloat16)                     # scale+cast once

    # mask broadcast hoisted out of the head loop (no CSE of broadcast_in_dim)
    mask_b = jnp.broadcast_to(mask_ref[0], (tq, S))                 # (tq, S) f32
    attn_w = jnp.zeros((tq, S), jnp.float32)

    if use_concat:
        cat_ref = maybe_cat[0]                                      # (tq, H) f32
    else:
        acc = jnp.zeros((tq, H), jnp.float32)

    for h in range(nhead):                                          # static loop
        lo, hi = h * head_dim, (h + 1) * head_dim
        s = lax.dot_general(q_bf[:, lo:hi], k_sc[:, lo:hi],
                            (((1,), (1,)), ((), ())),
                            preferred_element_type=jnp.float32)     # (tq, S)
        s = s + mask_b
        m = jnp.max(s, axis=-1, keepdims=True)
        e = jnp.exp(s - m)
        # exact normalization (rows sum to 1 like torch softmax); the divide is
        # only on a (tq, 1) vector.
        p = e * (1.0 / jnp.sum(e, axis=-1, keepdims=True))
        attn_w = attn_w + p
        ctx = jnp.dot(p.astype(jnp.bfloat16), v_sc[:, lo:hi],
                      preferred_element_type=jnp.float32)           # (tq, hd)
        if use_concat:
            # lane-aligned full-width column writes (head_dim % 128 == 0)
            cat_ref[:, lo:hi] = ctx
        else:
            # avoid masked sub-128-lane stores: fold out-projection per head
            acc = acc + jnp.dot(ctx.astype(jnp.bfloat16), wo_ref[lo:hi, :],
                                preferred_element_type=jnp.float32)

    if use_concat:
        attn_out = jnp.dot(cat_ref[...].astype(jnp.bfloat16), wo_ref[...],
                           preferred_element_type=jnp.float32) + bo_ref[...]
    else:
        attn_out = acc + bo_ref[...]

    # dropout layers are identity (eval / inference mode)
    x_q = x_ref[0, pl.ds(q_start, tq), :].astype(jnp.float32)
    x1 = x_q + attn_out

    # ---- feed-forward block --------------------------------------------------
    y2 = _layer_norm(x1, ln2g_ref[...], ln2b_ref[...])
    h1 = jnp.dot(y2.astype(jnp.bfloat16), w1_ref[...],
                 preferred_element_type=jnp.float32) + b1_ref[...]
    h1 = jnp.maximum(h1, 0.0)
    o2 = jnp.dot(h1.astype(jnp.bfloat16), w2_ref[...],
                 preferred_element_type=jnp.float32) + b2_ref[...]
    x2 = x1 + o2

    if apply_last_norm:                 # final Encoder LayerNorm, fused
        x2 = _layer_norm(x2, lng_ref[...], lnb_ref[...])

    xo_ref[0] = x2.astype(xo_ref.dtype)
    aw_ref[0] = (attn_w * (1.0 / nhead)).astype(aw_ref.dtype)


# --------------------------- wrapper helpers ------------------------------

def _nbytes(a):
    return int(a.size) * a.dtype.itemsize


@functools.lru_cache(maxsize=None)
def _vmem_capacity():
    try:
        return int(pltpu.get_tpu_info().vmem_capacity_bytes)
    except Exception:
        return 64 * 1024 * 1024          # conservative (v7x per-core)


@functools.lru_cache(maxsize=None)
def _single_buffer_supported():
    """Probe whether pipeline_mode=pl.Buffered(1) is accepted on this install."""
    try:
        def _copy(x_ref, o_ref):
            o_ref[...] = x_ref[...]
        spec = pl.BlockSpec((8, 128), lambda i: (0, 0),
                            pipeline_mode=pl.Buffered(1))
        f = pl.pallas_call(
            _copy,
            out_shape=jax.ShapeDtypeStruct((8, 128), jnp.float32),
            grid=(1,),
            in_specs=[spec],
            out_specs=pl.BlockSpec((8, 128), lambda i: (0, 0)),
        )
        jax.block_until_ready(f(jnp.zeros((8, 128), jnp.float32)))
        return True
    except Exception:
        return False


def _param_spec(arr, single_buffer):
    nd = arr.ndim
    idx = lambda *_, _nd=nd: (0,) * _nd          # constant block index
    if single_buffer:
        return pl.BlockSpec(arr.shape, idx, pipeline_mode=pl.Buffered(1))
    return pl.BlockSpec(arr.shape, idx)


def _choose_tq(S, cap):
    """Largest query tile whose per-step (tq,S) score tensors fit comfortably."""
    if S <= 512:
        return S
    candidates = [t for t in (512, 256, 128) if S % t == 0]
    if not candidates:
        return S
    for t in candidates:
        if 10 * t * S * 4 < 0.30 * cap:
            return t
    return candidates[-1]


# --------------------------- per-layer pallas_call -------------------------

def encoder_layer_pallas(x, mask_add, params, last_g, last_b, nhead, *,
                         apply_last_norm, tq=None, aw_dtype=jnp.bfloat16):
    B, S, H = x.shape
    head_dim = H // nhead
    cap = _vmem_capacity()
    aw_bytes = jnp.dtype(aw_dtype).itemsize

    if tq is None:
        tq = _choose_tq(S, cap)
    if tq != S and tq % 8 != 0:
        tq = S
    assert S % tq == 0
    nq = S // tq

    use_concat = (head_dim % 128 == 0)
    single_buffer = _single_buffer_supported()

    kernel = functools.partial(encoder_layer_kernel, nhead=nhead,
                               head_dim=head_dim, tq=tq,
                               apply_last_norm=apply_last_norm,
                               use_concat=use_concat)

    in_specs = [
        pl.BlockSpec((1, S, H), lambda b, q: (b, 0, 0)),   # x (full seq per batch)
        pl.BlockSpec((1, 1, S), lambda b, q: (b, 0, 0)),   # additive key mask
    ] + [_param_spec(params[n], single_buffer) for n in PARAM_ORDER] \
      + [_param_spec(last_g, single_buffer), _param_spec(last_b, single_buffer)]

    out_shape = (jax.ShapeDtypeStruct((B, S, H), jnp.float32),
                 jax.ShapeDtypeStruct((B, S, S), aw_dtype))
    out_specs = (pl.BlockSpec((1, tq, H), lambda b, q: (b, q, 0)),
                 pl.BlockSpec((1, tq, S), lambda b, q: (b, q, 0)))

    scratch_shapes = [pltpu.VMEM((S, H), jnp.bfloat16),    # y = LN(x), cached
                      pltpu.VMEM((S, H), jnp.bfloat16),    # K cache
                      pltpu.VMEM((S, H), jnp.bfloat16)]    # V cache
    if use_concat:
        scratch_shapes.append(pltpu.VMEM((tq, H), jnp.float32))

    # ---- VMEM budget: actual need, clamped to 85% of per-core capacity ------
    filt = params["b1"].shape[-1]
    wbuf = 1 if single_buffer else 2
    weight_b = wbuf * (sum(_nbytes(params[n]) for n in PARAM_ORDER)
                       + _nbytes(last_g) + _nbytes(last_b))
    io_b = 2 * (S * H * 4 + S * 4) + 2 * (tq * H * 4 + tq * S * aw_bytes)
    scratch_b = 3 * S * H * 2 + (tq * H * 4 if use_concat else 0)
    work_b = 8 * tq * S * 4 + 8 * tq * H * 4 + 3 * tq * filt * 4 + 3 * S * H * 4
    need = int(1.25 * (weight_b + io_b + scratch_b + work_b))
    vmem_limit = int(min(int(cap * 0.85), max(need, 32 * 1024 * 1024)))

    return pl.pallas_call(
        kernel,
        out_shape=out_shape,
        grid=(B, nq),
        in_specs=in_specs,
        out_specs=out_specs,
        scratch_shapes=scratch_shapes,
        compiler_params=pltpu.CompilerParams(
            # q axis is "arbitrary": the y/K/V scratch carries across q tiles.
            dimension_semantics=("parallel", "arbitrary"),
            vmem_limit_bytes=vmem_limit),
    )(x, mask_add, *[params[n] for n in PARAM_ORDER], last_g, last_b)


def encoder_forward(inputs, padding_mask, layer_params, last_g, last_b, nhead,
                    *, tq=None, aw_dtype=jnp.bfloat16):
    """inputs: (B, S, H) f32; padding_mask: (B, S) bool (True = padded key)."""
    assert len(layer_params) >= 1
    B, S, _ = inputs.shape
    mask_add = jnp.where(padding_mask, jnp.float32(NEG_INF),
                         jnp.float32(0.0)).reshape(B, 1, S)
    x = inputs.astype(jnp.float32)
    self_attentions = []
    n_layers = len(layer_params)
    for i, p in enumerate(layer_params):
        x, aw = encoder_layer_pallas(x, mask_add, p, last_g, last_b, nhead,
                                     apply_last_norm=(i == n_layers - 1),
                                     tq=tq, aw_dtype=aw_dtype)
        self_attentions.append(aw)
    return x, self_attentions


# --------------------- pure-JAX reference (same precision choices) ---------

def encoder_forward_ref(inputs, padding_mask, layer_params, last_g, last_b, nhead):
    B, S, H = inputs.shape
    head_dim = H // nhead
    scale = 1.0 / math.sqrt(head_dim)
    mask_add = jnp.where(padding_mask, jnp.float32(NEG_INF),
                         jnp.float32(0.0))[:, None, None, :]
    x = inputs.astype(jnp.float32)
    aws = []
    for p in layer_params:
        y = _layer_norm(x, p["ln1_g"], p["ln1_b"])
        ybf = y.astype(jnp.bfloat16)
        q = (jnp.einsum("bsh,hd->bsd", ybf, p["wqT"],
                        preferred_element_type=jnp.float32) + p["bq"]) * scale
        k = jnp.einsum("bsh,hd->bsd", ybf, p["wkT"],
                       preferred_element_type=jnp.float32) + p["bk"]
        v = jnp.einsum("bsh,hd->bsd", ybf, p["wvT"],
                       preferred_element_type=jnp.float32) + p["bv"]
        q4 = q.astype(jnp.bfloat16).reshape(B, S, nhead, head_dim)
        k4 = k.astype(jnp.bfloat16).reshape(B, S, nhead, head_dim)
        v4 = v.astype(jnp.bfloat16).reshape(B, S, nhead, head_dim)
        s = jnp.einsum("bqhd,bkhd->bhqk", q4, k4,
                       preferred_element_type=jnp.float32) + mask_add
        e = jnp.exp(s - jnp.max(s, axis=-1, keepdims=True))
        pr = e / jnp.sum(e, axis=-1, keepdims=True)
        aws.append(jnp.mean(pr, axis=1))
        ctx = jnp.einsum("bhqk,bkhd->bqhd", pr.astype(jnp.bfloat16), v4,
                         preferred_element_type=jnp.float32).reshape(B, S, H)
        attn_out = jnp.einsum("bsh,hd->bsd", ctx.astype(jnp.bfloat16), p["woT"],
                              preferred_element_type=jnp.float32) + p["bo"]
        x = x + attn_out
        y2 = _layer_norm(x, p["ln2_g"], p["ln2_b"])
        h1 = jnp.maximum(
            jnp.einsum("bsh,hf->bsf", y2.astype(jnp.bfloat16), p["w1T"],
                       preferred_element_type=jnp.float32) + p["b1"], 0.0)
        o2 = jnp.einsum("bsf,fh->bsh", h1.astype(jnp.bfloat16), p["w2T"],
                        preferred_element_type=jnp.float32) + p["b2"]
        x = x + o2
    return _layer_norm(x, last_g, last_b), aws


# --------------------- deterministic parameter init -----------------------

def init_layer_params(key, hidden, filt):
    ks = jax.random.split(key, 16)
    bf = jnp.bfloat16

    def xavier(k, shape):
        fan_out, fan_in = shape
        lim = math.sqrt(6.0 / (fan_in + fan_out))
        return jax.random.uniform(k, shape, jnp.float32, -lim, lim)

    def small(k, shape):
        return 0.02 * jax.random.normal(k, shape, jnp.float32)

    wq = xavier(ks[0], (hidden, hidden)); wk = xavier(ks[1], (hidden, hidden))
    wv = xavier(ks[2], (hidden, hidden)); wo = xavier(ks[3], (hidden, hidden))
    w1 = xavier(ks[4], (filt, hidden));   w2 = xavier(ks[5], (hidden, filt))
    return dict(
        ln1_g=1.0 + 0.1 * jax.random.normal(ks[6], (1, hidden), jnp.float32),
        ln1_b=small(ks[7], (1, hidden)),
        wqT=wq.T.astype(bf), wkT=wk.T.astype(bf), wvT=wv.T.astype(bf),
        bq=small(ks[8], (1, hidden)),
        bk=small(ks[9], (1, hidden)),
        bv=small(ks[10], (1, hidden)),
        woT=wo.T.astype(bf),
        bo=small(ks[11], (1, hidden)),
        ln2_g=1.0 + 0.1 * jax.random.normal(ks[12], (1, hidden), jnp.float32),
        ln2_b=small(ks[13], (1, hidden)),
        w1T=w1.T.astype(bf),
        b1=small(ks[14], (1, filt)),
        w2T=w2.T.astype(bf),
        b2=small(ks[15], (1, hidden)),
    )


if __name__ == "__main__":
    B, S, H = 2, 32, 32           # batch, seq, hidden
    FILT, NHEAD, NLAYERS = 64, 4, 2
    TQ = 16                       # 2 query tiles/seq -> exercises the K/V scratch carry

    root = jax.random.PRNGKey(0)
    k_in, k_params, k_lg, k_lb = jax.random.split(root, 4)

    inputs = jax.random.normal(k_in, (B, S, H), jnp.float32)
    # True = padded key position (last 4 positions of the second sequence)
    padding_mask = jnp.zeros((B, S), jnp.bool_).at[1, S - 4:].set(True)

    layer_keys = jax.random.split(k_params, NLAYERS)
    layer_params = [init_layer_params(layer_keys[i], H, FILT)
                    for i in range(NLAYERS)]
    last_g = 1.0 + 0.1 * jax.random.normal(k_lg, (1, H), jnp.float32)
    last_b = 0.02 * jax.random.normal(k_lb, (1, H), jnp.float32)

    out, self_attentions = encoder_forward(inputs, padding_mask, layer_params,
                                           last_g, last_b, NHEAD, tq=TQ)
    out = jax.block_until_ready(out)
    self_attentions = [jax.block_until_ready(a) for a in self_attentions]

    ref_out, ref_aws = encoder_forward_ref(inputs, padding_mask, layer_params,
                                           last_g, last_b, NHEAD)
    ref_out = jax.block_until_ready(ref_out)

    assert out.shape == (B, S, H)
    assert len(self_attentions) == NLAYERS
    assert all(a.shape == (B, S, S) for a in self_attentions)
    assert bool(jnp.all(jnp.isfinite(out)))
    # numerically matches a pure-JAX reference with the same precision policy
    assert float(jnp.max(jnp.abs(out - ref_out))) < 2e-2
    for aw, raw in zip(self_attentions, ref_aws):
        assert float(jnp.max(jnp.abs(aw.astype(jnp.float32) - raw))) < 2e-2
    # exact softmax: attention rows sum to 1 (up to the bf16 output cast)
    row_sums = jnp.sum(self_attentions[0].astype(jnp.float32), axis=-1)
    assert bool(jnp.all(jnp.abs(row_sums - 1.0) < 1e-2))
    print("KERNEL_OK")
</pallas_src>

<mosaic_0001>
module attributes {stable_mosaic.version = 11 : i64} {
  func.func @_copy(%arg0: i32, %arg1: memref<8x128xf32, #tpu.memory_space<vmem>>, %arg2: memref<8x128xf32, #tpu.memory_space<vmem>>) attributes {dimension_semantics = [#tpu.dimension_semantics<arbitrary>], iteration_bounds = array<i64: 1>, scalar_prefetch = 0 : i64, scratch_operands = 0 : i64, tpu.core_type = #tpu.core_type<tc>, window_params = [{pipeline_mode = #tpu.pipeline_mode<synchronous>, transform_indices = @transform_0, window_bounds = array<i64: 8, 128>}, {pipeline_mode = #tpu.pipeline_mode<synchronous>, transform_indices = @transform_1, window_bounds = array<i64: 8, 128>}]} {
    %c0 = arith.constant 0 : index
    %c0_0 = arith.constant 0 : index
    %0 = vector.load %arg1[%c0, %c0_0] : memref<8x128xf32, #tpu.memory_space<vmem>>, vector<8x128xf32>
    %c0_1 = arith.constant 0 : index
    %c0_2 = arith.constant 0 : index
    %1 = vector.load %arg2[%c0_1, %c0_2] : memref<8x128xf32, #tpu.memory_space<vmem>>, vector<8x128xf32>
    tpu.vector_store %arg2[%c0_1, %c0_2], %0 {strides = array<i32>} : memref<8x128xf32, #tpu.memory_space<vmem>>, vector<8x128xf32>,
    return
  }
  func.func @transform_0(%arg0: i32) -> (i32, i32) {
    %c0_i32 = arith.constant 0 : i32
    %c0_i32_0 = arith.constant 0 : i32
    %c0_i32_1 = arith.constant 0 : i32
    return %c0_i32, %c0_i32_0 : i32, i32
  }
  func.func @transform_1(%arg0: i32) -> (i32, i32) {
    %c0_i32 = arith.constant 0 : i32
    %c0_i32_0 = arith.constant 0 : i32
    %c0_i32_1 = arith.constant 0 : i32
    return %c0_i32, %c0_i32_0 : i32, i32
  }
}

module attributes {stable_mosaic.version = 11 : i64} {
  func.func @encoder_layer_kernel(%arg0: i32, %arg1: i32, %arg2: memref<1x32x32xf32, #tpu.memory_space<vmem>>, %arg3: memref<1x1x32xf32, #tpu.memory_space<vmem>>, %arg4: memref<1x32xf32, #tpu.memory_space<vmem>>, %arg5: memref<1x32xf32, #tpu.memory_space<vmem>>, %arg6: memref<32x32xbf16, #tpu.memory_space<vmem>>, %arg7: memref<32x32xbf16, #tpu.memory_space<vmem>>, %arg8: memref<32x32xbf16, #tpu.memory_space<vmem>>, %arg9: memref<1x32xf32, #tpu.memory_space<vmem>>, %arg10: memref<1x32xf32, #tpu.memory_space<vmem>>, %arg11: memref<1x32xf32, #tpu.memory_space<vmem>>, %arg12: memref<32x32xbf16, #tpu.memory_space<vmem>>, %arg13: memref<1x32xf32, #tpu.memory_space<vmem>>, %arg14: memref<1x32xf32, #tpu.memory_space<vmem>>, %arg15: memref<1x32xf32, #tpu.memory_space<vmem>>, %arg16: memref<32x64xbf16, #tpu.memory_space<vmem>>, %arg17: memref<1x64xf32, #tpu.memory_space<vmem>>, %arg18: memref<64x32xbf16, #tpu.memory_space<vmem>>, %arg19: memref<1x32xf32, #tpu.memory_space<vmem>>, %arg20: memref<1x32xf32, #tpu.memory_space<vmem>>, %arg21: memref<1x32xf32, #tpu.memory_space<vmem>>, %arg22: memref<1x16x32xf32, #tpu.memory_space<vmem>>, %arg23: memref<1x16x32xbf16, #tpu.memory_space<vmem>>, %arg24: memref<32x32xbf16, #tpu.memory_space<vmem>>, %arg25: memref<32x32xbf16, #tpu.memory_space<vmem>>, %arg26: memref<32x32xbf16, #tpu.memory_space<vmem>>) attributes {dimension_semantics = [#tpu.dimension_semantics<parallel>, #tpu.dimension_semantics<arbitrary>], iteration_bounds = array<i64: 2, 2>, scalar_prefetch = 0 : i64, scratch_operands = 3 : i64, tpu.core_type = #tpu.core_type<tc>, window_params = [{transform_indices = @transform_0, window_bounds = array<i64: 1, 32, 32>}, {transform_indices = @transform_1, window_bounds = array<i64: 1, 1, 32>}, {pipeline_mode = #tpu.pipeline_mode<synchronous>, transform_indices = @transform_2, window_bounds = array<i64: 1, 32>}, {pipeline_mode = #tpu.pipeline_mode<synchronous>, transform_indices = @transform_3, window_bounds = array<i64: 1, 32>}, {pipeline_mode = #tpu.pipeline_mode<synchronous>, transform_indices = @transform_4, window_bounds = array<i64: 32, 32>}, {pipeline_mode = #tpu.pipeline_mode<synchronous>, transform_indices = @transform_5, window_bounds = array<i64: 32, 32>}, {pipeline_mode = #tpu.pipeline_mode<synchronous>, transform_indices = @transform_6, window_bounds = array<i64: 32, 32>}, {pipeline_mode = #tpu.pipeline_mode<synchronous>, transform_indices = @transform_7, window_bounds = array<i64: 1, 32>}, {pipeline_mode = #tpu.pipeline_mode<synchronous>, transform_indices = @transform_8, window_bounds = array<i64: 1, 32>}, {pipeline_mode = #tpu.pipeline_mode<synchronous>, transform_indices = @transform_9, window_bounds = array<i64: 1, 32>}, {pipeline_mode = #tpu.pipeline_mode<synchronous>, transform_indices = @transform_10, window_bounds = array<i64: 32, 32>}, {pipeline_mode = #tpu.pipeline_mode<synchronous>, transform_indices = @transform_11, window_bounds = array<i64: 1, 32>}, {pipeline_mode = #tpu.pipeline_mode<synchronous>, transform_indices = @transform_12, window_bounds = array<i64: 1, 32>}, {pipeline_mode = #tpu.pipeline_mode<synchronous>, transform_indices = @transform_13, window_bounds = array<i64: 1, 32>}, {pipeline_mode = #tpu.pipeline_mode<synchronous>, transform_indices = @transform_14, window_bounds = array<i64: 32, 64>}, {pipeline_mode = #tpu.pipeline_mode<synchronous>, transform_indices = @transform_15, window_bounds = array<i64: 1, 64>}, {pipeline_mode = #tpu.pipeline_mode<synchronous>, transform_indices = @transform_16, window_bounds = array<i64: 64, 32>}, {pipeline_mode = #tpu.pipeline_mode<synchronous>, transform_indices = @transform_17, window_bounds = array<i64: 1, 32>}, {pipeline_mode = #tpu.pipeline_mode<synchronous>, transform_indices = @transform_18, window_bounds = array<i64: 1, 32>}, {pipeline_mode = #tpu.pipeline_mode<synchronous>, transform_indices = @transform_19, window_bounds = array<i64: 1, 32>}, {transform_indices = @transform_20, window_bounds = array<i64: 1, 16, 32>}, {transform_indices = @transform_21, window_bounds = array<i64: 1, 16, 32>}]} {
    %c16_i32 = arith.constant 16 : i32
    %0 = arith.muli %arg1, %c16_i32 : i32
    %1 = tpu.assume_multiple %0, 16 : i32
    %c0_i32 = arith.constant 0 : i32
    %2 = arith.cmpi eq, %arg1, %c0_i32 : i32
    %3 = arith.extui %2 : i1 to i32
    %c0_i32_0 = arith.constant 0 : i32
    %4 = arith.cmpi ne, %3, %c0_i32_0 : i32
    scf.if %4 {
      %c0_87 = arith.constant 0 : index
      %c0_88 = arith.constant 0 : index
      %c0_89 = arith.constant 0 : index
      %168 = vector.load %arg2[%c0_87, %c0_88, %c0_89] : memref<1x32x32xf32, #tpu.memory_space<vmem>>, vector<1x32x32xf32>
      %169 = vector.shape_cast %168 : vector<1x32x32xf32> to vector<32x32xf32>
      %c0_90 = arith.constant 0 : index
      %c0_91 = arith.constant 0 : index
      %170 = vector.load %arg4[%c0_90, %c0_91] : memref<1x32xf32, #tpu.memory_space<vmem>>, vector<1x32xf32>
      %c0_92 = arith.constant 0 : index
      %c0_93 = arith.constant 0 : index
      %171 = vector.load %arg5[%c0_92, %c0_93] : memref<1x32xf32, #tpu.memory_space<vmem>>, vector<1x32xf32>
      %cst_94 = arith.constant dense<0.000000e+00> : vector<32xf32>
      %172 = vector.multi_reduction <add>, %169, %cst_94 [1] : vector<32x32xf32> to vector<32xf32>
      %173 = vector.shape_cast %172 : vector<32xf32> to vector<32x1xf32>
      %cst_95 = arith.constant 3.200000e+01 : f32
      %174 = vector.broadcast %cst_95 : f32 to vector<32x1xf32>
      %175 = arith.divf %173, %174 : vector<32x1xf32>
      %176 = vector.broadcast %175 : vector<32x1xf32> to vector<32x32xf32>
      %177 = arith.subf %169, %176 : vector<32x32xf32>
      %178 = arith.mulf %177, %177 : vector<32x32xf32>
      %cst_96 = arith.constant dense<0.000000e+00> : vector<32xf32>
      %179 = vector.multi_reduction <add>, %178, %cst_96 [1] : vector<32x32xf32> to vector<32xf32>
      %180 = vector.shape_cast %179 : vector<32xf32> to vector<32x1xf32>
      %cst_97 = arith.constant 3.200000e+01 : f32
      %181 = vector.broadcast %cst_97 : f32 to vector<32x1xf32>
      %182 = arith.divf %180, %181 : vector<32x1xf32>
      %183 = vector.broadcast %175 : vector<32x1xf32> to vector<32x32xf32>
      %184 = arith.subf %169, %183 : vector<32x32xf32>
      %cst_98 = arith.constant 9.99999997E-7 : f32
      %185 = vector.broadcast %cst_98 : f32 to vector<32x1xf32>
      %186 = arith.addf %182, %185 : vector<32x1xf32>
      %187 = math.rsqrt %186 : vector<32x1xf32>
      %188 = vector.broadcast %187 : vector<32x1xf32> to vector<32x32xf32>
      %189 = arith.mulf %184, %188 : vector<32x32xf32>
      %190 = vector.broadcast %170 : vector<1x32xf32> to vector<32x32xf32>
      %191 = arith.mulf %189, %190 : vector<32x32xf32>
      %192 = vector.broadcast %171 : vector<1x32xf32> to vector<32x32xf32>
      %193 = arith.addf %191, %192 : vector<32x32xf32>
      %194 = arith.truncf %193 : vector<32x32xf32> to vector<32x32xbf16>
      %c0_99 = arith.constant 0 : index
      %c0_100 = arith.constant 0 : index
      %195 = vector.load %arg24[%c0_99, %c0_100] : memref<32x32xbf16, #tpu.memory_space<vmem>>, vector<32x32xbf16>
      tpu.vector_store %arg24[%c0_99, %c0_100], %194 {strides = array<i32>} : memref<32x32xbf16, #tpu.memory_space<vmem>>, vector<32x32xbf16>,
      %c0_101 = arith.constant 0 : index
      %c0_102 = arith.constant 0 : index
      %196 = vector.load %arg7[%c0_101, %c0_102] : memref<32x32xbf16, #tpu.memory_space<vmem>>, vector<32x32xbf16>
      %cst_103 = arith.constant dense<0.000000e+00> : vector<32x32xf32>
      %197 = tpu.matmul %194, %196, %cst_103 {dimension_numbers = #tpu.dot_dimension_numbers<[1], [0], [0], [1], [0, 0, 1, 1], [], []>} : vector<32x32xbf16>, vector<32x32xbf16>, vector<32x32xf32> -> vector<32x32xf32>
      %c0_104 = arith.constant 0 : index
      %c0_105 = arith.constant 0 : index
      %198 = vector.load %arg10[%c0_104, %c0_105] : memref<1x32xf32, #tpu.memory_space<vmem>>, vector<1x32xf32>
      %199 = vector.broadcast %198 : vector<1x32xf32> to vector<32x32xf32>
      %200 = arith.addf %197, %199 : vector<32x32xf32>
      %201 = arith.truncf %200 : vector<32x32xf32> to vector<32x32xbf16>
      %c0_106 = arith.constant 0 : index
      %c0_107 = arith.constant 0 : index
      %202 = vector.load %arg25[%c0_106, %c0_107] : memref<32x32xbf16, #tpu.memory_space<vmem>>, vector<32x32xbf16>
      tpu.vector_store %arg25[%c0_106, %c0_107], %201 {strides = array<i32>} : memref<32x32xbf16, #tpu.memory_space<vmem>>, vector<32x32xbf16>,
      %c0_108 = arith.constant 0 : index
      %c0_109 = arith.constant 0 : index
      %203 = vector.load %arg8[%c0_108, %c0_109] : memref<32x32xbf16, #tpu.memory_space<vmem>>, vector<32x32xbf16>
      %cst_110 = arith.constant dense<0.000000e+00> : vector<32x32xf32>
      %204 = tpu.matmul %194, %203, %cst_110 {dimension_numbers = #tpu.dot_dimension_numbers<[1], [0], [0], [1], [0, 0, 1, 1], [], []>} : vector<32x32xbf16>, vector<32x32xbf16>, vector<32x32xf32> -> vector<32x32xf32>
      %c0_111 = arith.constant 0 : index
      %c0_112 = arith.constant 0 : index
      %205 = vector.load %arg11[%c0_111, %c0_112] : memref<1x32xf32, #tpu.memory_space<vmem>>, vector<1x32xf32>
      %206 = vector.broadcast %205 : vector<1x32xf32> to vector<32x32xf32>
      %207 = arith.addf %204, %206 : vector<32x32xf32>
      %208 = arith.truncf %207 : vector<32x32xf32> to vector<32x32xbf16>
      %c0_113 = arith.constant 0 : index
      %c0_114 = arith.constant 0 : index
      %209 = vector.load %arg26[%c0_113, %c0_114] : memref<32x32xbf16, #tpu.memory_space<vmem>>, vector<32x32xbf16>
      tpu.vector_store %arg26[%c0_113, %c0_114], %208 {strides = array<i32>} : memref<32x32xbf16, #tpu.memory_space<vmem>>, vector<32x32xbf16>,
    } else {
    }
    %5 = arith.index_cast %1 : i32 to index
    %c0 = arith.constant 0 : index
    %6 = vector.load %arg24[%5, %c0] : memref<32x32xbf16, #tpu.memory_space<vmem>>, vector<16x32xbf16>
    %c0_1 = arith.constant 0 : index
    %c0_2 = arith.constant 0 : index
    %7 = vector.load %arg6[%c0_1, %c0_2] : memref<32x32xbf16, #tpu.memory_space<vmem>>, vector<32x32xbf16>
    %cst = arith.constant dense<0.000000e+00> : vector<16x32xf32>
    %8 = tpu.matmul %6, %7, %cst {dimension_numbers = #tpu.dot_dimension_numbers<[1], [0], [0], [1], [0, 0, 1, 1], [], []>} : vector<16x32xbf16>, vector<32x32xbf16>, vector<16x32xf32> -> vector<16x32xf32>
    %c0_3 = arith.constant 0 : index
    %c0_4 = arith.constant 0 : index
    %9 = vector.load %arg9[%c0_3, %c0_4] : memref<1x32xf32, #tpu.memory_space<vmem>>, vector<1x32xf32>
    %10 = vector.broadcast %9 : vector<1x32xf32> to vector<16x32xf32>
    %11 = arith.addf %8, %10 : vector<16x32xf32>
    %cst_5 = arith.constant 0.353553385 : f32
    %12 = vector.broadcast %cst_5 : f32 to vector<16x32xf32>
    %13 = arith.mulf %11, %12 : vector<16x32xf32>
    %14 = arith.truncf %13 : vector<16x32xf32> to vector<16x32xbf16>
    %c0_6 = arith.constant 0 : index
    %c0_7 = arith.constant 0 : index
    %c0_8 = arith.constant 0 : index
    %15 = vector.load %arg3[%c0_6, %c0_7, %c0_8] : memref<1x1x32xf32, #tpu.memory_space<vmem>>, vector<1x1x32xf32>
    %16 = vector.shape_cast %15 : vector<1x1x32xf32> to vector<1x32xf32>
    %17 = vector.shape_cast %16 : vector<1x32xf32> to vector<1x32xf32>
    %18 = vector.broadcast %17 : vector<1x32xf32> to vector<16x32xf32>
    %cst_9 = arith.constant 0.000000e+00 : f32
    %19 = vector.broadcast %cst_9 : f32 to vector<16x32xf32>
    %cst_10 = arith.constant 0.000000e+00 : f32
    %20 = vector.broadcast %cst_10 : f32 to vector<16x32xf32>
    %21 = vector.extract_strided_slice %14 {offsets = [0, 0], sizes = [16, 8], strides = [1, 1]} : vector<16x32xbf16> to vector<16x8xbf16>
    %c0_11 = arith.constant 0 : index
    %c0_12 = arith.constant 0 : index
    %22 = vector.load %arg25[%c0_11, %c0_12] : memref<32x32xbf16, #tpu.memory_space<vmem>>, vector<32x8xbf16>
    %cst_13 = arith.constant dense<0.000000e+00> : vector<16x32xf32>
    %23 = tpu.matmul %21, %22, %cst_13 {dimension_numbers = #tpu.dot_dimension_numbers<[1], [1], [0], [0], [0, 0, 1, 0], [], []>} : vector<16x8xbf16>, vector<32x8xbf16>, vector<16x32xf32> -> vector<16x32xf32>
    %24 = arith.addf %23, %18 : vector<16x32xf32>
    %cst_14 = arith.constant dense<0xFF800000> : vector<16xf32>
    %25 = vector.multi_reduction <maximumf>, %24, %cst_14 [1] : vector<16x32xf32> to vector<16xf32>
    %26 = vector.shape_cast %25 : vector<16xf32> to vector<16x1xf32>
    %27 = vector.broadcast %26 : vector<16x1xf32> to vector<16x32xf32>
    %28 = arith.subf %24, %27 : vector<16x32xf32>
    %29 = math.exp %28 : vector<16x32xf32>
    %cst_15 = arith.constant dense<0.000000e+00> : vector<16xf32>
    %30 = vector.multi_reduction <add>, %29, %cst_15 [1] : vector<16x32xf32> to vector<16xf32>
    %31 = vector.shape_cast %30 : vector<16xf32> to vector<16x1xf32>
    %cst_16 = arith.constant 1.000000e+00 : f32
    %32 = vector.broadcast %cst_16 : f32 to vector<16x1xf32>
    %33 = arith.divf %32, %31 : vector<16x1xf32>
    %34 = vector.broadcast %33 : vector<16x1xf32> to vector<16x32xf32>
    %35 = arith.mulf %29, %34 : vector<16x32xf32>
    %36 = arith.addf %19, %35 : vector<16x32xf32>
    %37 = arith.truncf %35 : vector<16x32xf32> to vector<16x32xbf16>
    %c0_17 = arith.constant 0 : index
    %c0_18 = arith.constant 0 : index
    %38 = vector.load %arg26[%c0_17, %c0_18] : memref<32x32xbf16, #tpu.memory_space<vmem>>, vector<32x8xbf16>
    %cst_19 = arith.constant dense<0.000000e+00> : vector<16x8xf32>
    %39 = tpu.matmul %37, %38, %cst_19 {dimension_numbers = #tpu.dot_dimension_numbers<[1], [0], [0], [1], [0, 0, 1, 1], [], []>} : vector<16x32xbf16>, vector<32x8xbf16>, vector<16x8xf32> -> vector<16x8xf32>
    %40 = arith.truncf %39 : vector<16x8xf32> to vector<16x8xbf16>
    %c0_20 = arith.constant 0 : index
    %c0_21 = arith.constant 0 : index
    %41 = vector.load %arg12[%c0_20, %c0_21] : memref<32x32xbf16, #tpu.memory_space<vmem>>, vector<8x32xbf16>
    %cst_22 = arith.constant dense<0.000000e+00> : vector<16x32xf32>
    %42 = tpu.matmul %40, %41, %cst_22 {dimension_numbers = #tpu.dot_dimension_numbers<[1], [0], [0], [1], [0, 0, 1, 1], [], []>} : vector<16x8xbf16>, vector<8x32xbf16>, vector<16x32xf32> -> vector<16x32xf32>
    %43 = arith.addf %20, %42 : vector<16x32xf32>
    %44 = vector.extract_strided_slice %14 {offsets = [0, 8], sizes = [16, 8], strides = [1, 1]} : vector<16x32xbf16> to vector<16x8xbf16>
    %c0_23 = arith.constant 0 : index
    %c8 = arith.constant 8 : index
    %45 = vector.load %arg25[%c0_23, %c8] : memref<32x32xbf16, #tpu.memory_space<vmem>>, vector<32x8xbf16>
    %cst_24 = arith.constant dense<0.000000e+00> : vector<16x32xf32>
    %46 = tpu.matmul %44, %45, %cst_24 {dimension_numbers = #tpu.dot_dimension_numbers<[1], [1], [0], [0], [0, 0, 1, 0], [], []>} : vector<16x8xbf16>, vector<32x8xbf16>, vector<16x32xf32> -> vector<16x32xf32>
    %47 = arith.addf %46, %18 : vector<16x32xf32>
    %cst_25 = arith.constant dense<0xFF800000> : vector<16xf32>
    %48 = vector.multi_reduction <maximumf>, %47, %cst_25 [1] : vector<16x32xf32> to vector<16xf32>
    %49 = vector.shape_cast %48 : vector<16xf32> to vector<16x1xf32>
    %50 = vector.broadcast %49 : vector<16x1xf32> to vector<16x32xf32>
    %51 = arith.subf %47, %50 : vector<16x32xf32>
    %52 = math.exp %51 : vector<16x32xf32>
    %cst_26 = arith.constant dense<0.000000e+00> : vector<16xf32>
    %53 = vector.multi_reduction <add>, %52, %cst_26 [1] : vector<16x32xf32> to vector<16xf32>
    %54 = vector.shape_cast %53 : vector<16xf32> to vector<16x1xf32>
    %cst_27 = arith.constant 1.000000e+00 : f32
    %55 = vector.broadcast %cst_27 : f32 to vector<16x1xf32>
    %56 = arith.divf %55, %54 : vector<16x1xf32>
    %57 = vector.broadcast %56 : vector<16x1xf32> to vector<16x32xf32>
    %58 = arith.mulf %52, %57 : vector<16x32xf32>
    %59 = arith.addf %36, %58 : vector<16x32xf32>
    %60 = arith.truncf %58 : vector<16x32xf32> to vector<16x32xbf16>
    %c0_28 = arith.constant 0 : index
    %c8_29 = arith.constant 8 : index
    %61 = vector.load %arg26[%c0_28, %c8_29] : memref<32x32xbf16, #tpu.memory_space<vmem>>, vector<32x8xbf16>
    %cst_30 = arith.constant dense<0.000000e+00> : vector<16x8xf32>
    %62 = tpu.matmul %60, %61, %cst_30 {dimension_numbers = #tpu.dot_dimension_numbers<[1], [0], [0], [1], [0, 0, 1, 1], [], []>} : vector<16x32xbf16>, vector<32x8xbf16>, vector<16x8xf32> -> vector<16x8xf32>
    %63 = arith.truncf %62 : vector<16x8xf32> to vector<16x8xbf16>
    %c8_31 = arith.constant 8 : index
    %c0_32 = arith.constant 0 : index
    %64 = vector.load %arg12[%c8_31, %c0_32] : memref<32x32xbf16, #tpu.memory_space<vmem>>, vector<8x32xbf16>
    %cst_33 = arith.constant dense<0.000000e+00> : vector<16x32xf32>
    %65 = tpu.matmul %63, %64, %cst_33 {dimension_numbers = #tpu.dot_dimension_numbers<[1], [0], [0], [1], [0, 0, 1, 1], [], []>} : vector<16x8xbf16>, vector<8x32xbf16>, vector<16x32xf32> -> vector<16x32xf32>
    %66 = arith.addf %43, %65 : vector<16x32xf32>
    %67 = vector.extract_strided_slice %14 {offsets = [0, 16], sizes = [16, 8], strides = [1, 1]} : vector<16x32xbf16> to vector<16x8xbf16>
    %c0_34 = arith.constant 0 : index
    %c16 = arith.constant 16 : index
    %68 = vector.load %arg25[%c0_34, %c16] : memref<32x32xbf16, #tpu.memory_space<vmem>>, vector<32x8xbf16>
    %cst_35 = arith.constant dense<0.000000e+00> : vector<16x32xf32>
    %69 = tpu.matmul %67, %68, %cst_35 {dimension_numbers = #tpu.dot_dimension_numbers<[1], [1], [0], [0], [0, 0, 1, 0], [], []>} : vector<16x8xbf16>, vector<32x8xbf16>, vector<16x32xf32> -> vector<16x32xf32>
    %70 = arith.addf %69, %18 : vector<16x32xf32>
    %cst_36 = arith.constant dense<0xFF800000> : vector<16xf32>
    %71 = vector.multi_reduction <maximumf>, %70, %cst_36 [1] : vector<16x32xf32> to vector<16xf32>
    %72 = vector.shape_cast %71 : vector<16xf32> to vector<16x1xf32>
    %73 = vector.broadcast %72 : vector<16x1xf32> to vector<16x32xf32>
    %74 = arith.subf %70, %73 : vector<16x32xf32>
    %75 = math.exp %74 : vector<16x32xf32>
    %cst_37 = arith.constant dense<0.000000e+00> : vector<16xf32>
    %76 = vector.multi_reduction <add>, %75, %cst_37 [1] : vector<16x32xf32> to vector<16xf32>
    %77 = vector.shape_cast %76 : vector<16xf32> to vector<16x1xf32>
    %cst_38 = arith.constant 1.000000e+00 : f32
    %78 = vector.broadcast %cst_38 : f32 to vector<16x1xf32>
    %79 = arith.divf %78, %77 : vector<16x1xf32>
    %80 = vector.broadcast %79 : vector<16x1xf32> to vector<16x32xf32>
    %81 = arith.mulf %75, %80 : vector<16x32xf32>
    %82 = arith.addf %59, %81 : vector<16x32xf32>
    %83 = arith.truncf %81 : vector<16x32xf32> to vector<16x32xbf16>
    %c0_39 = arith.constant 0 : index
    %c16_40 = arith.constant 16 : index
    %84 = vector.load %arg26[%c0_39, %c16_40] : memref<32x32xbf16, #tpu.memory_space<vmem>>, vector<32x8xbf16>
    %cst_41 = arith.constant dense<0.000000e+00> : vector<16x8xf32>
    %85 = tpu.matmul %83, %84, %cst_41 {dimension_numbers = #tpu.dot_dimension_numbers<[1], [0], [0], [1], [0, 0, 1, 1], [], []>} : vector<16x32xbf16>, vector<32x8xbf16>, vector<16x8xf32> -> vector<16x8xf32>
    %86 = arith.truncf %85 : vector<16x8xf32> to vector<16x8xbf16>
    %c16_42 = arith.constant 16 : index
    %c0_43 = arith.constant 0 : index
    %87 = vector.load %arg12[%c16_42, %c0_43] : memref<32x32xbf16, #tpu.memory_space<vmem>>, vector<8x32xbf16>
    %cst_44 = arith.constant dense<0.000000e+00> : vector<16x32xf32>
    %88 = tpu.matmul %86, %87, %cst_44 {dimension_numbers = #tpu.dot_dimension_numbers<[1], [0], [0], [1], [0, 0, 1, 1], [], []>} : vector<16x8xbf16>, vector<8x32xbf16>, vector<16x32xf32> -> vector<16x32xf32>
    %89 = arith.addf %66, %88 : vector<16x32xf32>
    %90 = vector.extract_strided_slice %14 {offsets = [0, 24], sizes = [16, 8], strides = [1, 1]} : vector<16x32xbf16> to vector<16x8xbf16>
    %c0_45 = arith.constant 0 : index
    %c24 = arith.constant 24 : index
    %91 = vector.load %arg25[%c0_45, %c24] : memref<32x32xbf16, #tpu.memory_space<vmem>>, vector<32x8xbf16>
    %cst_46 = arith.constant dense<0.000000e+00> : vector<16x32xf32>
    %92 = tpu.matmul %90, %91, %cst_46 {dimension_numbers = #tpu.dot_dimension_numbers<[1], [1], [0], [0], [0, 0, 1, 0], [], []>} : vector<16x8xbf16>, vector<32x8xbf16>, vector<16x32xf32> -> vector<16x32xf32>
    %93 = arith.addf %92, %18 : vector<16x32xf32>
    %cst_47 = arith.constant dense<0xFF800000> : vector<16xf32>
    %94 = vector.multi_reduction <maximumf>, %93, %cst_47 [1] : vector<16x32xf32> to vector<16xf32>
    %95 = vector.shape_cast %94 : vector<16xf32> to vector<16x1xf32>
    %96 = vector.broadcast %95 : vector<16x1xf32> to vector<16x32xf32>
    %97 = arith.subf %93, %96 : vector<16x32xf32>
    %98 = math.exp %97 : vector<16x32xf32>
    %cst_48 = arith.constant dense<0.000000e+00> : vector<16xf32>
    %99 = vector.multi_reduction <add>, %98, %cst_48 [1] : vector<16x32xf32> to vector<16xf32>
    %100 = vector.shape_cast %99 : vector<16xf32> to vector<16x1xf32>
    %cst_49 = arith.constant 1.000000e+00 : f32
    %101 = vector.broadcast %cst_49 : f32 to vector<16x1xf32>
    %102 = arith.divf %101, %100 : vector<16x1xf32>
    %103 = vector.broadcast %102 : vector<16x1xf32> to vector<16x32xf32>
    %104 = arith.mulf %98, %103 : vector<16x32xf32>
    %105 = arith.addf %82, %104 : vector<16x32xf32>
    %106 = arith.truncf %104 : vector<16x32xf32> to vector<16x32xbf16>
    %c0_50 = arith.constant 0 : index
    %c24_51 = arith.constant 24 : index
    %107 = vector.load %arg26[%c0_50, %c24_51] : memref<32x32xbf16, #tpu.memory_space<vmem>>, vector<32x8xbf16>
    %cst_52 = arith.constant dense<0.000000e+00> : vector<16x8xf32>
    %108 = tpu.matmul %106, %107, %cst_52 {dimension_numbers = #tpu.dot_dimension_numbers<[1], [0], [0], [1], [0, 0, 1, 1], [], []>} : vector<16x32xbf16>, vector<32x8xbf16>, vector<16x8xf32> -> vector<16x8xf32>
    %109 = arith.truncf %108 : vector<16x8xf32> to vector<16x8xbf16>
    %c24_53 = arith.constant 24 : index
    %c0_54 = arith.constant 0 : index
    %110 = vector.load %arg12[%c24_53, %c0_54] : memref<32x32xbf16, #tpu.memory_space<vmem>>, vector<8x32xbf16>
    %cst_55 = arith.constant dense<0.000000e+00> : vector<16x32xf32>
    %111 = tpu.matmul %109, %110, %cst_55 {dimension_numbers = #tpu.dot_dimension_numbers<[1], [0], [0], [1], [0, 0, 1, 1], [], []>} : vector<16x8xbf16>, vector<8x32xbf16>, vector<16x32xf32> -> vector<16x32xf32>
    %112 = arith.addf %89, %111 : vector<16x32xf32>
    %c0_56 = arith.constant 0 : index
    %c0_57 = arith.constant 0 : index
    %113 = vector.load %arg13[%c0_56, %c0_57] : memref<1x32xf32, #tpu.memory_space<vmem>>, vector<1x32xf32>
    %114 = vector.broadcast %113 : vector<1x32xf32> to vector<16x32xf32>
    %115 = arith.addf %112, %114 : vector<16x32xf32>
    %c0_58 = arith.constant 0 : index
    %116 = arith.index_cast %1 : i32 to index
    %c0_59 = arith.constant 0 : index
    %117 = vector.load %arg2[%c0_58, %116, %c0_59] : memref<1x32x32xf32, #tpu.memory_space<vmem>>, vector<1x16x32xf32>
    %118 = vector.shape_cast %117 : vector<1x16x32xf32> to vector<16x32xf32>
    %119 = arith.addf %118, %115 : vector<16x32xf32>
    %c0_60 = arith.constant 0 : index
    %c0_61 = arith.constant 0 : index
    %120 = vector.load %arg14[%c0_60, %c0_61] : memref<1x32xf32, #tpu.memory_space<vmem>>, vector<1x32xf32>
    %c0_62 = arith.constant 0 : index
    %c0_63 = arith.constant 0 : index
    %121 = vector.load %arg15[%c0_62, %c0_63] : memref<1x32xf32, #tpu.memory_space<vmem>>, vector<1x32xf32>
    %cst_64 = arith.constant dense<0.000000e+00> : vector<16xf32>
    %122 = vector.multi_reduction <add>, %119, %cst_64 [1] : vector<16x32xf32> to vector<16xf32>
    %123 = vector.shape_cast %122 : vector<16xf32> to vector<16x1xf32>
    %cst_65 = arith.constant 3.200000e+01 : f32
    %124 = vector.broadcast %cst_65 : f32 to vector<16x1xf32>
    %125 = arith.divf %123, %124 : vector<16x1xf32>
    %126 = vector.broadcast %125 : vector<16x1xf32> to vector<16x32xf32>
    %127 = arith.subf %119, %126 : vector<16x32xf32>
    %128 = arith.mulf %127, %127 : vector<16x32xf32>
    %cst_66 = arith.constant dense<0.000000e+00> : vector<16xf32>
    %129 = vector.multi_reduction <add>, %128, %cst_66 [1] : vector<16x32xf32> to vector<16xf32>
    %130 = vector.shape_cast %129 : vector<16xf32> to vector<16x1xf32>
    %cst_67 = arith.constant 3.200000e+01 : f32
    %131 = vector.broadcast %cst_67 : f32 to vector<16x1xf32>
    %132 = arith.divf %130, %131 : vector<16x1xf32>
    %133 = vector.broadcast %125 : vector<16x1xf32> to vector<16x32xf32>
    %134 = arith.subf %119, %133 : vector<16x32xf32>
    %cst_68 = arith.constant 9.99999997E-7 : f32
    %135 = vector.broadcast %cst_68 : f32 to vector<16x1xf32>
    %136 = arith.addf %132, %135 : vector<16x1xf32>
    %137 = math.rsqrt %136 : vector<16x1xf32>
    %138 = vector.broadcast %137 : vector<16x1xf32> to vector<16x32xf32>
    %139 = arith.mulf %134, %138 : vector<16x32xf32>
    %140 = vector.broadcast %120 : vector<1x32xf32> to vector<16x32xf32>
    %141 = arith.mulf %139, %140 : vector<16x32xf32>
    %142 = vector.broadcast %121 : vector<1x32xf32> to vector<16x32xf32>
    %143 = arith.addf %141, %142 : vector<16x32xf32>
    %144 = arith.truncf %143 : vector<16x32xf32> to vector<16x32xbf16>
    %c0_69 = arith.constant 0 : index
    %c0_70 = arith.constant 0 : index
    %145 = vector.load %arg16[%c0_69, %c0_70] : memref<32x64xbf16, #tpu.memory_space<vmem>>, vector<32x64xbf16>
    %cst_71 = arith.constant dense<0.000000e+00> : vector<16x64xf32>
    %146 = tpu.matmul %144, %145, %cst_71 {dimension_numbers = #tpu.dot_dimension_numbers<[1], [0], [0], [1], [0, 0, 1, 1], [], []>} : vector<16x32xbf16>, vector<32x64xbf16>, vector<16x64xf32> -> vector<16x64xf32>
    %c0_72 = arith.constant 0 : index
    %c0_73 = arith.constant 0 : index
    %147 = vector.load %arg17[%c0_72, %c0_73] : memref<1x64xf32, #tpu.memory_space<vmem>>, vector<1x64xf32>
    %148 = vector.broadcast %147 : vector<1x64xf32> to vector<16x64xf32>
    %149 = arith.addf %146, %148 : vector<16x64xf32>
    %cst_74 = arith.constant 0.000000e+00 : f32
    %150 = vector.broadcast %cst_74 : f32 to vector<16x64xf32>
    %151 = arith.maximumf %149, %150 : vector<16x64xf32>
    %152 = arith.truncf %151 : vector<16x64xf32> to vector<16x64xbf16>
    %c0_75 = arith.constant 0 : index
    %c0_76 = arith.constant 0 : index
    %153 = vector.load %arg18[%c0_75, %c0_76] : memref<64x32xbf16, #tpu.memory_space<vmem>>, vector<64x32xbf16>
    %cst_77 = arith.constant dense<0.000000e+00> : vector<16x32xf32>
    %154 = tpu.matmul %152, %153, %cst_77 {dimension_numbers = #tpu.dot_dimension_numbers<[1], [0], [0], [1], [0, 0, 1, 1], [], []>} : vector<16x64xbf16>, vector<64x32xbf16>, vector<16x32xf32> -> vector<16x32xf32>
    %c0_78 = arith.constant 0 : index
    %c0_79 = arith.constant 0 : index
    %155 = vector.load %arg19[%c0_78, %c0_79] : memref<1x32xf32, #tpu.memory_space<vmem>>, vector<1x32xf32>
    %156 = vector.broadcast %155 : vector<1x32xf32> to vector<16x32xf32>
    %157 = arith.addf %154, %156 : vector<16x32xf32>
    %158 = arith.addf %119, %157 : vector<16x32xf32>
    %c0_80 = arith.constant 0 : index
    %c0_81 = arith.constant 0 : index
    %c0_82 = arith.constant 0 : index
    %159 = vector.load %arg22[%c0_80, %c0_81, %c0_82] : memref<1x16x32xf32, #tpu.memory_space<vmem>>, vector<1x16x32xf32>
    %160 = vector.shape_cast %159 : vector<1x16x32xf32> to vector<16x32xf32>
    %161 = vector.shape_cast %158 : vector<16x32xf32> to vector<1x16x32xf32>
    tpu.vector_store %arg22[%c0_80, %c0_81, %c0_82], %161 {strides = array<i32>} : memref<1x16x32xf32, #tpu.memory_space<vmem>>, vector<1x16x32xf32>,
    %cst_83 = arith.constant 2.500000e-01 : f32
    %162 = vector.broadcast %cst_83 : f32 to vector<16x32xf32>
    %163 = arith.mulf %105, %162 : vector<16x32xf32>
    %164 = arith.truncf %163 : vector<16x32xf32> to vector<16x32xbf16>
    %c0_84 = arith.constant 0 : index
    %c0_85 = arith.constant 0 : index
    %c0_86 = arith.constant 0 : index
    %165 = vector.load %arg23[%c0_84, %c0_85, %c0_86] : memref<1x16x32xbf16, #tpu.memory_space<vmem>>, vector<1x16x32xbf16>
    %166 = vector.shape_cast %165 : vector<1x16x32xbf16> to vector<16x32xbf16>
    %167 = vector.shape_cast %164 : vector<16x32xbf16> to vector<1x16x32xbf16>
    tpu.vector_store %arg23[%c0_84, %c0_85, %c0_86], %167 {strides = array<i32>} : memref<1x16x32xbf16, #tpu.memory_space<vmem>>, vector<1x16x32xbf16>,
    return
  }
  func.func @transform_0(%arg0: i32, %arg1: i32) -> (i32, i32, i32) {
    %c0_i32 = arith.constant 0 : i32
    %c0_i32_0 = arith.constant 0 : i32
    %c0_i32_1 = arith.constant 0 : i32
    return %arg0, %c0_i32, %c0_i32_0 : i32, i32, i32
  }
  func.func @transform_1(%arg0: i32, %arg1: i32) -> (i32, i32, i32) {
    %c0_i32 = arith.constant 0 : i32
    %c0_i32_0 = arith.constant 0 : i32
    %c0_i32_1 = arith.constant 0 : i32
    return %arg0, %c0_i32, %c0_i32_0 : i32, i32, i32
  }
  func.func @transform_2(%arg0: i32, %arg1: i32) -> (i32, i32) {
    %c0_i32 = arith.constant 0 : i32
    %c0_i32_0 = arith.constant 0 : i32
    %c0_i32_1 = arith.constant 0 : i32
    return %c0_i32, %c0_i32_0 : i32, i32
  }
  func.func @transform_3(%arg0: i32, %arg1: i32) -> (i32, i32) {
    %c0_i32 = arith.constant 0 : i32
    %c0_i32_0 = arith.constant 0 : i32
    %c0_i32_1 = arith.constant 0 : i32
    return %c0_i32, %c0_i32_0 : i32, i32
  }
  func.func @transform_4(%arg0: i32, %arg1: i32) -> (i32, i32) {
    %c0_i32 = arith.constant 0 : i32
    %c0_i32_0 = arith.constant 0 : i32
    %c0_i32_1 = arith.constant 0 : i32
    return %c0_i32, %c0_i32_0 : i32, i32
  }
  func.func @transform_5(%arg0: i32, %arg1: i32) -> (i32, i32) {
    %c0_i32 = arith.constant 0 : i32
    %c0_i32_0 = arith.constant 0 : i32
    %c0_i32_1 = arith.constant 0 : i32
    return %c0_i32, %c0_i32_0 : i32, i32
  }
  func.func @transform_6(%arg0: i32, %arg1: i32) -> (i32, i32) {
    %c0_i32 = arith.constant 0 : i32
    %c0_i32_0 = arith.constant 0 : i32
    %c0_i32_1 = arith.constant 0 : i32
    return %c0_i32, %c0_i32_0 : i32, i32
  }
  func.func @transform_7(%arg0: i32, %arg1: i32) -> (i32, i32) {
    %c0_i32 = arith.constant 0 : i32
    %c0_i32_0 = arith.constant 0 : i32
    %c0_i32_1 = arith.constant 0 : i32
    return %c0_i32, %c0_i32_0 : i32, i32
  }
  func.func @transform_8(%arg0: i32, %arg1: i32) -> (i32, i32) {
    %c0_i32 = arith.constant 0 : i32
    %c0_i32_0 = arith.constant 0 : i32
    %c0_i32_1 = arith.constant 0 : i32
    return %c0_i32, %c0_i32_0 : i32, i32
  }
  func.func @transform_9(%arg0: i32, %arg1: i32) -> (i32, i32) {
    %c0_i32 = arith.constant 0 : i32
    %c0_i32_0 = arith.constant 0 : i32
    %c0_i32_1 = arith.constant 0 : i32
    return %c0_i32, %c0_i32_0 : i32, i32
  }
  func.func @transform_10(%arg0: i32, %arg1: i32) -> (i32, i32) {
    %c0_i32 = arith.constant 0 : i32
    %c0_i32_0 = arith.constant 0 : i32
    %c0_i32_1 = arith.constant 0 : i32
    return %c0_i32, %c0_i32_0 : i32, i32
  }
  func.func @transform_11(%arg0: i32, %arg1: i32) -> (i32, i32) {
    %c0_i32 = arith.constant 0 : i32
    %c0_i32_0 = arith.constant 0 : i32
    %c0_i32_1 = arith.constant 0 : i32
    return %c0_i32, %c0_i32_0 : i32, i32
  }
  func.func @transform_12(%arg0: i32, %arg1: i32) -> (i32, i32) {
    %c0_i32 = arith.constant 0 : i32
    %c0_i32_0 = arith.constant 0 : i32
    %c0_i32_1 = arith.constant 0 : i32
    return %c0_i32, %c0_i32_0 : i32, i32
  }
  func.func @transform_13(%arg0: i32, %arg1: i32) -> (i32, i32) {
    %c0_i32 = arith.constant 0 : i32
    %c0_i32_0 = arith.constant 0 : i32
    %c0_i32_1 = arith.constant 0 : i32
    return %c0_i32, %c0_i32_0 : i32, i32
  }
  func.func @transform_14(%arg0: i32, %arg1: i32) -> (i32, i32) {
    %c0_i32 = arith.constant 0 : i32
    %c0_i32_0 = arith.constant 0 : i32
    %c0_i32_1 = arith.constant 0 : i32
    return %c0_i32, %c0_i32_0 : i32, i32
  }
  func.func @transform_15(%arg0: i32, %arg1: i32) -> (i32, i32) {
    %c0_i32 = arith.constant 0 : i32
    %c0_i32_0 = arith.constant 0 : i32
    %c0_i32_1 = arith.constant 0 : i32
    return %c0_i32, %c0_i32_0 : i32, i32
  }
  func.func @transform_16(%arg0: i32, %arg1: i32) -> (i32, i32) {
    %c0_i32 = arith.constant 0 : i32
    %c0_i32_0 = arith.constant 0 : i32
    %c0_i32_1 = arith.constant 0 : i32
    return %c0_i32, %c0_i32_0 : i32, i32
  }
  func.func @transform_17(%arg0: i32, %arg1: i32) -> (i32, i32) {
    %c0_i32 = arith.constant 0 : i32
    %c0_i32_0 = arith.constant 0 : i32
    %c0_i32_1 = arith.constant 0 : i32
    return %c0_i32, %c0_i32_0 : i32, i32
  }
  func.func @transform_18(%arg0: i32, %arg1: i32) -> (i32, i32) {
    %c0_i32 = arith.constant 0 : i32
    %c0_i32_0 = arith.constant 0 : i32
    %c0_i32_1 = arith.constant 0 : i32
    return %c0_i32, %c0_i32_0 : i32, i32
  }
  func.func @transform_19(%arg0: i32, %arg1: i32) -> (i32, i32) {
    %c0_i32 = arith.constant 0 : i32
    %c0_i32_0 = arith.constant 0 : i32
    %c0_i32_1 = arith.constant 0 : i32
    return %c0_i32, %c0_i32_0 : i32, i32
  }
  func.func @transform_20(%arg0: i32, %arg1: i32) -> (i32, i32, i32) {
    %c0_i32 = arith.constant 0 : i32
    %c0_i32_0 = arith.constant 0 : i32
    return %arg0, %arg1, %c0_i32 : i32, i32, i32
  }
  func.func @transform_21(%arg0: i32, %arg1: i32) -> (i32, i32, i32) {
    %c0_i32 = arith.constant 0 : i32
    %c0_i32_0 = arith.constant 0 : i32
    return %arg0, %arg1, %c0_i32 : i32, i32, i32
  }
}

</mosaic_0001>

<llo_original>
// kernel: tpu_custom_call.1
$region0: #{tpu_custom_call.1}
  #allocation0 [shape = 'u32[]', space=smem, size = 0x4, offset = 0x4, fixed_abs, tag = 'smem constant byte address 0x4 - core index']
  #allocation1 [shape = 'u32[144,128]{1,0:T(1,128)}', space=vmem, size = 0x12000, scoped, tag = 'internal scratch']
  %s0 = inlined_call_operand.hbm [shape: f32[8,128], index: 0, kind: input, shape index: {}]
  %s1 = inlined_call_operand.hbm [shape: f32[8,128], index: 1, kind: output, shape index: {}]
  %s2 = sld [smem:[#allocation0]]
  $region18: #{tpu_custom_call.1} parent=0
    _
  %s4 = ssub.s32 1, %s2
  %s5 = scalar_select 0, %s4, %s2
  $region1: #{tpu_custom_call.1} parent=0
    #allocation2 [shape = 'u8[4096]{0}', space=vmem, size = 0x1000, scoped, tag = 'input window, operand 0, single buffered']
    #allocation3 [shape = 's32[1]{0}', space=sflag, size = 0x4, scoped, tag = 'scoped memory for tpu_custom_call.1']
    #allocation4 [shape = 's32[1]{0}', space=sflag, size = 0x4, scoped, tag = 'scoped memory for tpu_custom_call.1']
    #allocation5 [shape = 'u8[4096]{0}', space=vmem, size = 0x1000, scoped, tag = 'output window, operand 0, single buffered']
    %6 = vsyncpa [#allocation3], 0
    %7 = vsyncpa [#allocation4], 0
    // Predicated region
    $region2: #{tpu_custom_call.1} parent=1 // pred_check
      _
    $region3: #{tpu_custom_call.1} parent=1 // pred_check_branch
      %9 = sbr.rel (0) target = $region5
    $region4: #{tpu_custom_call.1} parent=1 // pred_region
      %s11 = ssub.s32 128, 128
      %12 = vsyncadd [#allocation3], %s11
      %s14 = sshll.u32 [#allocation2], 4
      %s15 = int_to_ptr.vmem [resolvable:$true] %s14
      %17 = dma.hbm_to_vmem [thread:$0]  %s0, 128, %s15, [#allocation3]
    $region5: #{tpu_custom_call.1} parent=1 // pred_fallthru
      _
    // Predicated region
    $region6: #{tpu_custom_call.1} parent=1 // pred_check
      _
    $region7: #{tpu_custom_call.1} parent=1 // pred_check_branch
      %19 = sbr.rel (0) target = $region9
    $region8: #{tpu_custom_call.1} parent=1 // pred_region
      %20 = dma.done [#allocation3], 128
    $region9: #{tpu_custom_call.1} parent=1 // pred_fallthru
      _
    %v21 = vld [vmem:[#allocation2] sm:$0xff]
    %22 = vst [vmem:[#allocation5] sm:$0xff] %v21
    // Predicated region
    $region10: #{tpu_custom_call.1} parent=1 // pred_check
      _
    $region11: #{tpu_custom_call.1} parent=1 // pred_check_branch
      %24 = sbr.rel (0) target = $region13
    $region12: #{tpu_custom_call.1} parent=1 // pred_region
      %s26 = ssub.s32 128, 128
      %27 = vsyncadd [#allocation4], %s26
      %s29 = sshll.u32 [#allocation5], 4
      %s30 = int_to_ptr.vmem [resolvable:$true] %s29
      %32 = dma.vmem_to_hbm [thread:$0]  %s30, 128, %s1, [#allocation4]
    $region13: #{tpu_custom_call.1} parent=1 // pred_fallthru
      _
    // Predicated region
    $region14: #{tpu_custom_call.1} parent=1 // pred_check
      _
    $region15: #{tpu_custom_call.1} parent=1 // pred_check_branch
      %34 = sbr.rel (0) target = $region17
    $region16: #{tpu_custom_call.1} parent=1 // pred_region
      %35 = dma.done [#allocation4], 128
    $region17: #{tpu_custom_call.1} parent=1 // pred_fallthru
      _
    %36 = vsyncpa [#allocation3], 1
    %37 = vsyncpa [#allocation4], 1

// kernel: tpu_custom_call.1
$region0: #{tpu_custom_call.1}
  #allocation0 [shape = 'u32[]', space=smem, size = 0x4, offset = 0x4, fixed_abs, tag = 'smem constant byte address 0x4 - core index']
  #allocation1 [shape = 'u32[144,128]{1,0:T(1,128)}', space=vmem, size = 0x12000, scoped, tag = 'internal scratch']
  #allocation2 [shape = 'bf16[32,32]{1,0:T(8,128)(2,1)}', space=vmem, size = 0x2000, scoped, tag = 'scratch operand']
  #allocation3 [shape = 'bf16[32,32]{1,0:T(8,128)(2,1)}', space=vmem, size = 0x2000, scoped, tag = 'scratch operand']
  #allocation4 [shape = 'bf16[32,32]{1,0:T(8,128)(2,1)}', space=vmem, size = 0x2000, scoped, tag = 'scratch operand']
  %s0 = inlined_call_operand.hbm [shape: f32[2,32,32], index: 0, kind: input, shape index: {}]
  %s1 = inlined_call_operand.hbm [shape: f32[2,1,32], index: 1, kind: input, shape index: {}]
  %s2 = inlined_call_operand.hbm [shape: f32[1,32], index: 2, kind: input, shape index: {}]
  %s3 = inlined_call_operand.hbm [shape: f32[1,32], index: 3, kind: input, shape index: {}]
  %s4 = inlined_call_operand.vmem [shape: bf16[32,32], index: 4, kind: input, shape index: {}]
  %s5 = inlined_call_operand.vmem [shape: bf16[32,32], index: 5, kind: input, shape index: {}]
  %s6 = inlined_call_operand.vmem [shape: bf16[32,32], index: 6, kind: input, shape index: {}]
  %s7 = inlined_call_operand.hbm [shape: f32[1,32], index: 7, kind: input, shape index: {}]
  %s8 = inlined_call_operand.hbm [shape: f32[1,32], index: 8, kind: input, shape index: {}]
  %s9 = inlined_call_operand.hbm [shape: f32[1,32], index: 9, kind: input, shape index: {}]
  %s10 = inlined_call_operand.vmem [shape: bf16[32,32], index: 10, kind: input, shape index: {}]
  %s11 = inlined_call_operand.vmem [shape: f32[1,32], index: 11, kind: input, shape index: {}]
  %s12 = inlined_call_operand.vmem [shape: f32[1,32], index: 12, kind: input, shape index: {}]
  %s13 = inlined_call_operand.vmem [shape: f32[1,32], index: 13, kind: input, shape index: {}]
  %s14 = inlined_call_operand.hbm [shape: bf16[32,64], index: 14, kind: input, shape index: {}]
  %s15 = inlined_call_operand.vmem [shape: f32[1,64], index: 15, kind: input, shape index: {}]
  %s16 = inlined_call_operand.vmem [shape: bf16[64,32], index: 16, kind: input, shape index: {}]
  %s17 = inlined_call_operand.vmem [shape: f32[1,32], index: 17, kind: input, shape index: {}]
  %s18 = inlined_call_operand.vmem [shape: f32[1,32], index: 18, kind: input, shape index: {}]
  %s19 = inlined_call_operand.vmem [shape: f32[1,32], index: 19, kind: input, shape index: {}]
  %s20 = inlined_call_operand.hbm [shape: f32[2,32,32], index: 20, kind: output, shape index: {0}]
  %s21 = inlined_call_operand.hbm [shape: bf16[2,32,32], index: 21, kind: output, shape index: {1}]
  %22 = xla_tuple %s20, %s21
  %s23 = sld [smem:[#allocation0]]
  $region157: #{tpu_custom_call.1} parent=0
    _
  %s25 = ssub.s32 1, %s23
  %s26 = scalar_select 0, %s25, %s23
  $region1: #{tpu_custom_call.1} parent=0
    #allocation5 [shape = 'u8[32768]{0}', space=vmem, size = 0x8000, scoped, tag = 'input window, operand 0']
    #allocation6 [shape = 's32[2]{0}', space=sflag, size = 0x8, scoped, tag = 'scoped memory for tpu_custom_call.1']
    #allocation7 [shape = 's32[2]{0}', space=sflag, size = 0x8, scoped, tag = 'scoped memory for tpu_custom_call.1']
    #allocation8 [shape = 'u8[1024]{0}', space=vmem, size = 0x400, scoped, tag = 'input window, operand 1']
    #allocation9 [shape = 's32[2]{0}', space=sflag, size = 0x8, scoped, tag = 'scoped memory for tpu_custom_call.1']
    #allocation10 [shape = 'u8[512]{0}', space=vmem, size = 0x400, scoped, tag = 'input window, operand 2, single buffered']
    #allocation11 [shape = 'u8[512]{0}', space=vmem, size = 0x400, scoped, tag = 'input window, operand 3, single buffered']
    #allocation12 [shape = 's32[1]{0}', space=sflag, size = 0x4, scoped, tag = 'scoped memory for tpu_custom_call.1']
    #allocation13 [shape = 'u8[512]{0}', space=vmem, size = 0x400, scoped, tag = 'input window, operand 7, single buffered']
    #allocation14 [shape = 'u8[512]{0}', space=vmem, size = 0x400, scoped, tag = 'input window, operand 8, single buffered']
    #allocation15 [shape = 's32[1]{0}', space=sflag, size = 0x4, scoped, tag = 'scoped memory for tpu_custom_call.1']
    #allocation16 [shape = 'u8[512]{0}', space=vmem, size = 0x400, scoped, tag = 'input window, operand 9, single buffered']
    #allocation17 [shape = 'u8[8192]{0}', space=vmem, size = 0x2000, scoped, tag = 'input window, operand 14, single buffered']
    #allocation18 [shape = 's32[1]{0}', space=sflag, size = 0x4, scoped, tag = 'scoped memory for tpu_custom_call.1']
    #allocation19 [shape = 'u8[16384]{0}', space=vmem, size = 0x4000, scoped, tag = 'output window, operand 0']
    #allocation20 [shape = 'u8[8192]{0}', space=vmem, size = 0x2000, scoped, tag = 'output window, operand 1']
    #allocation21 [shape = 's32[2]{0}', space=sflag, size = 0x8, scoped, tag = 'scoped memory for tpu_custom_call.1']
    %27 = vsyncpa [#allocation6], 0
    %s28 = scalar_lea.sflag [#allocation6], 1
    %29 = vsyncpa %s28, 0
    %30 = vsyncpa [#allocation9], 0
    %s31 = scalar_lea.sflag [#allocation9], 1
    %32 = vsyncpa %s31, 0
    %33 = vsyncpa [#allocation12], 0
    %34 = vsyncpa [#allocation15], 0
    %35 = vsyncpa [#allocation18], 0
    %36 = vsyncpa [#allocation7], 0
    %s37 = scalar_lea.sflag [#allocation7], 1
    %38 = vsyncpa %s37, 0
    %39 = vsyncpa [#allocation21], 0
    %s40 = scalar_lea.sflag [#allocation21], 1
    %41 = vsyncpa %s40, 0
    loop: start=0, step=1, limit=6
    $region2: #{tpu_custom_call.1} parent=1 // loop_pre_header
      _
    $region3: #{tpu_custom_call.1} parent=1 // loop_header
      %s43 = sphi 0, %s47
      %p44 = scmp.ge.s32.totalorder %s43, 6
      %s50 = sphi 0, %s62
      %s51 = sphi 0, %s58
      %s52 = sphi 0, %s50
      %s53 = sphi 0, %s51
      %s54 = sphi 0, %s52
      %s55 = sphi 0, %s53
      %s65 = sphi 0, %s67
      %s68 = sphi 0, %s65
      %s69 = sphi 0, %s68
      %s85 = sphi 0, %s69
      %s91 = sphi 0, %s93
      %s94 = sphi 0, %s91
      %s95 = sphi 0, %s94
      %s111 = sphi 0, %s95
      %s115 = sphi 0, %s115
      %s117 = sphi 0, %s115
      %s118 = sphi 0, %s117
      %s132 = sphi 0, %s118
      %s136 = sphi 0, %s136
      %s138 = sphi 0, %s136
      %s139 = sphi 0, %s138
      %s153 = sphi 0, %s139
      %s157 = sphi 0, %s157
      %s159 = sphi 0, %s157
      %s160 = sphi 0, %s159
      %s174 = sphi 0, %s160
      %s178 = sphi 0, %s178
      %s180 = sphi 0, %s178
      %s181 = sphi 0, %s180
      %s195 = sphi 0, %s181
      %s199 = sphi 0, %s199
      %s201 = sphi 0, %s199
      %s202 = sphi 0, %s201
      %s216 = sphi 0, %s202
      %s220 = sphi 0, %s220
      %s222 = sphi 0, %s220
      %s223 = sphi 0, %s222
      %s237 = sphi 0, %s223
      %s241 = sphi 0, %s241
      %s243 = sphi 0, %s241
      %s244 = sphi 0, %s243
      %s258 = sphi 0, %s244
      %s262 = sphi 0, %s262
      %s264 = sphi 0, %s262
      %s265 = sphi 0, %s264
      %s279 = sphi 0, %s265
      %s283 = sphi 0, %s283
      %s285 = sphi 0, %s283
      %s286 = sphi 0, %s285
      %s300 = sphi 0, %s286
      %s304 = sphi 0, %s304
      %s306 = sphi 0, %s304
      %s307 = sphi 0, %s306
      %s321 = sphi 0, %s307
      %s325 = sphi 0, %s325
      %s327 = sphi 0, %s325
      %s328 = sphi 0, %s327
      %s342 = sphi 0, %s328
      %s346 = sphi 0, %s346
      %s348 = sphi 0, %s346
      %s349 = sphi 0, %s348
      %s363 = sphi 0, %s349
      %s367 = sphi 0, %s367
      %s369 = sphi 0, %s367
      %s370 = sphi 0, %s369
      %s384 = sphi 0, %s370
      %s388 = sphi 0, %s388
      %s390 = sphi 0, %s388
      %s391 = sphi 0, %s390
      %s405 = sphi 0, %s391
      %s409 = sphi 0, %s409
      %s411 = sphi 0, %s409
      %s412 = sphi 0, %s411
      %s426 = sphi 0, %s412
      %s430 = sphi 0, %s430
      %s432 = sphi 0, %s430
      %s433 = sphi 0, %s432
      %s447 = sphi 0, %s433
      %s451 = sphi 0, %s451
      %s453 = sphi 0, %s451
      %s454 = sphi 0, %s453
      %s468 = sphi 0, %s454
      %s472 = sphi 0, %s472
      %s474 = sphi 0, %s472
      %s475 = sphi 0, %s474
      %s489 = sphi 0, %s475
      %s497 = sphi 0, %s499
      %s500 = sphi 0, %s497
      %s501 = sphi 0, %s500
      %s517 = sphi 0, %s501
      %s525 = sphi 0, %s527
      %s528 = sphi 0, %s525
      %s529 = sphi 0, %s528
      %s545 = sphi 0, %s529
    $region4: #{tpu_custom_call.1} parent=1 // loop_header_branch
      %46 = sbr.rel (%p44) target = $region8
    $region5: #{tpu_custom_call.1} parent=1 // loop_body
      %s48 = ssub.s32 %s43, 1
      %s49 = ssub.s32 %s43, 2
      %s56 = sadd.s32 1, %s51
      %p57 = scmp.ge.s32.totalorder %s56, 2
      %s58 = scalar_select %p57, 0, %s56
      %s59 = sadd.s32 1, %s50
      %s60 = scalar_select %p57, %s59, %s50
      %p61 = scmp.ge.s32.totalorder %s60, 2
      %s62 = scalar_select %p61, 0, %s60
      %s63 = ssub.s32 %s50, %s62
      %p64 = scmp.eq.s32.totalorder %s63, 0
      %s66 = sadd.s32 %s65, 1
      %s67 = scalar_select %p64, %s65, %s66
      %p70 = pneg %p64
      %p71 = scmp.eq.s32.totalorder %s43, 3
      %p72 = por %p70, %p71
      %p73 = scmp.ne.s32.totalorder %s65, %s68
      %p74 = scmp.eq.s32.totalorder %s43, 0
      %p75 = por %p73, %p74
      %p76 = scmp.ne.s32.totalorder %s65, %s68
      %p77 = scmp.eq.s32.totalorder %s48, 3
      %p78 = por %p76, %p77
      %p79 = scmp.ne.s32.totalorder %s68, %s69
      %p80 = scmp.eq.s32.totalorder %s48, 0
      %p81 = por %p79, %p80
      %p82 = scmp.ne.s32.totalorder %s68, %s69
      %p83 = scmp.eq.s32.totalorder %s49, 3
      %p84 = por %p82, %p83
      %p86 = scmp.ne.s32.totalorder %s69, %s85
      %p87 = scmp.eq.s32.totalorder %s49, 0
      %p88 = por %p86, %p87
      %s89 = ssub.s32 %s50, %s62
      %p90 = scmp.eq.s32.totalorder %s89, 0
      %s92 = sadd.s32 %s91, 1
      %s93 = scalar_select %p90, %s91, %s92
      %p96 = pneg %p90
      %p97 = scmp.eq.s32.totalorder %s43, 3
      %p98 = por %p96, %p97
      %p99 = scmp.ne.s32.totalorder %s91, %s94
      %p100 = scmp.eq.s32.totalorder %s43, 0
      %p101 = por %p99, %p100
      %p102 = scmp.ne.s32.totalorder %s91, %s94
      %p103 = scmp.eq.s32.totalorder %s48, 3
      %p104 = por %p102, %p103
      %p105 = scmp.ne.s32.totalorder %s94, %s95
      %p106 = scmp.eq.s32.totalorder %s48, 0
      %p107 = por %p105, %p106
      %p108 = scmp.ne.s32.totalorder %s94, %s95
      %p109 = scmp.eq.s32.totalorder %s49, 3
      %p110 = por %p108, %p109
      %p112 = scmp.ne.s32.totalorder %s95, %s111
      %p113 = scmp.eq.s32.totalorder %s49, 0
      %p114 = por %p112, %p113
      %s116 = sadd.s32 %s115, 1
      %p119 = scmp.eq.s32.totalorder %s43, 3
      %p120 = scmp.ne.s32.totalorder %s115, %s117
      %p121 = scmp.eq.s32.totalorder %s43, 0
      %p122 = por %p120, %p121
      %p123 = scmp.ne.s32.totalorder %s115, %s117
      %p124 = scmp.eq.s32.totalorder %s48, 3
      %p125 = por %p123, %p124
      %p126 = scmp.ne.s32.totalorder %s117, %s118
      %p127 = scmp.eq.s32.totalorder %s48, 0
      %p128 = por %p126, %p127
      %p129 = scmp.ne.s32.totalorder %s117, %s118
      %p130 = scmp.eq.s32.totalorder %s49, 3
      %p131 = por %p129, %p130
      %p133 = scmp.ne.s32.totalorder %s118, %s132
      %p134 = scmp.eq.s32.totalorder %s49, 0
      %p135 = por %p133, %p134
      %s137 = sadd.s32 %s136, 1
      %p140 = scmp.eq.s32.totalorder %s43, 3
      %p141 = scmp.ne.s32.totalorder %s136, %s138
      %p142 = scmp.eq.s32.totalorder %s43, 0
      %p143 = por %p141, %p142
      %p144 = scmp.ne.s32.totalorder %s136, %s138
      %p145 = scmp.eq.s32.totalorder %s48, 3
      %p146 = por %p144, %p145
      %p147 = scmp.ne.s32.totalorder %s138, %s139
      %p148 = scmp.eq.s32.totalorder %s48, 0
      %p149 = por %p147, %p148
      %p150 = scmp.ne.s32.totalorder %s138, %s139
      %p151 = scmp.eq.s32.totalorder %s49, 3
      %p152 = por %p150, %p151
      %p154 = scmp.ne.s32.totalorder %s139, %s153
      %p155 = scmp.eq.s32.totalorder %s49, 0
      %p156 = por %p154, %p155
      %s158 = sadd.s32 %s157, 1
      %p161 = scmp.eq.s32.totalorder %s43, 3
      %p162 = scmp.ne.s32.totalorder %s157, %s159
      %p163 = scmp.eq.s32.totalorder %s43, 0
      %p164 = por %p162, %p163
      %p165 = scmp.ne.s32.totalorder %s157, %s159
      %p166 = scmp.eq.s32.totalorder %s48, 3
      %p167 = por %p165, %p166
      %p168 = scmp.ne.s32.totalorder %s159, %s160
      %p169 = scmp.eq.s32.totalorder %s48, 0
      %p170 = por %p168, %p169
      %p171 = scmp.ne.s32.totalorder %s159, %s160
      %p172 = scmp.eq.s32.totalorder %s49, 3
      %p173 = por %p171, %p172
      %p175 = scmp.ne.s32.totalorder %s160, %s174
      %p176 = scmp.eq.s32.totalorder %s49, 0
      %p177 = por %p175, %p176
      %s179 = sadd.s32 %s178, 1
      %p182 = scmp.eq.s32.totalorder %s43, 3
      %p183 = scmp.ne.s32.totalorder %s178, %s180
      %p184 = scmp.eq.s32.totalorder %s43, 0
      %p185 = por %p183, %p184
      %p186 = scmp.ne.s32.totalorder %s178, %s180
      %p187 = scmp.eq.s32.totalorder %s48, 3
      %p188 = por %p186, %p187
      %p189 = scmp.ne.s32.totalorder %s180, %s181
      %p190 = scmp.eq.s32.totalorder %s48, 0
      %p191 = por %p189, %p190
      %p192 = scmp.ne.s32.totalorder %s180, %s181
      %p193 = scmp.eq.s32.totalorder %s49, 3
      %p194 = por %p192, %p193
      %p196 = scmp.ne.s32.totalorder %s181, %s195
      %p197 = scmp.eq.s32.totalorder %s49, 0
      %p198 = por %p196, %p197
      %s200 = sadd.s32 %s199, 1
      %p203 = scmp.eq.s32.totalorder %s43, 3
      %p204 = scmp.ne.s32.totalorder %s199, %s201
      %p205 = scmp.eq.s32.totalorder %s43, 0
      %p206 = por %p204, %p205
      %p207 = scmp.ne.s32.totalorder %s199, %s201
      %p208 = scmp.eq.s32.totalorder %s48, 3
      %p209 = por %p207, %p208
      %p210 = scmp.ne.s32.totalorder %s201, %s202
      %p211 = scmp.eq.s32.totalorder %s48, 0
      %p212 = por %p210, %p211
      %p213 = scmp.ne.s32.totalorder %s201, %s202
      %p214 = scmp.eq.s32.totalorder %s49, 3
      %p215 = por %p213, %p214
      %p217 = scmp.ne.s32.totalorder %s202, %s216
      %p218 = scmp.eq.s32.totalorder %s49, 0
      %p219 = por %p217, %p218
      %s221 = sadd.s32 %s220, 1
      %p224 = scmp.eq.s32.totalorder %s43, 3
      %p225 = scmp.ne.s32.totalorder %s220, %s222
      %p226 = scmp.eq.s32.totalorder %s43, 0
      %p227 = por %p225, %p226
      %p228 = scmp.ne.s32.totalorder %s220, %s222
      %p229 = scmp.eq.s32.totalorder %s48, 3
      %p230 = por %p228, %p229
      %p231 = scmp.ne.s32.totalorder %s222, %s223
      %p232 = scmp.eq.s32.totalorder %s48, 0
      %p233 = por %p231, %p232
      %p234 = scmp.ne.s32.totalorder %s222, %s223
      %p235 = scmp.eq.s32.totalorder %s49, 3
      %p236 = por %p234, %p235
      %p238 = scmp.ne.s32.totalorder %s223, %s237
      %p239 = scmp.eq.s32.totalorder %s49, 0
      %p240 = por %p238, %p239
      %s242 = sadd.s32 %s241, 1
      %p245 = scmp.eq.s32.totalorder %s43, 3
      %p246 = scmp.ne.s32.totalorder %s241, %s243
      %p247 = scmp.eq.s32.totalorder %s43, 0
      %p248 = por %p246, %p247
      %p249 = scmp.ne.s32.totalorder %s241, %s243
      %p250 = scmp.eq.s32.totalorder %s48, 3
      %p251 = por %p249, %p250
      %p252 = scmp.ne.s32.totalorder %s243, %s244
      %p253 = scmp.eq.s32.totalorder %s48, 0
      %p254 = por %p252, %p253
      %p255 = scmp.ne.s32.totalorder %s243, %s244
      %p256 = scmp.eq.s32.totalorder %s49, 3
      %p257 = por %p255, %p256
      %p259 = scmp.ne.s32.totalorder %s244, %s258
      %p260 = scmp.eq.s32.totalorder %s49, 0
      %p261 = por %p259, %p260
      %s263 = sadd.s32 %s262, 1
      %p266 = scmp.eq.s32.totalorder %s43, 3
      %p267 = scmp.ne.s32.totalorder %s262, %s264
      %p268 = scmp.eq.s32.totalorder %s43, 0
      %p269 = por %p267, %p268
      %p270 = scmp.ne.s32.totalorder %s262, %s264
      %p271 = scmp.eq.s32.totalorder %s48, 3
      %p272 = por %p270, %p271
      %p273 = scmp.ne.s32.totalorder %s264, %s265
      %p274 = scmp.eq.s32.totalorder %s48, 0
      %p275 = por %p273, %p274
      %p276 = scmp.ne.s32.totalorder %s264, %s265
      %p277 = scmp.eq.s32.totalorder %s49, 3
      %p278 = por %p276, %p277
      %p280 = scmp.ne.s32.totalorder %s265, %s279
      %p281 = scmp.eq.s32.totalorder %s49, 0
      %p282 = por %p280, %p281
      %s284 = sadd.s32 %s283, 1
      %p287 = scmp.eq.s32.totalorder %s43, 3
      %p288 = scmp.ne.s32.totalorder %s283, %s285
      %p289 = scmp.eq.s32.totalorder %s43, 0
      %p290 = por %p288, %p289
      %p291 = scmp.ne.s32.totalorder %s283, %s285
      %p292 = scmp.eq.s32.totalorder %s48, 3
      %p293 = por %p291, %p292
      %p294 = scmp.ne.s32.totalorder %s285, %s286
      %p295 = scmp.eq.s32.totalorder %s48, 0
      %p296 = por %p294, %p295
      %p297 = scmp.ne.s32.totalorder %s285, %s286
      %p298 = scmp.eq.s32.totalorder %s49, 3
      %p299 = por %p297, %p298
      %p301 = scmp.ne.s32.totalorder %s286, %s300
      %p302 = scmp.eq.s32.totalorder %s49, 0
      %p303 = por %p301, %p302
      %s305 = sadd.s32 %s304, 1
      %p308 = scmp.eq.s32.totalorder %s43, 3
      %p309 = scmp.ne.s32.totalorder %s304, %s306
      %p310 = scmp.eq.s32.totalorder %s43, 0
      %p311 = por %p309, %p310
      %p312 = scmp.ne.s32.totalorder %s304, %s306
      %p313 = scmp.eq.s32.totalorder %s48, 3
      %p314 = por %p312, %p313
      %p315 = scmp.ne.s32.totalorder %s306, %s307
      %p316 = scmp.eq.s32.totalorder %s48, 0
      %p317 = por %p315, %p316
      %p318 = scmp.ne.s32.totalorder %s306, %s307
      %p319 = scmp.eq.s32.totalorder %s49, 3
      %p320 = por %p318, %p319
      %p322 = scmp.ne.s32.totalorder %s307, %s321
      %p323 = scmp.eq.s32.totalorder %s49, 0
      %p324 = por %p322, %p323
      %s326 = sadd.s32 %s325, 1
      %p329 = scmp.eq.s32.totalorder %s43, 3
      %p330 = scmp.ne.s32.totalorder %s325, %s327
      %p331 = scmp.eq.s32.totalorder %s43, 0
      %p332 = por %p330, %p331
      %p333 = scmp.ne.s32.totalorder %s325, %s327
      %p334 = scmp.eq.s32.totalorder %s48, 3
      %p335 = por %p333, %p334
      %p336 = scmp.ne.s32.totalorder %s327, %s328
      %p337 = scmp.eq.s32.totalorder %s48, 0
      %p338 = por %p336, %p337
      %p339 = scmp.ne.s32.totalorder %s327, %s328
      %p340 = scmp.eq.s32.totalorder %s49, 3
      %p341 = por %p339, %p340
      %p343 = scmp.ne.s32.totalorder %s328, %s342
      %p344 = scmp.eq.s32.totalorder %s49, 0
      %p345 = por %p343, %p344
      %s347 = sadd.s32 %s346, 1
      %p350 = scmp.eq.s32.totalorder %s43, 3
      %p351 = scmp.ne.s32.totalorder %s346, %s348
      %p352 = scmp.eq.s32.totalorder %s43, 0
      %p353 = por %p351, %p352
      %p354 = scmp.ne.s32.totalorder %s346, %s348
      %p355 = scmp.eq.s32.totalorder %s48, 3
      %p356 = por %p354, %p355
      %p357 = scmp.ne.s32.totalorder %s348, %s349
      %p358 = scmp.eq.s32.totalorder %s48, 0
      %p359 = por %p357, %p358
      %p360 = scmp.ne.s32.totalorder %s348, %s349
      %p361 = scmp.eq.s32.totalorder %s49, 3
      %p362 = por %p360, %p361
      %p364 = scmp.ne.s32.totalorder %s349, %s363
      %p365 = scmp.eq.s32.totalorder %s49, 0
      %p366 = por %p364, %p365
      %s368 = sadd.s32 %s367, 1
      %p371 = scmp.eq.s32.totalorder %s43, 3
      %p372 = scmp.ne.s32.totalorder %s367, %s369
      %p373 = scmp.eq.s32.totalorder %s43, 0
      %p374 = por %p372, %p373
      %p375 = scmp.ne.s32.totalorder %s367, %s369
      %p376 = scmp.eq.s32.totalorder %s48, 3
      %p377 = por %p375, %p376
      %p378 = scmp.ne.s32.totalorder %s369, %s370
      %p379 = scmp.eq.s32.totalorder %s48, 0
      %p380 = por %p378, %p379
      %p381 = scmp.ne.s32.totalorder %s369, %s370
      %p382 = scmp.eq.s32.totalorder %s49, 3
      %p383 = por %p381, %p382
      %p385 = scmp.ne.s32.totalorder %s370, %s384
      %p386 = scmp.eq.s32.totalorder %s49, 0
      %p387 = por %p385, %p386
      %s389 = sadd.s32 %s388, 1
      %p392 = scmp.eq.s32.totalorder %s43, 3
      %p393 = scmp.ne.s32.totalorder %s388, %s390
      %p394 = scmp.eq.s32.totalorder %s43, 0
      %p395 = por %p393, %p394
      %p396 = scmp.ne.s32.totalorder %s388, %s390
      %p397 = scmp.eq.s32.totalorder %s48, 3
      %p398 = por %p396, %p397
      %p399 = scmp.ne.s32.totalorder %s390, %s391
      %p400 = scmp.eq.s32.totalorder %s48, 0
      %p401 = por %p399, %p400
      %p402 = scmp.ne.s32.totalorder %s390, %s391
      %p403 = scmp.eq.s32.totalorder %s49, 3
      %p404 = por %p402, %p403
      %p406 = scmp.ne.s32.totalorder %s391, %s405
      %p407 = scmp.eq.s32.totalorder %s49, 0
      %p408 = por %p406, %p407
      %s410 = sadd.s32 %s409, 1
      %p413 = scmp.eq.s32.totalorder %s43, 3
      %p414 = scmp.ne.s32.totalorder %s409, %s411
      %p415 = scmp.eq.s32.totalorder %s43, 0
      %p416 = por %p414, %p415
      %p417 = scmp.ne.s32.totalorder %s409, %s411
      %p418 = scmp.eq.s32.totalorder %s48, 3
      %p419 = por %p417, %p418
      %p420 = scmp.ne.s32.totalorder %s411, %s412
      %p421 = scmp.eq.s32.totalorder %s48, 0
      %p422 = por %p420, %p421
      %p423 = scmp.ne.s32.totalorder %s411, %s412
      %p424 = scmp.eq.s32.totalorder %s49, 3
      %p425 = por %p423, %p424
      %p427 = scmp.ne.s32.totalorder %s412, %s426
      %p428 = scmp.eq.s32.totalorder %s49, 0
      %p429 = por %p427, %p428
      %s431 = sadd.s32 %s430, 1
      %p434 = scmp.eq.s32.totalorder %s43, 3
      %p435 = scmp.ne.s32.totalorder %s430, %s432
      %p436 = scmp.eq.s32.totalorder %s43, 0
      %p437 = por %p435, %p436
      %p438 = scmp.ne.s32.totalorder %s430, %s432
      %p439 = scmp.eq.s32.totalorder %s48, 3
      %p440 = por %p438, %p439
      %p441 = scmp.ne.s32.totalorder %s432, %s433
      %p442 = scmp.eq.s32.totalorder %s48, 0
      %p443 = por %p441, %p442
      %p444 = scmp.ne.s32.totalorder %s432, %s433
      %p445 = scmp.eq.s32.totalorder %s49, 3
      %p446 = por %p444, %p445
      %p448 = scmp.ne.s32.totalorder %s433, %s447
      %p449 = scmp.eq.s32.totalorder %s49, 0
      %p450 = por %p448, %p449
      %s452 = sadd.s32 %s451, 1
      %p455 = scmp.eq.s32.totalorder %s43, 3
      %p456 = scmp.ne.s32.totalorder %s451, %s453
      %p457 = scmp.eq.s32.totalorder %s43, 0
      %p458 = por %p456, %p457
      %p459 = scmp.ne.s32.totalorder %s451, %s453
      %p460 = scmp.eq.s32.totalorder %s48, 3
      %p461 = por %p459, %p460
      %p462 = scmp.ne.s32.totalorder %s453, %s454
      %p463 = scmp.eq.s32.totalorder %s48, 0
      %p464 = por %p462, %p463
      %p465 = scmp.ne.s32.totalorder %s453, %s454
      %p466 = scmp.eq.s32.totalorder %s49, 3
      %p467 = por %p465, %p466
      %p469 = scmp.ne.s32.totalorder %s454, %s468
      %p470 = scmp.eq.s32.totalorder %s49, 0
      %p471 = por %p469, %p470
      %s473 = sadd.s32 %s472, 1
      %p476 = scmp.eq.s32.totalorder %s43, 3
      %p477 = scmp.ne.s32.totalorder %s472, %s474
      %p478 = scmp.eq.s32.totalorder %s43, 0
      %p479 = por %p477, %p478
      %p480 = scmp.ne.s32.totalorder %s472, %s474
      %p481 = scmp.eq.s32.totalorder %s48, 3
      %p482 = por %p480, %p481
      %p483 = scmp.ne.s32.totalorder %s474, %s475
      %p484 = scmp.eq.s32.totalorder %s48, 0
      %p485 = por %p483, %p484
      %p486 = scmp.ne.s32.totalorder %s474, %s475
      %p487 = scmp.eq.s32.totalorder %s49, 3
      %p488 = por %p486, %p487
      %p490 = scmp.ne.s32.totalorder %s475, %s489
      %p491 = scmp.eq.s32.totalorder %s49, 0
      %p492 = por %p490, %p491
      %s493 = ssub.s32 %s50, %s62
      %s494 = ssub.s32 %s51, %s58
      %s495 = sor.u32 %s493, %s494
      %p496 = scmp.eq.s32.totalorder %s495, 0
      %s498 = sadd.s32 %s497, 1
      %s499 = scalar_select %p496, %s497, %s498
      %p502 = pneg %p496
      %p503 = scmp.eq.s32.totalorder %s43, 3
      %p504 = por %p502, %p503
      %p505 = scmp.ne.s32.totalorder %s497, %s500
      %p506 = scmp.eq.s32.totalorder %s43, 0
      %p507 = por %p505, %p506
      %p508 = scmp.ne.s32.totalorder %s497, %s500
      %p509 = scmp.eq.s32.totalorder %s48, 3
      %p510 = por %p508, %p509
      %p511 = scmp.ne.s32.totalorder %s500, %s501
      %p512 = scmp.eq.s32.totalorder %s48, 0
      %p513 = por %p511, %p512
      %p514 = scmp.ne.s32.totalorder %s500, %s501
      %p515 = scmp.eq.s32.totalorder %s49, 3
      %p516 = por %p514, %p515
      %p518 = scmp.ne.s32.totalorder %s501, %s517
      %p519 = scmp.eq.s32.totalorder %s49, 0
      %p520 = por %p518, %p519
      %s521 = ssub.s32 %s50, %s62
      %s522 = ssub.s32 %s51, %s58
      %s523 = sor.u32 %s521, %s522
      %p524 = scmp.eq.s32.totalorder %s523, 0
      %s526 = sadd.s32 %s525, 1
      %s527 = scalar_select %p524, %s525, %s526
      %p530 = pneg %p524
      %p531 = scmp.eq.s32.totalorder %s43, 3
      %p532 = por %p530, %p531
      %p533 = scmp.ne.s32.totalorder %s525, %s528
      %p534 = scmp.eq.s32.totalorder %s43, 0
      %p535 = por %p533, %p534
      %p536 = scmp.ne.s32.totalorder %s525, %s528
      %p537 = scmp.eq.s32.totalorder %s48, 3
      %p538 = por %p536, %p537
      %p539 = scmp.ne.s32.totalorder %s528, %s529
      %p540 = scmp.eq.s32.totalorder %s48, 0
      %p541 = por %p539, %p540
      %p542 = scmp.ne.s32.totalorder %s528, %s529
      %p543 = scmp.eq.s32.totalorder %s49, 3
      %p544 = por %p542, %p543
      %p546 = scmp.ne.s32.totalorder %s529, %s545
      %p547 = scmp.eq.s32.totalorder %s49, 0
      %p548 = por %p546, %p547
      %p549 = scmp.le.s32.totalorder 1, %s43
      %p550 = scmp.lt.s32.totalorder %s43, 5
      %p551 = pnand %p549, %p550
      %p552 = pneg %p551
      // Predicated region
      $region9: #{tpu_custom_call.1} parent=5 // pred_check
        _
      $region10: #{tpu_custom_call.1} parent=5 // pred_check_branch
        %554 = sbr.rel (%p551) target = $region12
      $region11: #{tpu_custom_call.1} parent=5 // pred_region
        %s555 = ssub.s32 %s43, 1
        // Predicated region
        $region13: #{tpu_custom_call.1} parent=11 // pred_check
          %p556 = pneg %p128
        $region14: #{tpu_custom_call.1} parent=11 // pred_check_branch
          %558 = sbr.rel (%p556) target = $region16
        $region15: #{tpu_custom_call.1} parent=11 // pred_region
          %s560 = ssub.s32 16, 16
          %561 = vsyncadd [#allocation9], %s560
          %s563 = sshll.u32 [#allocation10], 4
          %s564 = int_to_ptr.vmem [resolvable:$true] %s563
          %566 = dma.hbm_to_vmem [thread:$0]  %s2, 16, %s564, [#allocation9]
        $region16: #{tpu_custom_call.1} parent=11 // pred_fallthru
          _
        // Predicated region
        $region17: #{tpu_custom_call.1} parent=11 // pred_check
          %p567 = pneg %p149
        $region18: #{tpu_custom_call.1} parent=11 // pred_check_branch
          %569 = sbr.rel (%p567) target = $region20
        $region19: #{tpu_custom_call.1} parent=11 // pred_region
          %s571 = ssub.s32 16, 16
          %572 = vsyncadd [#allocation12], %s571
          %s574 = sshll.u32 [#allocation11], 4
          %s575 = int_to_ptr.vmem [resolvable:$true] %s574
          %577 = dma.hbm_to_vmem [thread:$0]  %s3, 16, %s575, [#allocation12]
        $region20: #{tpu_custom_call.1} parent=11 // pred_fallthru
          _
        // Predicated region
        $region21: #{tpu_custom_call.1} parent=11 // pred_check
          %p578 = pneg %p170
        $region22: #{tpu_custom_call.1} parent=11 // pred_check_branch
          %580 = sbr.rel (%p578) target = $region24
        $region23: #{tpu_custom_call.1} parent=11 // pred_region
          _
        $region24: #{tpu_custom_call.1} parent=11 // pred_fallthru
          _
        // Predicated region
        $region25: #{tpu_custom_call.1} parent=11 // pred_check
          %p581 = pneg %p191
        $region26: #{tpu_custom_call.1} parent=11 // pred_check_branch
          %583 = sbr.rel (%p581) target = $region28
        $region27: #{tpu_custom_call.1} parent=11 // pred_region
          _
        $region28: #{tpu_custom_call.1} parent=11 // pred_fallthru
          _
        // Predicated region
        $region29: #{tpu_custom_call.1} parent=11 // pred_check
          %p584 = pneg %p212
        $region30: #{tpu_custom_call.1} parent=11 // pred_check_branch
          %586 = sbr.rel (%p584) target = $region32
        $region31: #{tpu_custom_call.1} parent=11 // pred_region
          _
        $region32: #{tpu_custom_call.1} parent=11 // pred_fallthru
          _
        // Predicated region
        $region33: #{tpu_custom_call.1} parent=11 // pred_check
          %p587 = pneg %p233
        $region34: #{tpu_custom_call.1} parent=11 // pred_check_branch
          %589 = sbr.rel (%p587) target = $region36
        $region35: #{tpu_custom_call.1} parent=11 // pred_region
          %s591 = ssub.s32 16, 16
          %592 = vsyncadd [#allocation12], %s591
          %s594 = sshll.u32 [#allocation13], 4
          %s595 = int_to_ptr.vmem [resolvable:$true] %s594
          %597 = dma.hbm_to_vmem [thread:$0]  %s7, 16, %s595, [#allocation12]
        $region36: #{tpu_custom_call.1} parent=11 // pred_fallthru
          _
        // Predicated region
        $region37: #{tpu_custom_call.1} parent=11 // pred_check
          %p598 = pneg %p254
        $region38: #{tpu_custom_call.1} parent=11 // pred_check_branch
          %600 = sbr.rel (%p598) target = $region40
        $region39: #{tpu_custom_call.1} parent=11 // pred_region
          %s602 = ssub.s32 16, 16
          %603 = vsyncadd [#allocation15], %s602
          %s605 = sshll.u32 [#allocation14], 4
          %s606 = int_to_ptr.vmem [resolvable:$true] %s605
          %608 = dma.hbm_to_vmem [thread:$0]  %s8, 16, %s606, [#allocation15]
        $region40: #{tpu_custom_call.1} parent=11 // pred_fallthru
          _
        // Predicated region
        $region41: #{tpu_custom_call.1} parent=11 // pred_check
          %p609 = pneg %p275
        $region42: #{tpu_custom_call.1} parent=11 // pred_check_branch
          %611 = sbr.rel (%p609) target = $region44
        $region43: #{tpu_custom_call.1} parent=11 // pred_region
          %s613 = ssub.s32 16, 16
          %614 = vsyncadd [#allocation15], %s613
          %s616 = sshll.u32 [#allocation16], 4
          %s617 = int_to_ptr.vmem [resolvable:$true] %s616
          %619 = dma.hbm_to_vmem [thread:$0]  %s9, 16, %s617, [#allocation15]
        $region44: #{tpu_custom_call.1} parent=11 // pred_fallthru
          _
        // Predicated region
        $region45: #{tpu_custom_call.1} parent=11 // pred_check
          %p620 = pneg %p296
        $region46: #{tpu_custom_call.1} parent=11 // pred_check_branch
          %622 = sbr.rel (%p620) target = $region48
        $region47: #{tpu_custom_call.1} parent=11 // pred_region
          _
        $region48: #{tpu_custom_call.1} parent=11 // pred_fallthru
          _
        // Predicated region
        $region49: #{tpu_custom_call.1} parent=11 // pred_check
          %p623 = pneg %p317
        $region50: #{tpu_custom_call.1} parent=11 // pred_check_branch
          %625 = sbr.rel (%p623) target = $region52
        $region51: #{tpu_custom_call.1} parent=11 // pred_region
          _
        $region52: #{tpu_custom_call.1} parent=11 // pred_fallthru
          _
        // Predicated region
        $region53: #{tpu_custom_call.1} parent=11 // pred_check
          %p626 = pneg %p338
        $region54: #{tpu_custom_call.1} parent=11 // pred_check_branch
          %628 = sbr.rel (%p626) target = $region56
        $region55: #{tpu_custom_call.1} parent=11 // pred_region
          _
        $region56: #{tpu_custom_call.1} parent=11 // pred_fallthru
          _
        // Predicated region
        $region57: #{tpu_custom_call.1} parent=11 // pred_check
          %p629 = pneg %p359
        $region58: #{tpu_custom_call.1} parent=11 // pred_check_branch
          %631 = sbr.rel (%p629) target = $region60
        $region59: #{tpu_custom_call.1} parent=11 // pred_region
          _
        $region60: #{tpu_custom_call.1} parent=11 // pred_fallthru
          _
        // Predicated region
        $region61: #{tpu_custom_call.1} parent=11 // pred_check
          %p632 = pneg %p380
        $region62: #{tpu_custom_call.1} parent=11 // pred_check_branch
          %634 = sbr.rel (%p632) target = $region64
        $region63: #{tpu_custom_call.1} parent=11 // pred_region
          %s636 = ssub.s32 256, 256
          %637 = vsyncadd [#allocation18], %s636
          %s638 = sshll.u32 [#allocation17], 4
          %s639 = int_to_ptr.vmem [resolvable:$true] %s638
          %644 = dma.hbm_to_vmem [thread:$0]  %s14, 256, %s639, [#allocation18], 64, 64, 4
        $region64: #{tpu_custom_call.1} parent=11 // pred_fallthru
          _
        // Predicated region
        $region65: #{tpu_custom_call.1} parent=11 // pred_check
          %p645 = pneg %p401
        $region66: #{tpu_custom_call.1} parent=11 // pred_check_branch
          %647 = sbr.rel (%p645) target = $region68
        $region67: #{tpu_custom_call.1} parent=11 // pred_region
          _
        $region68: #{tpu_custom_call.1} parent=11 // pred_fallthru
          _
        // Predicated region
        $region69: #{tpu_custom_call.1} parent=11 // pred_check
          %p648 = pneg %p422
        $region70: #{tpu_custom_call.1} parent=11 // pred_check_branch
          %650 = sbr.rel (%p648) target = $region72
        $region71: #{tpu_custom_call.1} parent=11 // pred_region
          _
        $region72: #{tpu_custom_call.1} parent=11 // pred_fallthru
          _
        // Predicated region
        $region73: #{tpu_custom_call.1} parent=11 // pred_check
          %p651 = pneg %p443
        $region74: #{tpu_custom_call.1} parent=11 // pred_check_branch
          %653 = sbr.rel (%p651) target = $region76
        $region75: #{tpu_custom_call.1} parent=11 // pred_region
          _
        $region76: #{tpu_custom_call.1} parent=11 // pred_fallthru
          _
        // Predicated region
        $region77: #{tpu_custom_call.1} parent=11 // pred_check
          %p654 = pneg %p464
        $region78: #{tpu_custom_call.1} parent=11 // pred_check_branch
          %656 = sbr.rel (%p654) target = $region80
        $region79: #{tpu_custom_call.1} parent=11 // pred_region
          _
        $region80: #{tpu_custom_call.1} parent=11 // pred_fallthru
          _
        // Predicated region
        $region81: #{tpu_custom_call.1} parent=11 // pred_check
          %p657 = pneg %p485
        $region82: #{tpu_custom_call.1} parent=11 // pred_check_branch
          %659 = sbr.rel (%p657) target = $region84
        $region83: #{tpu_custom_call.1} parent=11 // pred_region
          _
        $region84: #{tpu_custom_call.1} parent=11 // pred_fallthru
          _
      $region12: #{tpu_custom_call.1} parent=5 // pred_fallthru
        _
      %p660 = scmp.lt.s32.totalorder %s43, 4
      // Predicated region
      $region85: #{tpu_custom_call.1} parent=5 // pred_check
        %p661 = pneg %p660
      $region86: #{tpu_custom_call.1} parent=5 // pred_check_branch
        %663 = sbr.rel (%p661) target = $region88
      $region87: #{tpu_custom_call.1} parent=5 // pred_region
        // Predicated region
        $region89: #{tpu_custom_call.1} parent=87 // pred_check
          %p664 = pneg %p75
        $region90: #{tpu_custom_call.1} parent=87 // pred_check_branch
          %666 = sbr.rel (%p664) target = $region92
        $region91: #{tpu_custom_call.1} parent=87 // pred_region
          %s667 = sand.u32 %s65, 1
          %s668 = scalar_lea.sflag [#allocation6], %s667
          %s669 = sand.u32 %s65, 1
          %s670 = smul.addr %s669, 32
          %s671 = scalar_lea.vmem [#allocation5], %s670
          %s673 = ssub.s32 512, 512
          %674 = vsyncadd %s668, %s673
          %s675 = smul.addr %s50, 4
          %s676 = smul.addr %s675, 128
          %s677 = scalar_lea.hbm %s0, %s676
          %s678 = sshll.u32 %s671, 4
          %s679 = int_to_ptr.vmem [resolvable:$true] %s678
          %684 = dma.hbm_to_vmem [thread:$0]  %s677, 512, %s679, %s668, 128, 128, 8
        $region92: #{tpu_custom_call.1} parent=87 // pred_fallthru
          _
        // Predicated region
        $region93: #{tpu_custom_call.1} parent=87 // pred_check
          %p685 = pneg %p101
        $region94: #{tpu_custom_call.1} parent=87 // pred_check_branch
          %687 = sbr.rel (%p685) target = $region96
        $region95: #{tpu_custom_call.1} parent=87 // pred_region
          %s688 = sand.u32 %s43, 1
          %s689 = scalar_lea.sflag [#allocation9], %s688
          %s690 = sand.u32 %s91, 1
          %s691 = scalar_lea.vmem [#allocation8], %s690
          %s693 = ssub.s32 16, 16
          %694 = vsyncadd %s689, %s693
          %s695 = smul.addr %s50, 16
          %s696 = scalar_lea.hbm %s1, %s695
          %s698 = sshll.u32 %s691, 4
          %s699 = int_to_ptr.vmem [resolvable:$true] %s698
          %701 = dma.hbm_to_vmem [thread:$0]  %s696, 16, %s699, %s689
        $region96: #{tpu_custom_call.1} parent=87 // pred_fallthru
          _
      $region88: #{tpu_custom_call.1} parent=5 // pred_fallthru
        _
      %p702 = scmp.le.s32.totalorder 1, %s43
      %p703 = scmp.lt.s32.totalorder %s43, 5
      %p704 = pnand %p702, %p703
      %p705 = pneg %p704
      // Predicated region
      $region97: #{tpu_custom_call.1} parent=5 // pred_check
        _
      $region98: #{tpu_custom_call.1} parent=5 // pred_check_branch
        %707 = sbr.rel (%p704) target = $region100
      $region99: #{tpu_custom_call.1} parent=5 // pred_region
        %s708 = ssub.s32 %s43, 1
        %s709 = sand.u32 %s68, 1
        %s710 = scalar_lea.sflag [#allocation6], %s709
        %s711 = sand.u32 %s68, 1
        %s712 = smul.addr %s711, 32
        %s713 = scalar_lea.vmem [#allocation5], %s712
        // Predicated region
        $region101: #{tpu_custom_call.1} parent=99 // pred_check
          %p714 = pneg %p81
        $region102: #{tpu_custom_call.1} parent=99 // pred_check_branch
          %716 = sbr.rel (%p714) target = $region104
        $region103: #{tpu_custom_call.1} parent=99 // pred_region
          %717 = dma.done %s710, 512
        $region104: #{tpu_custom_call.1} parent=99 // pred_fallthru
          _
        %s718 = sand.u32 %s48, 1
        %s719 = scalar_lea.sflag [#allocation9], %s718
        %s720 = sand.u32 %s94, 1
        %s721 = scalar_lea.vmem [#allocation8], %s720
        // Predicated region
        $region105: #{tpu_custom_call.1} parent=99 // pred_check
          %p722 = pneg %p107
        $region106: #{tpu_custom_call.1} parent=99 // pred_check_branch
          %724 = sbr.rel (%p722) target = $region108
        $region107: #{tpu_custom_call.1} parent=99 // pred_region
          %725 = dma.done %s719, 16
        $region108: #{tpu_custom_call.1} parent=99 // pred_fallthru
          _
        // Predicated region
        $region109: #{tpu_custom_call.1} parent=99 // pred_check
          %p726 = pneg %p128
        $region110: #{tpu_custom_call.1} parent=99 // pred_check_branch
          %728 = sbr.rel (%p726) target = $region112
        $region111: #{tpu_custom_call.1} parent=99 // pred_region
          %729 = dma.done [#allocation9], 16
        $region112: #{tpu_custom_call.1} parent=99 // pred_fallthru
          _
        // Predicated region
        $region113: #{tpu_custom_call.1} parent=99 // pred_check
          %p730 = pneg %p149
        $region114: #{tpu_custom_call.1} parent=99 // pred_check_branch
          %732 = sbr.rel (%p730) target = $region116
        $region115: #{tpu_custom_call.1} parent=99 // pred_region
          %733 = dma.done [#allocation12], 16
        $region116: #{tpu_custom_call.1} parent=99 // pred_fallthru
          _
        // Predicated region
        $region117: #{tpu_custom_call.1} parent=99 // pred_check
          %p734 = pneg %p233
        $region118: #{tpu_custom_call.1} parent=99 // pred_check_branch
          %736 = sbr.rel (%p734) target = $region120
        $region119: #{tpu_custom_call.1} parent=99 // pred_region
          %737 = dma.done [#allocation12], 16
        $region120: #{tpu_custom_call.1} parent=99 // pred_fallthru
          _
        // Predicated region
        $region121: #{tpu_custom_call.1} parent=99 // pred_check
          %p738 = pneg %p254
        $region122: #{tpu_custom_call.1} parent=99 // pred_check_branch
          %740 = sbr.rel (%p738) target = $region124
        $region123: #{tpu_custom_call.1} parent=99 // pred_region
          %741 = dma.done [#allocation15], 16
        $region124: #{tpu_custom_call.1} parent=99 // pred_fallthru
          _
        // Predicated region
        $region125: #{tpu_custom_call.1} parent=99 // pred_check
          %p742 = pneg %p275
        $region126: #{tpu_custom_call.1} parent=99 // pred_check_branch
          %744 = sbr.rel (%p742) target = $region128
        $region127: #{tpu_custom_call.1} parent=99 // pred_region
          %745 = dma.done [#allocation15], 16
        $region128: #{tpu_custom_call.1} parent=99 // pred_fallthru
          _
        // Predicated region
        $region129: #{tpu_custom_call.1} parent=99 // pred_check
          %p746 = pneg %p380
        $region130: #{tpu_custom_call.1} parent=99 // pred_check_branch
          %748 = sbr.rel (%p746) target = $region132
        $region131: #{tpu_custom_call.1} parent=99 // pred_region
          %749 = dma.done [#allocation18], 256
        $region132: #{tpu_custom_call.1} parent=99 // pred_fallthru
          _
        %s750 = sand.u32 %s68, 1
        %s751 = scalar_lea.sflag [#allocation6], %s750
        %s752 = sand.u32 %s68, 1
        %s753 = smul.addr %s752, 32
        %s754 = scalar_lea.vmem [#allocation5], %s753
        %p755 = pneg %p81
        %p756 = pneg %p78
        %s757 = sand.u32 %s48, 1
        %s758 = scalar_lea.sflag [#allocation9], %s757
        %s759 = sand.u32 %s94, 1
        %s760 = scalar_lea.vmem [#allocation8], %s759
        %p761 = pneg %p107
        %p762 = pneg %p104
        %p763 = pneg %p128
        %p764 = pneg %p125
        %p765 = pneg %p149
        %p766 = pneg %p146
        %p767 = pneg %p170
        %p768 = pneg %p167
        %p769 = pneg %p191
        %p770 = pneg %p188
        %p771 = pneg %p212
        %p772 = pneg %p209
        %p773 = pneg %p233
        %p774 = pneg %p230
        %p775 = pneg %p254
        %p776 = pneg %p251
        %p777 = pneg %p275
        %p778 = pneg %p272
        %p779 = pneg %p296
        %p780 = pneg %p293
        %p781 = pneg %p317
        %p782 = pneg %p314
        %p783 = pneg %p338
        %p784 = pneg %p335
        %p785 = pneg %p359
        %p786 = pneg %p356
        %p787 = pneg %p380
        %p788 = pneg %p377
        %p789 = pneg %p401
        %p790 = pneg %p398
        %p791 = pneg %p422
        %p792 = pneg %p419
        %p793 = pneg %p443
        %p794 = pneg %p440
        %p795 = pneg %p464
        %p796 = pneg %p461
        %p797 = pneg %p485
        %p798 = pneg %p482
        %p799 = pneg %p513
        %p800 = pneg %p510
        %s801 = sand.u32 %s500, 1
        %s802 = scalar_lea.sflag [#allocation7], %s801
        %s803 = sand.u32 %s500, 1
        %s804 = smul.addr %s803, 16
        %s805 = scalar_lea.vmem [#allocation19], %s804
        %p806 = pneg %p541
        %p807 = pneg %p538
        %s808 = sand.u32 %s528, 1
        %s809 = scalar_lea.sflag [#allocation21], %s808
        %s810 = sand.u32 %s528, 1
        %s811 = smul.addr %s810, 8
        %s812 = scalar_lea.vmem [#allocation20], %s811
        %s813 = smul.u32 2, %s53
        %s814 = smul.u32 2, %s53
        %s816 = smul.u32 %s53, 16
        %p817 = scmp.eq.s32.totalorder %s53, 0
        // Predicated region
        $region133: #{tpu_custom_call.1} parent=99 // pred_check
          %p818 = pneg %p817
        $region134: #{tpu_custom_call.1} parent=99 // pred_check_branch
          %820 = sbr.rel (%p818) target = $region136
        $region135: #{tpu_custom_call.1} parent=99 // pred_region
          %v821 = vld [vmem:[%s713] sm:$0xff]
          %v822 = vld [vmem:[%s713 + $0x8] sm:$0xff]
          %v823 = vld [vmem:[%s713 + $0x10] sm:$0xff]
          %v824 = vld [vmem:[%s713 + $0x18] sm:$0xff]
          %v825 = vld [vmem:[#allocation10] sm:$0x1]
          %v826 = vld [vmem:[#allocation11] sm:$0x1]
          %vm827 = vcmask 261120
          %v828 = vsel %vm827, %v821, 0.0
          %829 = vadd.xlane.f32.xlu0 %v828
          %v830 = vpop.xlane.xlu0 %829
          %v831 = vsel %vm827, %v822, 0.0
          %832 = vadd.xlane.f32.xlu0 %v831
          %v833 = vpop.xlane.xlu0 %832
          %v834 = vsel %vm827, %v823, 0.0
          %835 = vadd.xlane.f32.xlu0 %v834
          %v836 = vpop.xlane.xlu0 %835
          %v837 = vsel %vm827, %v824, 0.0
          %838 = vadd.xlane.f32.xlu0 %v837
          %v839 = vpop.xlane.xlu0 %838
          %v840 = vrcp.pop 32.0
          %v841 = vmul.f32 %v830, %v840
          %v842 = vmul.f32 %v833, %v840
          %v843 = vmul.f32 %v836, %v840
          %v844 = vmul.f32 %v839, %v840
          %v845 = vsub.f32 %v821, %v841
          %v846 = vsub.f32 %v822, %v842
          %v847 = vsub.f32 %v823, %v843
          %v848 = vsub.f32 %v824, %v844
          %v849 = vmul.f32 %v845, %v845
          %v850 = vmul.f32 %v846, %v846
          %v851 = vmul.f32 %v847, %v847
          %v852 = vmul.f32 %v848, %v848
          %v853 = vsel %vm827, %v849, 0.0
          %854 = vadd.xlane.f32.xlu0 %v853
          %v855 = vpop.xlane.xlu0 %854
          %v856 = vsel %vm827, %v850, 0.0
          %857 = vadd.xlane.f32.xlu0 %v856
          %v858 = vpop.xlane.xlu0 %857
          %v859 = vsel %vm827, %v851, 0.0
          %860 = vadd.xlane.f32.xlu0 %v859
          %v861 = vpop.xlane.xlu0 %860
          %v862 = vsel %vm827, %v852, 0.0
          %863 = vadd.xlane.f32.xlu0 %v862
          %v864 = vpop.xlane.xlu0 %863
          %v865 = vmul.f32 %v855, %v840
          %v866 = vmul.f32 %v858, %v840
          %v867 = vmul.f32 %v861, %v840
          %v868 = vmul.f32 %v864, %v840
          %v869 = vadd.f32 %v865, 1e-06
          %v870 = vadd.f32 %v866, 1e-06
          %v871 = vadd.f32 %v867, 1e-06
          %v872 = vadd.f32 %v868, 1e-06
          %v873 = vrsqrt.pop %v869
          %v874 = vrsqrt.pop %v870
          %v875 = vrsqrt.pop %v871
          %v876 = vrsqrt.pop %v872
          %v877 = vmul.f32 %v845, %v873
          %v878 = vmul.f32 %v846, %v874
          %v879 = vmul.f32 %v847, %v875
          %v880 = vmul.f32 %v848, %v876
          %v882 = vlaneseq
          %v883 = vshrl.u32 %v882, 7
          %v884 = vsub.s32 0, %v883
          %v885 = vrot.slane %v825, %v884
          %v887 = vmul.f32 %v877, %v885
          %v888 = vmul.f32 %v878, %v885
          %v889 = vmul.f32 %v879, %v885
          %v890 = vmul.f32 %v880, %v885
          %v892 = vlaneseq
          %v893 = vshrl.u32 %v892, 7
          %v894 = vsub.s32 0, %v893
          %v895 = vrot.slane %v826, %v894
          %v897 = vadd.f32 %v887, %v895
          %v898 = vadd.f32 %v888, %v895
          %v899 = vadd.f32 %v889, %v895
          %v900 = vadd.f32 %v890, %v895
          %v901 = vpack.c.bf16 %v898, %v897
          %v902 = vpack.c.bf16 %v900, %v899
          %v905 = vunpack.c.l.b16 %v901
          %v906 = vunpack.c.h.b16 %v901
          %v907 = vunpack.c.l.b16 %v902
          %v908 = vunpack.c.h.b16 %v902
          %v909 = vpack.c.b16 %v905, %v905
          %v910 = vpack.c.b16 %v906, %v906
          %v911 = vpack.c.b16 %v907, %v907
          %v912 = vpack.c.b16 %v908, %v908
          %vm917 = vcmask 257024
          %918 = vst.msk [vmem:[#allocation2] sm:$0xf] %vm917, %v909
          %919 = vst.msk [vmem:[#allocation2 + $0x4] sm:$0xf] %vm917, %v910
          %920 = vst.msk [vmem:[#allocation2 + $0x8] sm:$0xf] %vm917, %v911
          %921 = vst.msk [vmem:[#allocation2 + $0xc] sm:$0xf] %vm917, %v912
          %v922 = vld [vmem:[%s5] sm:$0xf]
          %v923 = vld [vmem:[%s5 + $0x4] sm:$0xf]
          %v924 = vld [vmem:[%s5 + $0x8] sm:$0xf]
          %v925 = vld [vmem:[%s5 + $0xc] sm:$0xf]
          %v926 = vld [vmem:[#allocation14] sm:$0x1]
          %v928 = vlaneseq
          %v929 = vshrl.u32 %v928, 7
          %v930 = vsub.s32 0, %v929
          %v931 = vrot.slane %v926, %v930
          %v937 = vunpack.c.l.b16 %v922
          %v938 = vunpack.c.l.b16 %v923
          %v939 = vunpack.c.l.b16 %v924
          %v940 = vunpack.c.l.b16 %v925
          %v941 = vpack.c.b16 %v938, %v937
          %v942 = vpack.c.b16 %v940, %v939
          %v946 = vsel %vm827, %v901, 0
          %v949 = vsel %vm827, %v902, 0
          %951 = vmatprep.subr.bf16.mxu0 0
          %952 = vmatpush1.bf16.msra.mxu0 0
          %953 = vmatprep.subr.bf16.mxu0 0
          %954 = vmatpush1.bf16.msra.mxu0 0
          %955 = vmatprep.subr.bf16.mxu0 0
          %956 = vmatpush1.bf16.msra.mxu0 0
          %957 = vmatprep.subr.bf16.mxu0 0
          %958 = vmatpush1.bf16.msra.mxu0 0
          %959 = vmatprep.subr.bf16.mxu0 0
          %960 = vmatpush1.bf16.msra.mxu0 0
          %961 = vmatprep.subr.bf16.mxu0 0
          %962 = vmatpush1.bf16.msra.mxu0 0
          %963 = vmatprep.subr.bf16.mxu0 0
          %964 = vmatpush1.bf16.msra.mxu0 %v942
          %965 = vmatprep.subr.bf16.mxu0 0
          %966 = vmatpush1.bf16.msra.mxu0 %v941
          %967 = vmatprep.subr.bf16.mxu0 0
          %968 = vmatpush2.bf16.msra.mxu0 0
          %969 = vmatprep.subr.bf16.mxu0 0
          %970 = vmatpush2.bf16.msra.mxu0 0
          %971 = vmatprep.subr.bf16.mxu0 0
          %972 = vmatpush2.bf16.msra.mxu0 0
          %973 = vmatprep.subr.bf16.mxu0 0
          %974 = vmatpush2.bf16.msra.mxu0 0
          %975 = vmatprep.subr.bf16.mxu0 0
          %976 = vmatpush2.bf16.msra.mxu0 0
          %977 = vmatprep.subr.bf16.mxu0 0
          %978 = vmatpush2.bf16.msra.mxu0 0
          %979 = vmatprep.subr.bf16.mxu0 0
          %980 = vmatpush2.bf16.msra.mxu0 0
          %981 = vmatprep.subr.bf16.mxu0 0
          %982 = vmatpush2.bf16.msra.mxu0 0
          %983 = vmatprep.mubr.bf16.mxu0 0
          %984 = vmatmul.mubr.bf16.gmra.mxu0 %v946
          %v985 = vpop.f32.mrf.mxu0
          %v986 = vadd.f32 %v931, %v985
          %v987 = vpop.f32.mrf.mxu0
          %v988 = vpop.f32.mrf.mxu0
          %v989 = vadd.f32 %v931, %v988
          %v990 = vpop.f32.mrf.mxu0
          %991 = vmatprep.mubr.bf16.mxu0 0
          %992 = vmatmul.mubr.bf16.gmra.mxu0 %v949
          %v993 = vpop.f32.mrf.mxu0
          %v994 = vadd.f32 %v931, %v993
          %v995 = vpop.f32.mrf.mxu0
          %v996 = vpop.f32.mrf.mxu0
          %v997 = vadd.f32 %v931, %v996
          %v998 = vpop.f32.mrf.mxu0
          %999 = vdwg.mxu0
          %v1000 = vpack.c.bf16 %v989, %v986
          %v1001 = vpack.c.bf16 %v997, %v994
          %v1004 = vunpack.c.l.b16 %v1000
          %v1005 = vunpack.c.h.b16 %v1000
          %v1006 = vunpack.c.l.b16 %v1001
          %v1007 = vunpack.c.h.b16 %v1001
          %v1008 = vpack.c.b16 %v1004, %v1004
          %v1009 = vpack.c.b16 %v1005, %v1005
          %v1010 = vpack.c.b16 %v1006, %v1006
          %v1011 = vpack.c.b16 %v1007, %v1007
          %1016 = vst.msk [vmem:[#allocation3] sm:$0xf] %vm917, %v1008
          %1017 = vst.msk [vmem:[#allocation3 + $0x4] sm:$0xf] %vm917, %v1009
          %1018 = vst.msk [vmem:[#allocation3 + $0x8] sm:$0xf] %vm917, %v1010
          %1019 = vst.msk [vmem:[#allocation3 + $0xc] sm:$0xf] %vm917, %v1011
          %v1020 = vld [vmem:[%s6] sm:$0xf]
          %v1021 = vld [vmem:[%s6 + $0x4] sm:$0xf]
          %v1022 = vld [vmem:[%s6 + $0x8] sm:$0xf]
          %v1023 = vld [vmem:[%s6 + $0xc] sm:$0xf]
          %v1024 = vld [vmem:[#allocation16] sm:$0x1]
          %v1026 = vlaneseq
          %v1027 = vshrl.u32 %v1026, 7
          %v1028 = vsub.s32 0, %v1027
          %v1029 = vrot.slane %v1024, %v1028
          %v1035 = vunpack.c.l.b16 %v1020
          %v1036 = vunpack.c.l.b16 %v1021
          %v1037 = vunpack.c.l.b16 %v1022
          %v1038 = vunpack.c.l.b16 %v1023
          %v1039 = vpack.c.b16 %v1036, %v1035
          %v1040 = vpack.c.b16 %v1038, %v1037
          %1043 = vmatprep.subr.bf16.mxu0 0
          %1044 = vmatpush1.bf16.msra.mxu0 0
          %1045 = vmatprep.subr.bf16.mxu0 0
          %1046 = vmatpush1.bf16.msra.mxu0 0
          %1047 = vmatprep.subr.bf16.mxu0 0
          %1048 = vmatpush1.bf16.msra.mxu0 0
          %1049 = vmatprep.subr.bf16.mxu0 0
          %1050 = vmatpush1.bf16.msra.mxu0 0
          %1051 = vmatprep.subr.bf16.mxu0 0
          %1052 = vmatpush1.bf16.msra.mxu0 0
          %1053 = vmatprep.subr.bf16.mxu0 0
          %1054 = vmatpush1.bf16.msra.mxu0 0
          %1055 = vmatprep.subr.bf16.mxu0 0
          %1056 = vmatpush1.bf16.msra.mxu0 %v1040
          %1057 = vmatprep.subr.bf16.mxu0 0
          %1058 = vmatpush1.bf16.msra.mxu0 %v1039
          %1059 = vmatprep.subr.bf16.mxu0 0
          %1060 = vmatpush2.bf16.msra.mxu0 0
          %1061 = vmatprep.subr.bf16.mxu0 0
          %1062 = vmatpush2.bf16.msra.mxu0 0
          %1063 = vmatprep.subr.bf16.mxu0 0
          %1064 = vmatpush2.bf16.msra.mxu0 0
          %1065 = vmatprep.subr.bf16.mxu0 0
          %1066 = vmatpush2.bf16.msra.mxu0 0
          %1067 = vmatprep.subr.bf16.mxu0 0
          %1068 = vmatpush2.bf16.msra.mxu0 0
          %1069 = vmatprep.subr.bf16.mxu0 0
          %1070 = vmatpush2.bf16.msra.mxu0 0
          %1071 = vmatprep.subr.bf16.mxu0 0
          %1072 = vmatpush2.bf16.msra.mxu0 0
          %1073 = vmatprep.subr.bf16.mxu0 0
          %1074 = vmatpush2.bf16.msra.mxu0 0
          %1075 = vmatprep.mubr.bf16.mxu0 0
          %1076 = vmatmul.mubr.bf16.gmra.mxu0 %v946
          %v1077 = vpop.f32.mrf.mxu0
          %v1078 = vadd.f32 %v1029, %v1077
          %v1079 = vpop.f32.mrf.mxu0
          %v1080 = vpop.f32.mrf.mxu0
          %v1081 = vadd.f32 %v1029, %v1080
          %v1082 = vpop.f32.mrf.mxu0
          %1083 = vmatprep.mubr.bf16.mxu0 0
          %1084 = vmatmul.mubr.bf16.gmra.mxu0 %v949
          %v1085 = vpop.f32.mrf.mxu0
          %v1086 = vadd.f32 %v1029, %v1085
          %v1087 = vpop.f32.mrf.mxu0
          %v1088 = vpop.f32.mrf.mxu0
          %v1089 = vadd.f32 %v1029, %v1088
          %v1090 = vpop.f32.mrf.mxu0
          %1091 = vdwg.mxu0
          %v1092 = vpack.c.bf16 %v1081, %v1078
          %v1093 = vpack.c.bf16 %v1089, %v1086
          %v1096 = vunpack.c.l.b16 %v1092
          %v1097 = vunpack.c.h.b16 %v1092
          %v1098 = vunpack.c.l.b16 %v1093
          %v1099 = vunpack.c.h.b16 %v1093
          %v1100 = vpack.c.b16 %v1096, %v1096
          %v1101 = vpack.c.b16 %v1097, %v1097
          %v1102 = vpack.c.b16 %v1098, %v1098
          %v1103 = vpack.c.b16 %v1099, %v1099
          %1108 = vst.msk [vmem:[#allocation4] sm:$0xf] %vm917, %v1100
          %1109 = vst.msk [vmem:[#allocation4 + $0x4] sm:$0xf] %vm917, %v1101
          %1110 = vst.msk [vmem:[#allocation4 + $0x8] sm:$0xf] %vm917, %v1102
          %1111 = vst.msk [vmem:[#allocation4 + $0xc] sm:$0xf] %vm917, %v1103
        $region136: #{tpu_custom_call.1} parent=99 // pred_fallthru
          _
        %s1112 = sshra.s32 %s816, 3
        %s1113 = sand.u32 %s816, 7
        %s1114 = smul.addr %s1112, 4
        %s1115 = scalar_lea.vmem [#allocation2], %s1114
        %v1116 = vld [vmem:[%s1115] sm:$0xf]
        %v1117 = vld [vmem:[%s1115 + $0x4] sm:$0xf]
        %v1118 = vld [vmem:[%s4] sm:$0xf]
        %v1119 = vld [vmem:[%s4 + $0x4] sm:$0xf]
        %v1120 = vld [vmem:[%s4 + $0x8] sm:$0xf]
        %v1121 = vld [vmem:[%s4 + $0xc] sm:$0xf]
        %v1122 = vld [vmem:[#allocation13] sm:$0x1]
        %v1124 = vlaneseq
        %v1125 = vshrl.u32 %v1124, 7
        %v1126 = vsub.s32 0, %v1125
        %v1127 = vrot.slane %v1122, %v1126
        %v1131 = vunpack.c.l.b16 %v1116
        %v1132 = vunpack.c.l.b16 %v1117
        %v1133 = vpack.c.b16 %v1132, %v1131
        %v1138 = vunpack.c.l.b16 %v1118
        %v1139 = vunpack.c.l.b16 %v1119
        %v1140 = vunpack.c.l.b16 %v1120
        %v1141 = vunpack.c.l.b16 %v1121
        %v1142 = vpack.c.b16 %v1139, %v1138
        %v1143 = vpack.c.b16 %v1141, %v1140
        %vm1146 = vcmask 261120
        %v1148 = vsel %vm1146, %v1133, 0
        %1150 = vmatprep.subr.bf16.mxu0 0
        %1151 = vmatpush1.bf16.msra.mxu0 0
        %1152 = vmatprep.subr.bf16.mxu0 0
        %1153 = vmatpush1.bf16.msra.mxu0 0
        %1154 = vmatprep.subr.bf16.mxu0 0
        %1155 = vmatpush1.bf16.msra.mxu0 0
        %1156 = vmatprep.subr.bf16.mxu0 0
        %1157 = vmatpush1.bf16.msra.mxu0 0
        %1158 = vmatprep.subr.bf16.mxu0 0
        %1159 = vmatpush1.bf16.msra.mxu0 0
        %1160 = vmatprep.subr.bf16.mxu0 0
        %1161 = vmatpush1.bf16.msra.mxu0 0
        %1162 = vmatprep.subr.bf16.mxu0 0
        %1163 = vmatpush1.bf16.msra.mxu0 %v1143
        %1164 = vmatprep.subr.bf16.mxu0 0
        %1165 = vmatpush1.bf16.msra.mxu0 %v1142
        %1166 = vmatprep.subr.bf16.mxu0 0
        %1167 = vmatpush2.bf16.msra.mxu0 0
        %1168 = vmatprep.subr.bf16.mxu0 0
        %1169 = vmatpush2.bf16.msra.mxu0 0
        %1170 = vmatprep.subr.bf16.mxu0 0
        %1171 = vmatpush2.bf16.msra.mxu0 0
        %1172 = vmatprep.subr.bf16.mxu0 0
        %1173 = vmatpush2.bf16.msra.mxu0 0
        %1174 = vmatprep.subr.bf16.mxu0 0
        %1175 = vmatpush2.bf16.msra.mxu0 0
        %1176 = vmatprep.subr.bf16.mxu0 0
        %1177 = vmatpush2.bf16.msra.mxu0 0
        %1178 = vmatprep.subr.bf16.mxu0 0
        %1179 = vmatpush2.bf16.msra.mxu0 0
        %1180 = vmatprep.subr.bf16.mxu0 0
        %1181 = vmatpush2.bf16.msra.mxu0 0
        %1182 = vmatprep.mubr.bf16.mxu0 0
        %1183 = vmatmul.mubr.bf16.gmra.mxu0 %v1148
        %v1184 = vpop.f32.mrf.mxu0
        %v1185 = vadd.f32 %v1127, %v1184
        %v1186 = vpop.f32.mrf.mxu0
        %v1187 = vpop.f32.mrf.mxu0
        %v1188 = vadd.f32 %v1127, %v1187
        %v1189 = vpop.f32.mrf.mxu0
        %1190 = vdwg.mxu0
        %v1191 = vmul.f32 %v1185, 0.35355338
        %v1192 = vmul.f32 %v1188, 0.35355338
        %v1193 = vpack.c.bf16 %v1192, %v1191
        %v1194 = vld [vmem:[%s721] sm:$0x1]
        %v1196 = vlaneseq
        %v1197 = vshrl.u32 %v1196, 7
        %v1198 = vsub.s32 0, %v1197
        %v1199 = vrot.slane %v1194, %v1198
        %v1201 = vld [vmem:[#allocation3] sm:$0xf]
        %v1202 = vld [vmem:[#allocation3 + $0x4] sm:$0xf]
        %v1203 = vld [vmem:[#allocation3 + $0x8] sm:$0xf]
        %v1204 = vld [vmem:[#allocation3 + $0xc] sm:$0xf]
        %v1209 = vunpack.c.l.b16 %v1201
        %v1210 = vunpack.c.l.b16 %v1202
        %v1211 = vunpack.c.l.b16 %v1203
        %v1212 = vunpack.c.l.b16 %v1204
        %v1213 = vpack.c.b16 %v1210, %v1209
        %v1214 = vpack.c.b16 %v1212, %v1211
        %vm1215 = vcmask 64512
        %v1217 = vsel %vm1215, %v1193, 0
        %v1220 = vsel %vm1215, %v1213, 0
        %v1223 = vsel %vm1215, %v1214, 0
        %1225 = vmatprep.subr.bf16.mxu0 0
        %1226 = vmatpush1.bf16.xpose.msra.mxu0 0
        %1227 = vmatprep.subr.bf16.mxu0 0
        %1228 = vmatpush1.bf16.xpose.msra.mxu0 0
        %1229 = vmatprep.subr.bf16.mxu0 0
        %1230 = vmatpush1.bf16.xpose.msra.mxu0 0
        %1231 = vmatprep.subr.bf16.mxu0 0
        %1232 = vmatpush1.bf16.xpose.msra.mxu0 0
        %1233 = vmatprep.subr.bf16.mxu0 0
        %1234 = vmatpush1.bf16.xpose.msra.mxu0 0
        %1235 = vmatprep.subr.bf16.mxu0 0
        %1236 = vmatpush1.bf16.xpose.msra.mxu0 0
        %1237 = vmatprep.subr.bf16.mxu0 0
        %1238 = vmatpush1.bf16.xpose.msra.mxu0 %v1223
        %1239 = vmatprep.subr.bf16.mxu0 0
        %1240 = vmatpush1.bf16.xpose.msra.mxu0 %v1220
        %1241 = vmatprep.subr.bf16.mxu0 0
        %1242 = vmatpush2.bf16.xpose.msra.mxu0 0
        %1243 = vmatprep.subr.bf16.mxu0 0
        %1244 = vmatpush2.bf16.xpose.msra.mxu0 0
        %1245 = vmatprep.subr.bf16.mxu0 0
        %1246 = vmatpush2.bf16.xpose.msra.mxu0 0
        %1247 = vmatprep.subr.bf16.mxu0 0
        %1248 = vmatpush2.bf16.xpose.msra.mxu0 0
        %1249 = vmatprep.subr.bf16.mxu0 0
        %1250 = vmatpush2.bf16.xpose.msra.mxu0 0
        %1251 = vmatprep.subr.bf16.mxu0 0
        %1252 = vmatpush2.bf16.xpose.msra.mxu0 0
        %1253 = vmatprep.subr.bf16.mxu0 0
        %1254 = vmatpush2.bf16.xpose.msra.mxu0 0
        %1255 = vmatprep.subr.bf16.mxu0 0
        %1256 = vmatpush2.bf16.xpose.msra.mxu0 0
        %1257 = vmatprep.mubr.bf16.mxu0 0
        %1258 = vmatmul.mubr.bf16.gmra.mxu0 %v1217
        %v1259 = vpop.f32.mrf.mxu0
        %v1260 = vadd.f32 %v1199, %v1259
        %v1261 = vpop.f32.mrf.mxu0
        %v1262 = vpop.f32.mrf.mxu0
        %v1263 = vadd.f32 %v1199, %v1262
        %v1264 = vpop.f32.mrf.mxu0
        %1265 = vdwg.mxu0
        %v1266 = vsel %vm1146, %v1260, -inf
        %1267 = vmax.xlane.f32.xlu0 %v1266
        %v1268 = vpop.xlane.xlu0 %1267
        %v1269 = vsel %vm1146, %v1263, -inf
        %1270 = vmax.xlane.f32.xlu0 %v1269
        %v1271 = vpop.xlane.xlu0 %1270
        %v1272 = vsub.f32 %v1260, %v1268
        %v1273 = vsub.f32 %v1263, %v1271
        %v1274 = vmul.f32 %v1272, 1.442695
        %v1275 = vpow.pop %v1274
        %v1276 = vmul.f32 %v1273, 1.442695
        %v1277 = vpow.pop %v1276
        %v1278 = vsel %vm1146, %v1275, 0.0
        %1279 = vadd.xlane.f32.xlu0 %v1278
        %v1280 = vpop.xlane.xlu0 %1279
        %v1281 = vsel %vm1146, %v1277, 0.0
        %1282 = vadd.xlane.f32.xlu0 %v1281
        %v1283 = vpop.xlane.xlu0 %1282
        %v1284 = vrcp.pop %v1280
        %v1285 = vmul.f32 1.0, %v1284
        %v1286 = vrcp.pop %v1283
        %v1287 = vmul.f32 1.0, %v1286
        %v1288 = vmul.f32 %v1275, %v1285
        %v1289 = vmul.f32 %v1277, %v1287
        %v1290 = vadd.f32 %v1288, 0.0
        %v1291 = vadd.f32 %v1289, 0.0
        %v1292 = vpack.c.bf16 %v1289, %v1288
        %v1293 = vld [vmem:[#allocation4] sm:$0xf]
        %v1294 = vld [vmem:[#allocation4 + $0x4] sm:$0xf]
        %v1295 = vld [vmem:[#allocation4 + $0x8] sm:$0xf]
        %v1296 = vld [vmem:[#allocation4 + $0xc] sm:$0xf]
        %v1301 = vunpack.c.l.b16 %v1293
        %v1302 = vunpack.c.l.b16 %v1294
        %v1303 = vunpack.c.l.b16 %v1295
        %v1304 = vunpack.c.l.b16 %v1296
        %v1305 = vpack.c.b16 %v1302, %v1301
        %v1306 = vpack.c.b16 %v1304, %v1303
        %v1310 = vsel %vm1146, %v1292, 0
        %1312 = vmatprep.subr.bf16.mxu0 0
        %1313 = vmatpush1.bf16.msra.mxu0 0
        %1314 = vmatprep.subr.bf16.mxu0 0
        %1315 = vmatpush1.bf16.msra.mxu0 0
        %1316 = vmatprep.subr.bf16.mxu0 0
        %1317 = vmatpush1.bf16.msra.mxu0 0
        %1318 = vmatprep.subr.bf16.mxu0 0
        %1319 = vmatpush1.bf16.msra.mxu0 0
        %1320 = vmatprep.subr.bf16.mxu0 0
        %1321 = vmatpush1.bf16.msra.mxu0 0
        %1322 = vmatprep.subr.bf16.mxu0 0
        %1323 = vmatpush1.bf16.msra.mxu0 0
        %1324 = vmatprep.subr.bf16.mxu0 0
        %1325 = vmatpush1.bf16.msra.mxu0 %v1306
        %1326 = vmatprep.subr.bf16.mxu0 0
        %1327 = vmatpush1.bf16.msra.mxu0 %v1305
        %1328 = vmatprep.subr.bf16.mxu0 0
        %1329 = vmatpush2.bf16.msra.mxu0 0
        %1330 = vmatprep.subr.bf16.mxu0 0
        %1331 = vmatpush2.bf16.msra.mxu0 0
        %1332 = vmatprep.subr.bf16.mxu0 0
        %1333 = vmatpush2.bf16.msra.mxu0 0
        %1334 = vmatprep.subr.bf16.mxu0 0
        %1335 = vmatpush2.bf16.msra.mxu0 0
        %1336 = vmatprep.subr.bf16.mxu0 0
        %1337 = vmatpush2.bf16.msra.mxu0 0
        %1338 = vmatprep.subr.bf16.mxu0 0
        %1339 = vmatpush2.bf16.msra.mxu0 0
        %1340 = vmatprep.subr.bf16.mxu0 0
        %1341 = vmatpush2.bf16.msra.mxu0 0
        %1342 = vmatprep.subr.bf16.mxu0 0
        %1343 = vmatpush2.bf16.msra.mxu0 0
        %1344 = vmatprep.mubr.bf16.mxu0 0
        %1345 = vmatmul.mubr.bf16.gmra.mxu0 %v1310
        %v1346 = vpop.f32.mrf.mxu0
        %v1347 = vadd.f32 0.0, %v1346
        %v1348 = vpop.f32.mrf.mxu0
        %v1349 = vpop.f32.mrf.mxu0
        %v1350 = vadd.f32 0.0, %v1349
        %v1351 = vpop.f32.mrf.mxu0
        %1352 = vdwg.mxu0
        %v1353 = vpack.c.bf16 %v1350, %v1347
        %v1354 = vld [vmem:[%s10] sm:$0xf]
        %1356 = vrot.lane.b32.xlu0 %v1193, 120
        %v1357 = vpop.permute.xlu0 %1356
        %1358 = vrot.lane.b32.xlu0 %v1213, 120
        %v1359 = vpop.permute.xlu0 %1358
        %1360 = vrot.lane.b32.xlu0 %v1214, 120
        %v1361 = vpop.permute.xlu0 %1360
        %v1363 = vsel %vm1215, %v1357, 0
        %v1366 = vsel %vm1215, %v1359, 0
        %v1369 = vsel %vm1215, %v1361, 0
        %1371 = vmatprep.subr.bf16.mxu0 0
        %1372 = vmatpush1.bf16.xpose.msra.mxu0 0
        %1373 = vmatprep.subr.bf16.mxu0 0
        %1374 = vmatpush1.bf16.xpose.msra.mxu0 0
        %1375 = vmatprep.subr.bf16.mxu0 0
        %1376 = vmatpush1.bf16.xpose.msra.mxu0 0
        %1377 = vmatprep.subr.bf16.mxu0 0
        %1378 = vmatpush1.bf16.xpose.msra.mxu0 0
        %1379 = vmatprep.subr.bf16.mxu0 0
        %1380 = vmatpush1.bf16.xpose.msra.mxu0 0
        %1381 = vmatprep.subr.bf16.mxu0 0
        %1382 = vmatpush1.bf16.xpose.msra.mxu0 0
        %1383 = vmatprep.subr.bf16.mxu0 0
        %1384 = vmatpush1.bf16.xpose.msra.mxu0 %v1369
        %1385 = vmatprep.subr.bf16.mxu0 0
        %1386 = vmatpush1.bf16.xpose.msra.mxu0 %v1366
        %1387 = vmatprep.subr.bf16.mxu0 0
        %1388 = vmatpush2.bf16.xpose.msra.mxu0 0
        %1389 = vmatprep.subr.bf16.mxu0 0
        %1390 = vmatpush2.bf16.xpose.msra.mxu0 0
        %1391 = vmatprep.subr.bf16.mxu0 0
        %1392 = vmatpush2.bf16.xpose.msra.mxu0 0
        %1393 = vmatprep.subr.bf16.mxu0 0
        %1394 = vmatpush2.bf16.xpose.msra.mxu0 0
        %1395 = vmatprep.subr.bf16.mxu0 0
        %1396 = vmatpush2.bf16.xpose.msra.mxu0 0
        %1397 = vmatprep.subr.bf16.mxu0 0
        %1398 = vmatpush2.bf16.xpose.msra.mxu0 0
        %1399 = vmatprep.subr.bf16.mxu0 0
        %1400 = vmatpush2.bf16.xpose.msra.mxu0 0
        %1401 = vmatprep.subr.bf16.mxu0 0
        %1402 = vmatpush2.bf16.xpose.msra.mxu0 0
        %1403 = vmatprep.mubr.bf16.mxu0 0
        %1404 = vmatmul.mubr.bf16.gmra.mxu0 %v1363
        %v1405 = vpop.f32.mrf.mxu0
        %v1406 = vadd.f32 %v1199, %v1405
        %v1407 = vpop.f32.mrf.mxu0
        %v1408 = vpop.f32.mrf.mxu0
        %v1409 = vadd.f32 %v1199, %v1408
        %v1410 = vpop.f32.mrf.mxu0
        %1411 = vdwg.mxu0
        %v1412 = vsel %vm1146, %v1406, -inf
        %1413 = vmax.xlane.f32.xlu0 %v1412
        %v1414 = vpop.xlane.xlu0 %1413
        %v1415 = vsel %vm1146, %v1409, -inf
        %1416 = vmax.xlane.f32.xlu0 %v1415
        %v1417 = vpop.xlane.xlu0 %1416
        %v1418 = vsub.f32 %v1406, %v1414
        %v1419 = vsub.f32 %v1409, %v1417
        %v1420 = vmul.f32 %v1418, 1.442695
        %v1421 = vpow.pop %v1420
        %v1422 = vmul.f32 %v1419, 1.442695
        %v1423 = vpow.pop %v1422
        %v1424 = vsel %vm1146, %v1421, 0.0
        %1425 = vadd.xlane.f32.xlu0 %v1424
        %v1426 = vpop.xlane.xlu0 %1425
        %v1427 = vsel %vm1146, %v1423, 0.0
        %1428 = vadd.xlane.f32.xlu0 %v1427
        %v1429 = vpop.xlane.xlu0 %1428
        %v1430 = vrcp.pop %v1426
        %v1431 = vmul.f32 1.0, %v1430
        %v1432 = vrcp.pop %v1429
        %v1433 = vmul.f32 1.0, %v1432
        %v1434 = vmul.f32 %v1421, %v1431
        %v1435 = vmul.f32 %v1423, %v1433
        %v1436 = vadd.f32 %v1290, %v1434
        %v1437 = vadd.f32 %v1291, %v1435
        %v1438 = vpack.c.bf16 %v1435, %v1434
        %1439 = vrot.lane.b32.xlu0 %v1305, 120
        %v1440 = vpop.permute.xlu0 %1439
        %1441 = vrot.lane.b32.xlu0 %v1306, 120
        %v1442 = vpop.permute.xlu0 %1441
        %v1446 = vsel %vm1146, %v1438, 0
        %1448 = vmatprep.subr.bf16.mxu0 0
        %1449 = vmatpush1.bf16.msra.mxu0 0
        %1450 = vmatprep.subr.bf16.mxu0 0
        %1451 = vmatpush1.bf16.msra.mxu0 0
        %1452 = vmatprep.subr.bf16.mxu0 0
        %1453 = vmatpush1.bf16.msra.mxu0 0
        %1454 = vmatprep.subr.bf16.mxu0 0
        %1455 = vmatpush1.bf16.msra.mxu0 0
        %1456 = vmatprep.subr.bf16.mxu0 0
        %1457 = vmatpush1.bf16.msra.mxu0 0
        %1458 = vmatprep.subr.bf16.mxu0 0
        %1459 = vmatpush1.bf16.msra.mxu0 0
        %1460 = vmatprep.subr.bf16.mxu0 0
        %1461 = vmatpush1.bf16.msra.mxu0 %v1442
        %1462 = vmatprep.subr.bf16.mxu0 0
        %1463 = vmatpush1.bf16.msra.mxu0 %v1440
        %1464 = vmatprep.subr.bf16.mxu0 0
        %1465 = vmatpush2.bf16.msra.mxu0 0
        %1466 = vmatprep.subr.bf16.mxu0 0
        %1467 = vmatpush2.bf16.msra.mxu0 0
        %1468 = vmatprep.subr.bf16.mxu0 0
        %1469 = vmatpush2.bf16.msra.mxu0 0
        %1470 = vmatprep.subr.bf16.mxu0 0
        %1471 = vmatpush2.bf16.msra.mxu0 0
        %1472 = vmatprep.subr.bf16.mxu0 0
        %1473 = vmatpush2.bf16.msra.mxu0 0
        %1474 = vmatprep.subr.bf16.mxu0 0
        %1475 = vmatpush2.bf16.msra.mxu0 0
        %1476 = vmatprep.subr.bf16.mxu0 0
        %1477 = vmatpush2.bf16.msra.mxu0 0
        %1478 = vmatprep.subr.bf16.mxu0 0
        %1479 = vmatpush2.bf16.msra.mxu0 0
        %1480 = vmatprep.mubr.bf16.mxu0 0
        %1481 = vmatmul.mubr.bf16.gmra.mxu0 %v1446
        %v1482 = vpop.f32.mrf.mxu0
        %v1483 = vadd.f32 0.0, %v1482
        %v1484 = vpop.f32.mrf.mxu0
        %v1485 = vpop.f32.mrf.mxu0
        %v1486 = vadd.f32 0.0, %v1485
        %v1487 = vpop.f32.mrf.mxu0
        %1488 = vdwg.mxu0
        %v1489 = vpack.c.bf16 %v1486, %v1483
        %v1490 = vld [vmem:[%s10 + $0x4] sm:$0xf]
        %v1492 = vsel %vm1215, %v1489, 0
        %vm1494 = vcmask 1043456
        %v1496 = vsel %vm1494, %v1490, 0
        %1498 = vmatprep.subr.bf16.mxu0 0
        %1499 = vmatpush1.bf16.msra.mxu0 0
        %1500 = vmatprep.subr.bf16.mxu0 0
        %1501 = vmatpush1.bf16.msra.mxu0 0
        %1502 = vmatprep.subr.bf16.mxu0 0
        %1503 = vmatpush1.bf16.msra.mxu0 0
        %1504 = vmatprep.subr.bf16.mxu0 0
        %1505 = vmatpush1.bf16.msra.mxu0 0
        %1506 = vmatprep.subr.bf16.mxu0 0
        %1507 = vmatpush1.bf16.msra.mxu0 0
        %1508 = vmatprep.subr.bf16.mxu0 0
        %1509 = vmatpush1.bf16.msra.mxu0 0
        %1510 = vmatprep.subr.bf16.mxu0 0
        %1511 = vmatpush1.bf16.msra.mxu0 0
        %1512 = vmatprep.subr.bf16.mxu0 0
        %1513 = vmatpush1.bf16.msra.mxu0 %v1496
        %1514 = vmatprep.subr.bf16.mxu0 0
        %1515 = vmatpush2.bf16.msra.mxu0 0
        %1516 = vmatprep.subr.bf16.mxu0 0
        %1517 = vmatpush2.bf16.msra.mxu0 0
        %1518 = vmatprep.subr.bf16.mxu0 0
        %1519 = vmatpush2.bf16.msra.mxu0 0
        %1520 = vmatprep.subr.bf16.mxu0 0
        %1521 = vmatpush2.bf16.msra.mxu0 0
        %1522 = vmatprep.subr.bf16.mxu0 0
        %1523 = vmatpush2.bf16.msra.mxu0 0
        %1524 = vmatprep.subr.bf16.mxu0 0
        %1525 = vmatpush2.bf16.msra.mxu0 0
        %1526 = vmatprep.subr.bf16.mxu0 0
        %1527 = vmatpush2.bf16.msra.mxu0 0
        %1528 = vmatprep.subr.bf16.mxu0 0
        %1529 = vmatpush2.bf16.msra.mxu0 0
        %1530 = vmatprep.mubr.bf16.mxu0 0
        %1531 = vmatmul.mubr.bf16.gmra.mxu0 %v1492
        %v1532 = vpop.f32.mrf.mxu0
        %v1533 = vadd.f32 0.0, %v1532
        %v1534 = vpop.f32.mrf.mxu0
        %v1535 = vpop.f32.mrf.mxu0
        %v1536 = vadd.f32 0.0, %v1535
        %v1537 = vpop.f32.mrf.mxu0
        %1538 = vdwg.mxu0
        %v1540 = vsel %vm1215, %v1353, 0
        %v1543 = vsel %vm1494, %v1354, 0
        %1545 = vmatprep.subr.bf16.mxu0 0
        %1546 = vmatpush1.bf16.msra.mxu0 0
        %1547 = vmatprep.subr.bf16.mxu0 0
        %1548 = vmatpush1.bf16.msra.mxu0 0
        %1549 = vmatprep.subr.bf16.mxu0 0
        %1550 = vmatpush1.bf16.msra.mxu0 0
        %1551 = vmatprep.subr.bf16.mxu0 0
        %1552 = vmatpush1.bf16.msra.mxu0 0
        %1553 = vmatprep.subr.bf16.mxu0 0
        %1554 = vmatpush1.bf16.msra.mxu0 0
        %1555 = vmatprep.subr.bf16.mxu0 0
        %1556 = vmatpush1.bf16.msra.mxu0 0
        %1557 = vmatprep.subr.bf16.mxu0 0
        %1558 = vmatpush1.bf16.msra.mxu0 0
        %1559 = vmatprep.subr.bf16.mxu0 0
        %1560 = vmatpush1.bf16.msra.mxu0 %v1543
        %1561 = vmatprep.subr.bf16.mxu0 0
        %1562 = vmatpush2.bf16.msra.mxu0 0
        %1563 = vmatprep.subr.bf16.mxu0 0
        %1564 = vmatpush2.bf16.msra.mxu0 0
        %1565 = vmatprep.subr.bf16.mxu0 0
        %1566 = vmatpush2.bf16.msra.mxu0 0
        %1567 = vmatprep.subr.bf16.mxu0 0
        %1568 = vmatpush2.bf16.msra.mxu0 0
        %1569 = vmatprep.subr.bf16.mxu0 0
        %1570 = vmatpush2.bf16.msra.mxu0 0
        %1571 = vmatprep.subr.bf16.mxu0 0
        %1572 = vmatpush2.bf16.msra.mxu0 0
        %1573 = vmatprep.subr.bf16.mxu0 0
        %1574 = vmatpush2.bf16.msra.mxu0 0
        %1575 = vmatprep.subr.bf16.mxu0 0
        %1576 = vmatpush2.bf16.msra.mxu0 0
        %1577 = vmatprep.mubr.bf16.mxu0 0
        %1578 = vmatmul.mubr.bf16.gmra.mxu0 %v1540
        %v1579 = vpop.f32.mrf.mxu0
        %v1580 = vadd.f32 %v1533, %v1579
        %v1581 = vpop.f32.mrf.mxu0
        %v1582 = vpop.f32.mrf.mxu0
        %v1583 = vadd.f32 %v1536, %v1582
        %v1584 = vpop.f32.mrf.mxu0
        %1585 = vdwg.mxu0
        %1586 = vrot.lane.b32.xlu0 %v1193, 112
        %v1587 = vpop.permute.xlu0 %1586
        %1588 = vrot.lane.b32.xlu0 %v1213, 112
        %v1589 = vpop.permute.xlu0 %1588
        %1590 = vrot.lane.b32.xlu0 %v1214, 112
        %v1591 = vpop.permute.xlu0 %1590
        %v1593 = vsel %vm1215, %v1587, 0
        %v1596 = vsel %vm1215, %v1589, 0
        %v1599 = vsel %vm1215, %v1591, 0
        %1601 = vmatprep.subr.bf16.mxu0 0
        %1602 = vmatpush1.bf16.xpose.msra.mxu0 0
        %1603 = vmatprep.subr.bf16.mxu0 0
        %1604 = vmatpush1.bf16.xpose.msra.mxu0 0
        %1605 = vmatprep.subr.bf16.mxu0 0
        %1606 = vmatpush1.bf16.xpose.msra.mxu0 0
        %1607 = vmatprep.subr.bf16.mxu0 0
        %1608 = vmatpush1.bf16.xpose.msra.mxu0 0
        %1609 = vmatprep.subr.bf16.mxu0 0
        %1610 = vmatpush1.bf16.xpose.msra.mxu0 0
        %1611 = vmatprep.subr.bf16.mxu0 0
        %1612 = vmatpush1.bf16.xpose.msra.mxu0 0
        %1613 = vmatprep.subr.bf16.mxu0 0
        %1614 = vmatpush1.bf16.xpose.msra.mxu0 %v1599
        %1615 = vmatprep.subr.bf16.mxu0 0
        %1616 = vmatpush1.bf16.xpose.msra.mxu0 %v1596
        %1617 = vmatprep.subr.bf16.mxu0 0
        %1618 = vmatpush2.bf16.xpose.msra.mxu0 0
        %1619 = vmatprep.subr.bf16.mxu0 0
        %1620 = vmatpush2.bf16.xpose.msra.mxu0 0
        %1621 = vmatprep.subr.bf16.mxu0 0
        %1622 = vmatpush2.bf16.xpose.msra.mxu0 0
        %1623 = vmatprep.subr.bf16.mxu0 0
        %1624 = vmatpush2.bf16.xpose.msra.mxu0 0
        %1625 = vmatprep.subr.bf16.mxu0 0
        %1626 = vmatpush2.bf16.xpose.msra.mxu0 0
        %1627 = vmatprep.subr.bf16.mxu0 0
        %1628 = vmatpush2.bf16.xpose.msra.mxu0 0
        %1629 = vmatprep.subr.bf16.mxu0 0
        %1630 = vmatpush2.bf16.xpose.msra.mxu0 0
        %1631 = vmatprep.subr.bf16.mxu0 0
        %1632 = vmatpush2.bf16.xpose.msra.mxu0 0
        %1633 = vmatprep.mubr.bf16.mxu0 0
        %1634 = vmatmul.mubr.bf16.gmra.mxu0 %v1593
        %v1635 = vpop.f32.mrf.mxu0
        %v1636 = vadd.f32 %v1199, %v1635
        %v1637 = vpop.f32.mrf.mxu0
        %v1638 = vpop.f32.mrf.mxu0
        %v1639 = vadd.f32 %v1199, %v1638
        %v1640 = vpop.f32.mrf.mxu0
        %1641 = vdwg.mxu0
        %v1642 = vsel %vm1146, %v1636, -inf
        %1643 = vmax.xlane.f32.xlu0 %v1642
        %v1644 = vpop.xlane.xlu0 %1643
        %v1645 = vsel %vm1146, %v1639, -inf
        %1646 = vmax.xlane.f32.xlu0 %v1645
        %v1647 = vpop.xlane.xlu0 %1646
        %v1648 = vsub.f32 %v1636, %v1644
        %v1649 = vsub.f32 %v1639, %v1647
        %v1650 = vmul.f32 %v1648, 1.442695
        %v1651 = vpow.pop %v1650
        %v1652 = vmul.f32 %v1649, 1.442695
        %v1653 = vpow.pop %v1652
        %v1654 = vsel %vm1146, %v1651, 0.0
        %1655 = vadd.xlane.f32.xlu0 %v1654
        %v1656 = vpop.xlane.xlu0 %1655
        %v1657 = vsel %vm1146, %v1653, 0.0
        %1658 = vadd.xlane.f32.xlu0 %v1657
        %v1659 = vpop.xlane.xlu0 %1658
        %v1660 = vrcp.pop %v1656
        %v1661 = vmul.f32 1.0, %v1660
        %v1662 = vrcp.pop %v1659
        %v1663 = vmul.f32 1.0, %v1662
        %v1664 = vmul.f32 %v1651, %v1661
        %v1665 = vmul.f32 %v1653, %v1663
        %v1666 = vadd.f32 %v1436, %v1664
        %v1667 = vadd.f32 %v1437, %v1665
        %v1668 = vpack.c.bf16 %v1665, %v1664
        %1669 = vrot.lane.b32.xlu0 %v1305, 112
        %v1670 = vpop.permute.xlu0 %1669
        %1671 = vrot.lane.b32.xlu0 %v1306, 112
        %v1672 = vpop.permute.xlu0 %1671
        %v1676 = vsel %vm1146, %v1668, 0
        %1678 = vmatprep.subr.bf16.mxu0 0
        %1679 = vmatpush1.bf16.msra.mxu0 0
        %1680 = vmatprep.subr.bf16.mxu0 0
        %1681 = vmatpush1.bf16.msra.mxu0 0
        %1682 = vmatprep.subr.bf16.mxu0 0
        %1683 = vmatpush1.bf16.msra.mxu0 0
        %1684 = vmatprep.subr.bf16.mxu0 0
        %1685 = vmatpush1.bf16.msra.mxu0 0
        %1686 = vmatprep.subr.bf16.mxu0 0
        %1687 = vmatpush1.bf16.msra.mxu0 0
        %1688 = vmatprep.subr.bf16.mxu0 0
        %1689 = vmatpush1.bf16.msra.mxu0 0
        %1690 = vmatprep.subr.bf16.mxu0 0
        %1691 = vmatpush1.bf16.msra.mxu0 %v1672
        %1692 = vmatprep.subr.bf16.mxu0 0
        %1693 = vmatpush1.bf16.msra.mxu0 %v1670
        %1694 = vmatprep.subr.bf16.mxu0 0
        %1695 = vmatpush2.bf16.msra.mxu0 0
        %1696 = vmatprep.subr.bf16.mxu0 0
        %1697 = vmatpush2.bf16.msra.mxu0 0
        %1698 = vmatprep.subr.bf16.mxu0 0
        %1699 = vmatpush2.bf16.msra.mxu0 0
        %1700 = vmatprep.subr.bf16.mxu0 0
        %1701 = vmatpush2.bf16.msra.mxu0 0
        %1702 = vmatprep.subr.bf16.mxu0 0
        %1703 = vmatpush2.bf16.msra.mxu0 0
        %1704 = vmatprep.subr.bf16.mxu0 0
        %1705 = vmatpush2.bf16.msra.mxu0 0
        %1706 = vmatprep.subr.bf16.mxu0 0
        %1707 = vmatpush2.bf16.msra.mxu0 0
        %1708 = vmatprep.subr.bf16.mxu0 0
        %1709 = vmatpush2.bf16.msra.mxu0 0
        %1710 = vmatprep.mubr.bf16.mxu0 0
        %1711 = vmatmul.mubr.bf16.gmra.mxu0 %v1676
        %v1712 = vpop.f32.mrf.mxu0
        %v1713 = vadd.f32 0.0, %v1712
        %v1714 = vpop.f32.mrf.mxu0
        %v1715 = vpop.f32.mrf.mxu0
        %v1716 = vadd.f32 0.0, %v1715
        %v1717 = vpop.f32.mrf.mxu0
        %1718 = vdwg.mxu0
        %v1719 = vpack.c.bf16 %v1716, %v1713
        %v1720 = vld [vmem:[%s10 + $0x8] sm:$0xf]
        %v1722 = vsel %vm1215, %v1719, 0
        %v1725 = vsel %vm1494, %v1720, 0
        %1727 = vmatprep.subr.bf16.mxu0 0
        %1728 = vmatpush1.bf16.msra.mxu0 0
        %1729 = vmatprep.subr.bf16.mxu0 0
        %1730 = vmatpush1.bf16.msra.mxu0 0
        %1731 = vmatprep.subr.bf16.mxu0 0
        %1732 = vmatpush1.bf16.msra.mxu0 0
        %1733 = vmatprep.subr.bf16.mxu0 0
        %1734 = vmatpush1.bf16.msra.mxu0 0
        %1735 = vmatprep.subr.bf16.mxu0 0
        %1736 = vmatpush1.bf16.msra.mxu0 0
        %1737 = vmatprep.subr.bf16.mxu0 0
        %1738 = vmatpush1.bf16.msra.mxu0 0
        %1739 = vmatprep.subr.bf16.mxu0 0
        %1740 = vmatpush1.bf16.msra.mxu0 0
        %1741 = vmatprep.subr.bf16.mxu0 0
        %1742 = vmatpush1.bf16.msra.mxu0 %v1725
        %1743 = vmatprep.subr.bf16.mxu0 0
        %1744 = vmatpush2.bf16.msra.mxu0 0
        %1745 = vmatprep.subr.bf16.mxu0 0
        %1746 = vmatpush2.bf16.msra.mxu0 0
        %1747 = vmatprep.subr.bf16.mxu0 0
        %1748 = vmatpush2.bf16.msra.mxu0 0
        %1749 = vmatprep.subr.bf16.mxu0 0
        %1750 = vmatpush2.bf16.msra.mxu0 0
        %1751 = vmatprep.subr.bf16.mxu0 0
        %1752 = vmatpush2.bf16.msra.mxu0 0
        %1753 = vmatprep.subr.bf16.mxu0 0
        %1754 = vmatpush2.bf16.msra.mxu0 0
        %1755 = vmatprep.subr.bf16.mxu0 0
        %1756 = vmatpush2.bf16.msra.mxu0 0
        %1757 = vmatprep.subr.bf16.mxu0 0
        %1758 = vmatpush2.bf16.msra.mxu0 0
        %1759 = vmatprep.mubr.bf16.mxu0 0
        %1760 = vmatmul.mubr.bf16.gmra.mxu0 %v1722
        %v1761 = vpop.f32.mrf.mxu0
        %v1762 = vadd.f32 0.0, %v1761
        %v1763 = vpop.f32.mrf.mxu0
        %v1764 = vpop.f32.mrf.mxu0
        %v1765 = vadd.f32 0.0, %v1764
        %v1766 = vpop.f32.mrf.mxu0
        %1767 = vdwg.mxu0
        %v1768 = vadd.f32 %v1580, %v1762
        %v1769 = vadd.f32 %v1583, %v1765
        %1770 = vrot.lane.b32.xlu0 %v1193, 104
        %v1771 = vpop.permute.xlu0 %1770
        %1772 = vrot.lane.b32.xlu0 %v1213, 104
        %v1773 = vpop.permute.xlu0 %1772
        %1774 = vrot.lane.b32.xlu0 %v1214, 104
        %v1775 = vpop.permute.xlu0 %1774
        %v1777 = vsel %vm1215, %v1771, 0
        %v1780 = vsel %vm1215, %v1773, 0
        %v1783 = vsel %vm1215, %v1775, 0
        %1785 = vmatprep.subr.bf16.mxu0 0
        %1786 = vmatpush1.bf16.xpose.msra.mxu0 0
        %1787 = vmatprep.subr.bf16.mxu0 0
        %1788 = vmatpush1.bf16.xpose.msra.mxu0 0
        %1789 = vmatprep.subr.bf16.mxu0 0
        %1790 = vmatpush1.bf16.xpose.msra.mxu0 0
        %1791 = vmatprep.subr.bf16.mxu0 0
        %1792 = vmatpush1.bf16.xpose.msra.mxu0 0
        %1793 = vmatprep.subr.bf16.mxu0 0
        %1794 = vmatpush1.bf16.xpose.msra.mxu0 0
        %1795 = vmatprep.subr.bf16.mxu0 0
        %1796 = vmatpush1.bf16.xpose.msra.mxu0 0
        %1797 = vmatprep.subr.bf16.mxu0 0
        %1798 = vmatpush1.bf16.xpose.msra.mxu0 %v1783
        %1799 = vmatprep.subr.bf16.mxu0 0
        %1800 = vmatpush1.bf16.xpose.msra.mxu0 %v1780
        %1801 = vmatprep.subr.bf16.mxu0 0
        %1802 = vmatpush2.bf16.xpose.msra.mxu0 0
        %1803 = vmatprep.subr.bf16.mxu0 0
        %1804 = vmatpush2.bf16.xpose.msra.mxu0 0
        %1805 = vmatprep.subr.bf16.mxu0 0
        %1806 = vmatpush2.bf16.xpose.msra.mxu0 0
        %1807 = vmatprep.subr.bf16.mxu0 0
        %1808 = vmatpush2.bf16.xpose.msra.mxu0 0
        %1809 = vmatprep.subr.bf16.mxu0 0
        %1810 = vmatpush2.bf16.xpose.msra.mxu0 0
        %1811 = vmatprep.subr.bf16.mxu0 0
        %1812 = vmatpush2.bf16.xpose.msra.mxu0 0
        %1813 = vmatprep.subr.bf16.mxu0 0
        %1814 = vmatpush2.bf16.xpose.msra.mxu0 0
        %1815 = vmatprep.subr.bf16.mxu0 0
        %1816 = vmatpush2.bf16.xpose.msra.mxu0 0
        %1817 = vmatprep.mubr.bf16.mxu0 0
        %1818 = vmatmul.mubr.bf16.gmra.mxu0 %v1777
        %v1819 = vpop.f32.mrf.mxu0
        %v1820 = vadd.f32 %v1199, %v1819
        %v1821 = vpop.f32.mrf.mxu0
        %v1822 = vpop.f32.mrf.mxu0
        %v1823 = vadd.f32 %v1199, %v1822
        %v1824 = vpop.f32.mrf.mxu0
        %1825 = vdwg.mxu0
        %v1826 = vsel %vm1146, %v1820, -inf
        %1827 = vmax.xlane.f32.xlu0 %v1826
        %v1828 = vpop.xlane.xlu0 %1827
        %v1829 = vsel %vm1146, %v1823, -inf
        %1830 = vmax.xlane.f32.xlu0 %v1829
        %v1831 = vpop.xlane.xlu0 %1830
        %v1832 = vsub.f32 %v1820, %v1828
        %v1833 = vsub.f32 %v1823, %v1831
        %v1834 = vmul.f32 %v1832, 1.442695
        %v1835 = vpow.pop %v1834
        %v1836 = vmul.f32 %v1833, 1.442695
        %v1837 = vpow.pop %v1836
        %v1838 = vsel %vm1146, %v1835, 0.0
        %1839 = vadd.xlane.f32.xlu0 %v1838
        %v1840 = vpop.xlane.xlu0 %1839
        %v1841 = vsel %vm1146, %v1837, 0.0
        %1842 = vadd.xlane.f32.xlu0 %v1841
        %v1843 = vpop.xlane.xlu0 %1842
        %v1844 = vrcp.pop %v1840
        %v1845 = vmul.f32 1.0, %v1844
        %v1846 = vrcp.pop %v1843
        %v1847 = vmul.f32 1.0, %v1846
        %v1848 = vmul.f32 %v1835, %v1845
        %v1849 = vmul.f32 %v1837, %v1847
        %v1850 = vadd.f32 %v1666, %v1848
        %v1851 = vadd.f32 %v1667, %v1849
        %v1852 = vpack.c.bf16 %v1849, %v1848
        %1853 = vrot.lane.b32.xlu0 %v1305, 104
        %v1854 = vpop.permute.xlu0 %1853
        %1855 = vrot.lane.b32.xlu0 %v1306, 104
        %v1856 = vpop.permute.xlu0 %1855
        %v1860 = vsel %vm1146, %v1852, 0
        %1862 = vmatprep.subr.bf16.mxu0 0
        %1863 = vmatpush1.bf16.msra.mxu0 0
        %1864 = vmatprep.subr.bf16.mxu0 0
        %1865 = vmatpush1.bf16.msra.mxu0 0
        %1866 = vmatprep.subr.bf16.mxu0 0
        %1867 = vmatpush1.bf16.msra.mxu0 0
        %1868 = vmatprep.subr.bf16.mxu0 0
        %1869 = vmatpush1.bf16.msra.mxu0 0
        %1870 = vmatprep.subr.bf16.mxu0 0
        %1871 = vmatpush1.bf16.msra.mxu0 0
        %1872 = vmatprep.subr.bf16.mxu0 0
        %1873 = vmatpush1.bf16.msra.mxu0 0
        %1874 = vmatprep.subr.bf16.mxu0 0
        %1875 = vmatpush1.bf16.msra.mxu0 %v1856
        %1876 = vmatprep.subr.bf16.mxu0 0
        %1877 = vmatpush1.bf16.msra.mxu0 %v1854
        %1878 = vmatprep.subr.bf16.mxu0 0
        %1879 = vmatpush2.bf16.msra.mxu0 0
        %1880 = vmatprep.subr.bf16.mxu0 0
        %1881 = vmatpush2.bf16.msra.mxu0 0
        %1882 = vmatprep.subr.bf16.mxu0 0
        %1883 = vmatpush2.bf16.msra.mxu0 0
        %1884 = vmatprep.subr.bf16.mxu0 0
        %1885 = vmatpush2.bf16.msra.mxu0 0
        %1886 = vmatprep.subr.bf16.mxu0 0
        %1887 = vmatpush2.bf16.msra.mxu0 0
        %1888 = vmatprep.subr.bf16.mxu0 0
        %1889 = vmatpush2.bf16.msra.mxu0 0
        %1890 = vmatprep.subr.bf16.mxu0 0
        %1891 = vmatpush2.bf16.msra.mxu0 0
        %1892 = vmatprep.subr.bf16.mxu0 0
        %1893 = vmatpush2.bf16.msra.mxu0 0
        %1894 = vmatprep.mubr.bf16.mxu0 0
        %1895 = vmatmul.mubr.bf16.gmra.mxu0 %v1860
        %v1896 = vpop.f32.mrf.mxu0
        %v1897 = vadd.f32 0.0, %v1896
        %v1898 = vpop.f32.mrf.mxu0
        %v1899 = vpop.f32.mrf.mxu0
        %v1900 = vadd.f32 0.0, %v1899
        %v1901 = vpop.f32.mrf.mxu0
        %1902 = vdwg.mxu0
        %v1903 = vpack.c.bf16 %v1900, %v1897
        %v1904 = vld [vmem:[%s10 + $0xc] sm:$0xf]
        %v1906 = vsel %vm1215, %v1903, 0
        %v1909 = vsel %vm1494, %v1904, 0
        %1911 = vmatprep.subr.bf16.mxu0 0
        %1912 = vmatpush1.bf16.msra.mxu0 0
        %1913 = vmatprep.subr.bf16.mxu0 0
        %1914 = vmatpush1.bf16.msra.mxu0 0
        %1915 = vmatprep.subr.bf16.mxu0 0
        %1916 = vmatpush1.bf16.msra.mxu0 0
        %1917 = vmatprep.subr.bf16.mxu0 0
        %1918 = vmatpush1.bf16.msra.mxu0 0
        %1919 = vmatprep.subr.bf16.mxu0 0
        %1920 = vmatpush1.bf16.msra.mxu0 0
        %1921 = vmatprep.subr.bf16.mxu0 0
        %1922 = vmatpush1.bf16.msra.mxu0 0
        %1923 = vmatprep.subr.bf16.mxu0 0
        %1924 = vmatpush1.bf16.msra.mxu0 0
        %1925 = vmatprep.subr.bf16.mxu0 0
        %1926 = vmatpush1.bf16.msra.mxu0 %v1909
        %1927 = vmatprep.subr.bf16.mxu0 0
        %1928 = vmatpush2.bf16.msra.mxu0 0
        %1929 = vmatprep.subr.bf16.mxu0 0
        %1930 = vmatpush2.bf16.msra.mxu0 0
        %1931 = vmatprep.subr.bf16.mxu0 0
        %1932 = vmatpush2.bf16.msra.mxu0 0
        %1933 = vmatprep.subr.bf16.mxu0 0
        %1934 = vmatpush2.bf16.msra.mxu0 0
        %1935 = vmatprep.subr.bf16.mxu0 0
        %1936 = vmatpush2.bf16.msra.mxu0 0
        %1937 = vmatprep.subr.bf16.mxu0 0
        %1938 = vmatpush2.bf16.msra.mxu0 0
        %1939 = vmatprep.subr.bf16.mxu0 0
        %1940 = vmatpush2.bf16.msra.mxu0 0
        %1941 = vmatprep.subr.bf16.mxu0 0
        %1942 = vmatpush2.bf16.msra.mxu0 0
        %1943 = vmatprep.mubr.bf16.mxu0 0
        %1944 = vmatmul.mubr.bf16.gmra.mxu0 %v1906
        %v1945 = vpop.f32.mrf.mxu0
        %v1946 = vadd.f32 0.0, %v1945
        %v1947 = vpop.f32.mrf.mxu0
        %v1948 = vpop.f32.mrf.mxu0
        %v1949 = vadd.f32 0.0, %v1948
        %v1950 = vpop.f32.mrf.mxu0
        %1951 = vdwg.mxu0
        %v1952 = vadd.f32 %v1768, %v1946
        %v1953 = vadd.f32 %v1769, %v1949
        %v1954 = vld [vmem:[%s11] sm:$0x1]
        %v1956 = vlaneseq
        %v1957 = vshrl.u32 %v1956, 7
        %v1958 = vsub.s32 0, %v1957
        %v1959 = vrot.slane %v1954, %v1958
        %v1961 = vadd.f32 %v1952, %v1959
        %v1962 = vadd.f32 %v1953, %v1959
        %s1963 = scalar_lea.vmem %s713, %s816 [#allocation5]
        %v1964 = vld [vmem:[%s1963] sm:$0xff]
        %v1965 = vld [vmem:[%s1963 + $0x8] sm:$0xff]
        %v1966 = vadd.f32 %v1964, %v1961
        %v1967 = vadd.f32 %v1965, %v1962
        %v1968 = vld [vmem:[%s12] sm:$0x1]
        %v1969 = vld [vmem:[%s13] sm:$0x1]
        %v1970 = vsel %vm1146, %v1966, 0.0
        %1971 = vadd.xlane.f32.xlu0 %v1970
        %v1972 = vpop.xlane.xlu0 %1971
        %v1973 = vsel %vm1146, %v1967, 0.0
        %1974 = vadd.xlane.f32.xlu0 %v1973
        %v1975 = vpop.xlane.xlu0 %1974
        %v1976 = vrcp.pop 32.0
        %v1977 = vmul.f32 %v1972, %v1976
        %v1978 = vmul.f32 %v1975, %v1976
        %v1979 = vsub.f32 %v1966, %v1977
        %v1980 = vsub.f32 %v1967, %v1978
        %v1981 = vmul.f32 %v1979, %v1979
        %v1982 = vmul.f32 %v1980, %v1980
        %v1983 = vsel %vm1146, %v1981, 0.0
        %1984 = vadd.xlane.f32.xlu0 %v1983
        %v1985 = vpop.xlane.xlu0 %1984
        %v1986 = vsel %vm1146, %v1982, 0.0
        %1987 = vadd.xlane.f32.xlu0 %v1986
        %v1988 = vpop.xlane.xlu0 %1987
        %v1989 = vmul.f32 %v1985, %v1976
        %v1990 = vmul.f32 %v1988, %v1976
        %v1991 = vadd.f32 %v1989, 1e-06
        %v1992 = vadd.f32 %v1990, 1e-06
        %v1993 = vrsqrt.pop %v1991
        %v1994 = vrsqrt.pop %v1992
        %v1995 = vmul.f32 %v1979, %v1993
        %v1996 = vmul.f32 %v1980, %v1994
        %v1998 = vlaneseq
        %v1999 = vshrl.u32 %v1998, 7
        %v2000 = vsub.s32 0, %v1999
        %v2001 = vrot.slane %v1968, %v2000
        %v2003 = vmul.f32 %v1995, %v2001
        %v2004 = vmul.f32 %v1996, %v2001
        %v2006 = vlaneseq
        %v2007 = vshrl.u32 %v2006, 7
        %v2008 = vsub.s32 0, %v2007
        %v2009 = vrot.slane %v1969, %v2008
        %v2011 = vadd.f32 %v2003, %v2009
        %v2012 = vadd.f32 %v2004, %v2009
        %v2013 = vpack.c.bf16 %v2012, %v2011
        %v2014 = vld [vmem:[#allocation17] sm:$0xf]
        %v2015 = vld [vmem:[#allocation17 + $0x4] sm:$0xf]
        %v2016 = vld [vmem:[#allocation17 + $0x8] sm:$0xf]
        %v2017 = vld [vmem:[#allocation17 + $0xc] sm:$0xf]
        %v2018 = vld [vmem:[%s15] sm:$0x1]
        %v2020 = vlaneseq
        %v2021 = vshrl.u32 %v2020, 7
        %v2022 = vsub.s32 0, %v2021
        %v2023 = vrot.slane %v2018, %v2022
        %v2029 = vunpack.c.l.b16 %v2014
        %v2030 = vunpack.c.l.b16 %v2015
        %v2031 = vunpack.c.l.b16 %v2016
        %v2032 = vunpack.c.l.b16 %v2017
        %v2033 = vpack.c.b16 %v2030, %v2029
        %v2034 = vpack.c.b16 %v2032, %v2031
        %v2038 = vsel %vm1146, %v2013, 0
        %2040 = vmatprep.subr.bf16.mxu0 0
        %2041 = vmatpush1.bf16.msra.mxu0 0
        %2042 = vmatprep.subr.bf16.mxu0 0
        %2043 = vmatpush1.bf16.msra.mxu0 0
        %2044 = vmatprep.subr.bf16.mxu0 0
        %2045 = vmatpush1.bf16.msra.mxu0 0
        %2046 = vmatprep.subr.bf16.mxu0 0
        %2047 = vmatpush1.bf16.msra.mxu0 0
        %2048 = vmatprep.subr.bf16.mxu0 0
        %2049 = vmatpush1.bf16.msra.mxu0 0
        %2050 = vmatprep.subr.bf16.mxu0 0
        %2051 = vmatpush1.bf16.msra.mxu0 0
        %2052 = vmatprep.subr.bf16.mxu0 0
        %2053 = vmatpush1.bf16.msra.mxu0 %v2034
        %2054 = vmatprep.subr.bf16.mxu0 0
        %2055 = vmatpush1.bf16.msra.mxu0 %v2033
        %2056 = vmatprep.subr.bf16.mxu0 0
        %2057 = vmatpush2.bf16.msra.mxu0 0
        %2058 = vmatprep.subr.bf16.mxu0 0
        %2059 = vmatpush2.bf16.msra.mxu0 0
        %2060 = vmatprep.subr.bf16.mxu0 0
        %2061 = vmatpush2.bf16.msra.mxu0 0
        %2062 = vmatprep.subr.bf16.mxu0 0
        %2063 = vmatpush2.bf16.msra.mxu0 0
        %2064 = vmatprep.subr.bf16.mxu0 0
        %2065 = vmatpush2.bf16.msra.mxu0 0
        %2066 = vmatprep.subr.bf16.mxu0 0
        %2067 = vmatpush2.bf16.msra.mxu0 0
        %2068 = vmatprep.subr.bf16.mxu0 0
        %2069 = vmatpush2.bf16.msra.mxu0 0
        %2070 = vmatprep.subr.bf16.mxu0 0
        %2071 = vmatpush2.bf16.msra.mxu0 0
        %2072 = vmatprep.mubr.bf16.mxu0 0
        %2073 = vmatmul.mubr.bf16.gmra.mxu0 %v2038
        %v2074 = vpop.f32.mrf.mxu0
        %v2075 = vadd.f32 %v2023, %v2074
        %v2076 = vpop.f32.mrf.mxu0
        %v2077 = vpop.f32.mrf.mxu0
        %v2078 = vadd.f32 %v2023, %v2077
        %v2079 = vpop.f32.mrf.mxu0
        %2080 = vdwg.mxu0
        %v2081 = vmax.f32 %v2075, 0.0
        %v2082 = vmax.f32 %v2078, 0.0
        %v2083 = vpack.c.bf16 %v2082, %v2081
        %v2084 = vld [vmem:[%s16] sm:$0xf]
        %v2085 = vld [vmem:[%s16 + $0x4] sm:$0xf]
        %v2086 = vld [vmem:[%s16 + $0x8] sm:$0xf]
        %v2087 = vld [vmem:[%s16 + $0xc] sm:$0xf]
        %v2088 = vld [vmem:[%s16 + $0x10] sm:$0xf]
        %v2089 = vld [vmem:[%s16 + $0x14] sm:$0xf]
        %v2090 = vld [vmem:[%s16 + $0x18] sm:$0xf]
        %v2091 = vld [vmem:[%s16 + $0x1c] sm:$0xf]
        %v2092 = vld [vmem:[%s17] sm:$0x1]
        %v2094 = vlaneseq
        %v2095 = vshrl.u32 %v2094, 7
        %v2096 = vsub.s32 0, %v2095
        %v2097 = vrot.slane %v2092, %v2096
        %v2107 = vunpack.c.l.b16 %v2084
        %v2108 = vunpack.c.l.b16 %v2085
        %v2109 = vunpack.c.l.b16 %v2086
        %v2110 = vunpack.c.l.b16 %v2087
        %v2111 = vunpack.c.l.b16 %v2088
        %v2112 = vunpack.c.l.b16 %v2089
        %v2113 = vunpack.c.l.b16 %v2090
        %v2114 = vunpack.c.l.b16 %v2091
        %v2115 = vpack.c.b16 %v2108, %v2107
        %v2116 = vpack.c.b16 %v2110, %v2109
        %v2117 = vpack.c.b16 %v2112, %v2111
        %v2118 = vpack.c.b16 %v2114, %v2113
        %vm2123 = vcmask 523264
        %v2125 = vsel %vm2123, %v2083, 0
        %2127 = vmatprep.subr.bf16.mxu0 0
        %2128 = vmatpush1.bf16.msra.mxu0 0
        %2129 = vmatprep.subr.bf16.mxu0 0
        %2130 = vmatpush1.bf16.msra.mxu0 0
        %2131 = vmatprep.subr.bf16.mxu0 0
        %2132 = vmatpush1.bf16.msra.mxu0 0
        %2133 = vmatprep.subr.bf16.mxu0 0
        %2134 = vmatpush1.bf16.msra.mxu0 0
        %2135 = vmatprep.subr.bf16.mxu0 0
        %2136 = vmatpush1.bf16.msra.mxu0 %v2118
        %2137 = vmatprep.subr.bf16.mxu0 0
        %2138 = vmatpush1.bf16.msra.mxu0 %v2117
        %2139 = vmatprep.subr.bf16.mxu0 0
        %2140 = vmatpush1.bf16.msra.mxu0 %v2116
        %2141 = vmatprep.subr.bf16.mxu0 0
        %2142 = vmatpush1.bf16.msra.mxu0 %v2115
        %2143 = vmatprep.subr.bf16.mxu0 0
        %2144 = vmatpush2.bf16.msra.mxu0 0
        %2145 = vmatprep.subr.bf16.mxu0 0
        %2146 = vmatpush2.bf16.msra.mxu0 0
        %2147 = vmatprep.subr.bf16.mxu0 0
        %2148 = vmatpush2.bf16.msra.mxu0 0
        %2149 = vmatprep.subr.bf16.mxu0 0
        %2150 = vmatpush2.bf16.msra.mxu0 0
        %2151 = vmatprep.subr.bf16.mxu0 0
        %2152 = vmatpush2.bf16.msra.mxu0 0
        %2153 = vmatprep.subr.bf16.mxu0 0
        %2154 = vmatpush2.bf16.msra.mxu0 0
        %2155 = vmatprep.subr.bf16.mxu0 0
        %2156 = vmatpush2.bf16.msra.mxu0 0
        %2157 = vmatprep.subr.bf16.mxu0 0
        %2158 = vmatpush2.bf16.msra.mxu0 0
        %2159 = vmatprep.mubr.bf16.mxu0 0
        %2160 = vmatmul.mubr.bf16.gmra.mxu0 %v2125
        %v2161 = vpop.f32.mrf.mxu0
        %v2162 = vadd.f32 %v2097, %v2161
        %v2163 = vpop.f32.mrf.mxu0
        %v2164 = vpop.f32.mrf.mxu0
        %v2165 = vadd.f32 %v2097, %v2164
        %v2166 = vpop.f32.mrf.mxu0
        %2167 = vdwg.mxu0
        %v2168 = vadd.f32 %v1966, %v2162
        %v2169 = vadd.f32 %v1967, %v2165
        %2170 = vst.msk [vmem:[%s805] sm:$0xff] %vm1146, %v2168
        %2171 = vst.msk [vmem:[%s805 + $0x8] sm:$0xff] %vm1146, %v2169
        %v2172 = vmul.f32 %v1850, 0.25
        %v2173 = vmul.f32 %v1851, 0.25
        %v2174 = vpack.c.bf16 %v2173, %v2172
        %v2176 = vunpack.c.l.b16 %v2174
        %v2177 = vunpack.c.h.b16 %v2174
        %v2178 = vpack.c.b16 %v2176, %v2176
        %v2179 = vpack.c.b16 %v2177, %v2177
        %vm2182 = vcmask 257024
        %2183 = vst.msk [vmem:[%s812] sm:$0xf] %vm2182, %v2178
        %2184 = vst.msk [vmem:[%s812 + $0x4] sm:$0xf] %vm2182, %v2179
        %s2185 = sand.u32 %s500, 1
        %s2186 = scalar_lea.sflag [#allocation7], %s2185
        %s2187 = sand.u32 %s500, 1
        %s2188 = smul.addr %s2187, 16
        %s2189 = scalar_lea.vmem [#allocation19], %s2188
        %s2190 = sand.u32 %s528, 1
        %s2191 = scalar_lea.sflag [#allocation21], %s2190
        %s2192 = sand.u32 %s528, 1
        %s2193 = smul.addr %s2192, 8
        %s2194 = scalar_lea.vmem [#allocation20], %s2193
        // Predicated region
        $region137: #{tpu_custom_call.1} parent=99 // pred_check
          %p2195 = pneg %p510
        $region138: #{tpu_custom_call.1} parent=99 // pred_check_branch
          %2197 = sbr.rel (%p2195) target = $region140
        $region139: #{tpu_custom_call.1} parent=99 // pred_region
          %s2198 = smul.u32 2, %s53
          %s2200 = ssub.s32 256, 256
          %2201 = vsyncadd %s2186, %s2200
          %s2202 = smul.addr %s52, 4
          %s2203 = sadd.s32 %s2198, %s2202
          %s2204 = smul.addr %s2203, 128
          %s2205 = scalar_lea.hbm %s20, %s2204
          %s2206 = sshll.u32 %s2189, 4
          %s2207 = int_to_ptr.vmem [resolvable:$true] %s2206
          %2212 = dma.vmem_to_hbm [thread:$0]  %s2207, 256, %s2205, %s2186, 128, 128, 8
        $region140: #{tpu_custom_call.1} parent=99 // pred_fallthru
          _
        // Predicated region
        $region141: #{tpu_custom_call.1} parent=99 // pred_check
          %p2213 = pneg %p538
        $region142: #{tpu_custom_call.1} parent=99 // pred_check_branch
          %2215 = sbr.rel (%p2213) target = $region144
        $region143: #{tpu_custom_call.1} parent=99 // pred_region
          %s2216 = smul.u32 2, %s53
          %s2218 = ssub.s32 128, 128
          %2219 = vsyncadd %s2191, %s2218
          %s2220 = smul.addr %s52, 4
          %s2221 = sadd.s32 %s2216, %s2220
          %s2222 = smul.addr %s2221, 64
          %s2223 = scalar_lea.hbm %s21, %s2222
          %s2224 = sshll.u32 %s2194, 4
          %s2225 = int_to_ptr.vmem [resolvable:$true] %s2224
          %2230 = dma.vmem_to_hbm [thread:$0]  %s2225, 128, %s2223, %s2191, 64, 64, 4
        $region144: #{tpu_custom_call.1} parent=99 // pred_fallthru
          _
      $region100: #{tpu_custom_call.1} parent=5 // pred_fallthru
        _
      %p2231 = scmp.le.s32.totalorder 2, %s43
      // Predicated region
      $region145: #{tpu_custom_call.1} parent=5 // pred_check
        %p2232 = pneg %p2231
      $region146: #{tpu_custom_call.1} parent=5 // pred_check_branch
        %2234 = sbr.rel (%p2232) target = $region148
      $region147: #{tpu_custom_call.1} parent=5 // pred_region
        %s2235 = ssub.s32 %s43, 2
        // Predicated region
        $region149: #{tpu_custom_call.1} parent=147 // pred_check
          %p2236 = pneg %p516
        $region150: #{tpu_custom_call.1} parent=147 // pred_check_branch
          %2238 = sbr.rel (%p2236) target = $region152
        $region151: #{tpu_custom_call.1} parent=147 // pred_region
          %s2239 = sand.u32 %s501, 1
          %s2240 = scalar_lea.sflag [#allocation7], %s2239
          %s2241 = sand.u32 %s501, 1
          %s2242 = smul.addr %s2241, 16
          %s2243 = scalar_lea.vmem [#allocation19], %s2242
          %2244 = dma.done %s2240, 256
        $region152: #{tpu_custom_call.1} parent=147 // pred_fallthru
          _
        // Predicated region
        $region153: #{tpu_custom_call.1} parent=147 // pred_check
          %p2245 = pneg %p544
        $region154: #{tpu_custom_call.1} parent=147 // pred_check_branch
          %2247 = sbr.rel (%p2245) target = $region156
        $region155: #{tpu_custom_call.1} parent=147 // pred_region
          %s2248 = sand.u32 %s529, 1
          %s2249 = scalar_lea.sflag [#allocation21], %s2248
          %s2250 = sand.u32 %s529, 1
          %s2251 = smul.addr %s2250, 8
          %s2252 = scalar_lea.vmem [#allocation20], %s2251
          %2253 = dma.done %s2249, 128
        $region156: #{tpu_custom_call.1} parent=147 // pred_fallthru
          _
      $region148: #{tpu_custom_call.1} parent=5 // pred_fallthru
        _
    $region6: #{tpu_custom_call.1} parent=1 // loop_footer
      %s47 = sadd.s32 1, %s43
    $region7: #{tpu_custom_call.1} parent=1 // loop_footer_branch
      %42 = sbr.rel target = $region3
    $region8: #{tpu_custom_call.1} parent=1 // loop_exit
      _
    %2254 = vsyncpa [#allocation6], 1
    %s2255 = scalar_lea.sflag [#allocation6], 1
    %2256 = vsyncpa %s2255, 1
    %2257 = vsyncpa [#allocation9], 1
    %s2258 = scalar_lea.sflag [#allocation9], 1
    %2259 = vsyncpa %s2258, 1
    %2260 = vsyncpa [#allocation12], 1
    %2261 = vsyncpa [#allocation15], 1
    %2262 = vsyncpa [#allocation18], 1
    %2263 = vsyncpa [#allocation7], 1
    %s2264 = scalar_lea.sflag [#allocation7], 1
    %2265 = vsyncpa %s2264, 1
    %2266 = vsyncpa [#allocation21], 1
    %s2267 = scalar_lea.sflag [#allocation21], 1
    %2268 = vsyncpa %s2267, 1

</llo_original>
